<compile_context>
chip_gen: v7x
topology: tpu7x:2x2x1
jax: 0.10.0
libtpu: 0.0.40
codegen_flags: <defaults>
</compile_context>

<pallas_src>
import functools

import jax
import jax.numpy as jnp
from jax.experimental import pallas as pl
from jax.experimental.pallas import tpu as pltpu

C = 128          # fixed by Block_3.__init__ (conv(128, 128, ...))
CR = C // 8      # 16 (CA/PA bottleneck width)
KS = 3           # kernel_size (same padding = 1)


# ----------------------------- conv helper ----------------------------------
def _conv3x3(src_ref, wp_ref, ws_ref, *, base, WP, E):
    """3x3 same-pad conv as 4 paired (K=256) + 1 single (K=128) MXU matmuls.

    Taps are loaded directly from the padded bf16 VMEM slab ref (no full-slab
    value is materialised); two taps are concatenated on the lane axis so the
    contraction is 256 wide (fills the v6e/v7x MXU; splits into 2x128 on v5e).
    """
    d = [base + kh * WP + kw for kh in range(KS) for kw in range(KS)]
    acc = jnp.zeros((E, C), jnp.float32)
    for k in range(4):
        lhs = jnp.concatenate(
            [src_ref[pl.ds(d[2 * k], E), :],
             src_ref[pl.ds(d[2 * k + 1], E), :]], axis=1)          # [E, 2C] bf16
        acc = acc + jnp.dot(lhs, wp_ref[k], preferred_element_type=jnp.float32)
    acc = acc + jnp.dot(src_ref[pl.ds(d[8], E), :], ws_ref[...],
                        preferred_element_type=jnp.float32)
    return acc


# ------------------------- fused Block_3 kernel -----------------------------
def _block3_kernel(x_ref, valid_ref, w1p_ref, w1s_ref, b1_ref,
                   w2p_ref, w2s_ref, b2_ref,
                   wca1_ref, bca1_ref, wca2_ref, bca2_ref,
                   wpa1_ref, bpa1_ref, wpa2_ref, bpa2_ref,
                   out_ref, xpad_ref, rpad_ref, *, H, W, OFF):
    WP = W + 2                    # padded row length
    E = H * WP                    # extended rows (W valid + 2 junk cols / row)
    BASE = OFF - WP - 1           # slab index of padded pixel (0, 0)
    LP = xpad_ref.shape[0]

    # ---- zero only the never-written border rows of both slabs ----
    # (every step -> safe under "parallel" batch axis / megacore; interior junk
    #  columns are rewritten with masked zeros below, so the zero border holds)
    zh = jnp.zeros((OFF, C), jnp.bfloat16)
    zt = jnp.zeros((LP - OFF - E, C), jnp.bfloat16)
    xpad_ref[:OFF, :] = zh
    xpad_ref[OFF + E:LP, :] = zt
    rpad_ref[:OFF, :] = zh
    rpad_ref[OFF + E:LP, :] = zt

    # ---- build the padded bf16 input slab with one aligned store ----
    x_ext = x_ref[0]                          # [E, C] bf16, junk cols already 0
    xpad_ref[OFF:OFF + E, :] = x_ext
    x_res = x_ext.astype(jnp.float32)         # residual stream (junk cols = 0)
    valid = valid_ref[...]                    # [E, 1] f32, hoisted mask

    # ---- conv1 (3x3) + ReLU + residual, masked, re-padded as bf16 ----
    acc1 = _conv3x3(xpad_ref, w1p_ref, w1s_ref, base=BASE, WP=WP, E=E)
    r1 = (jnp.maximum(acc1 + b1_ref[...], 0.0) + x_res) * valid
    rpad_ref[OFF:OFF + E, :] = r1.astype(jnp.bfloat16)

    # ---- conv2 (3x3) ----
    acc2 = _conv3x3(rpad_ref, w2p_ref, w2s_ref, base=BASE, WP=WP, E=E)
    r2 = (acc2 + b2_ref[...]) * valid         # junk cols zeroed -> clean CA mean

    # ---- CALayer: GAP -> 1x1 (C->C/8) -> relu -> 1x1 (C/8->C) -> sigmoid ----
    y = jnp.sum(r2, axis=0, keepdims=True) * (1.0 / (H * W))       # [1, C]
    y1 = jnp.maximum(
        jnp.dot(y, wca1_ref[...], preferred_element_type=jnp.float32)
        + bca1_ref[...], 0.0)                                      # [1, C/8]
    y2 = jax.nn.sigmoid(
        jnp.dot(y1, wca2_ref[...], preferred_element_type=jnp.float32)
        + bca2_ref[...])                                           # [1, C]
    r2 = r2 * y2

    # ---- PALayer: 1x1 (C->C/8) -> relu -> 1x1 (C/8->1) -> sigmoid ----
    p1 = jnp.maximum(
        jnp.dot(r2, wpa1_ref[...], preferred_element_type=jnp.float32)
        + bpa1_ref[...], 0.0)                                      # [E, C/8]
    p2 = jax.nn.sigmoid(
        jnp.sum(p1 * wpa2_ref[...], axis=-1, keepdims=True) + bpa2_ref[...])

    out_ref[0] = r2 * p2 + x_res              # final residual (extended layout)


# ---------------------------------- wrapper ----------------------------------
def block3_forward(x_nchw, p):
    N, Cin, H, W = x_nchw.shape
    assert Cin == C
    WP = W + 2
    E = H * WP
    OFF = ((WP + 1 + 15) // 16) * 16             # interior start, bf16-tile aligned
    LP = ((OFF + E + WP + 2 + 15) // 16) * 16    # slab rows (covers bottom-right tap)

    # NCHW -> NHWC, append 2 zero junk cols per row (extended layout), cast bf16.
    # The pad + cast fuse into the transpose copy; no padded f32 HBM round trip.
    x = jnp.transpose(x_nchw, (0, 2, 3, 1))
    x_ext = jnp.pad(x, ((0, 0), (0, 0), (0, 2), (0, 0))).reshape(N, E, C)
    x_ext = x_ext.astype(jnp.bfloat16)

    # hoisted validity mask (extended column index < W), shared by all images
    valid = (jnp.arange(E, dtype=jnp.int32) % WP < W).astype(jnp.float32)
    valid = valid.reshape(E, 1)

    # PyTorch OIHW conv weights -> per-tap [Cin, Cout]; taps paired along K.
    def pack_conv(w):
        wt = jnp.transpose(w, (2, 3, 1, 0)).reshape(KS * KS, C, C)
        wp = wt[0:8].reshape(4, 2 * C, C).astype(jnp.bfloat16)  # pairs (0,1)..(6,7)
        ws = wt[8].astype(jnp.bfloat16)                         # tap 8 alone
        return wp, ws

    w1p, w1s = pack_conv(p["W1"])
    w2p, w2s = pack_conv(p["W2"])
    b1 = p["b1"].reshape(1, C).astype(jnp.float32)
    b2 = p["b2"].reshape(1, C).astype(jnp.float32)
    wca1 = p["Wca1"][:, :, 0, 0].T.astype(jnp.float32)   # [C, C/8]
    bca1 = p["bca1"].reshape(1, CR).astype(jnp.float32)
    wca2 = p["Wca2"][:, :, 0, 0].T.astype(jnp.float32)   # [C/8, C]
    bca2 = p["bca2"].reshape(1, C).astype(jnp.float32)
    wpa1 = p["Wpa1"][:, :, 0, 0].T.astype(jnp.float32)   # [C, C/8]
    bpa1 = p["bpa1"].reshape(1, CR).astype(jnp.float32)
    wpa2 = p["Wpa2"][:, :, 0, 0].astype(jnp.float32)     # [1, C/8]
    bpa2 = p["bpa2"].reshape(1, 1).astype(jnp.float32)

    wspec = lambda shape: pl.BlockSpec(shape, lambda n: (0,) * len(shape))

    out_ext = pl.pallas_call(
        functools.partial(_block3_kernel, H=H, W=W, OFF=OFF),
        out_shape=jax.ShapeDtypeStruct((N, E, C), jnp.float32),
        grid=(N,),
        in_specs=[pl.BlockSpec((1, E, C), lambda n: (n, 0, 0)),
                  wspec((E, 1)),
                  wspec((4, 2 * C, C)), wspec((C, C)), wspec((1, C)),
                  wspec((4, 2 * C, C)), wspec((C, C)), wspec((1, C)),
                  wspec((C, CR)), wspec((1, CR)),
                  wspec((CR, C)), wspec((1, C)),
                  wspec((C, CR)), wspec((1, CR)),
                  wspec((1, CR)), wspec((1, 1))],
        out_specs=pl.BlockSpec((1, E, C), lambda n: (n, 0, 0)),
        scratch_shapes=[pltpu.VMEM((LP, C), jnp.bfloat16),    # padded x slab
                        pltpu.VMEM((LP, C), jnp.bfloat16)],   # padded r1 slab
        compiler_params=pltpu.CompilerParams(
            dimension_semantics=("parallel",),
            vmem_limit_bytes=48 * 1024 * 1024),
    )(x_ext, valid, w1p, w1s, b1, w2p, w2s, b2,
      wca1, bca1, wca2, bca2, wpa1, bpa1, wpa2, bpa2)

    # strip the 2 junk columns per row, back to NCHW (fuses with the transpose)
    out = out_ext.reshape(N, H, WP, C)[:, :, :W, :]
    return jnp.transpose(out, (0, 3, 1, 2))


# ---------------------------- pure-JAX reference ----------------------------
def _ref_conv(x, w, b, pad):
    y = jax.lax.conv_general_dilated(
        x, w, (1, 1), [(pad, pad), (pad, pad)],
        dimension_numbers=("NCHW", "OIHW", "NCHW"),
        precision=jax.lax.Precision.HIGHEST)
    return y + b.reshape(1, -1, 1, 1)


def ref_forward(x, p):
    r = jax.nn.relu(_ref_conv(x, p["W1"], p["b1"], 1))
    r = r + x
    r = _ref_conv(r, p["W2"], p["b2"], 1)
    y = jnp.mean(r, axis=(2, 3), keepdims=True)
    y = jax.nn.relu(_ref_conv(y, p["Wca1"], p["bca1"], 0))
    y = jax.nn.sigmoid(_ref_conv(y, p["Wca2"], p["bca2"], 0))
    r = r * y
    q = jax.nn.relu(_ref_conv(r, p["Wpa1"], p["bpa1"], 0))
    q = jax.nn.sigmoid(_ref_conv(q, p["Wpa2"], p["bpa2"], 0))
    r = r * q
    return r + x


# ---------------------------------- main -------------------------------------
if __name__ == "__main__":
    key = jax.random.PRNGKey(0)
    ks = jax.random.split(key, 13)

    N, H, W = 2, 8, 8
    x = jax.random.normal(ks[0], (N, C, H, W), jnp.float32)

    s = 0.05  # deterministic small-scale synthetic weights
    params = {
        "W1":   s * jax.random.normal(ks[1],  (C, C, KS, KS), jnp.float32),
        "b1":   s * jax.random.normal(ks[2],  (C,), jnp.float32),
        "W2":   s * jax.random.normal(ks[3],  (C, C, KS, KS), jnp.float32),
        "b2":   s * jax.random.normal(ks[4],  (C,), jnp.float32),
        "Wca1": s * jax.random.normal(ks[5],  (CR, C, 1, 1), jnp.float32),
        "bca1": s * jax.random.normal(ks[6],  (CR,), jnp.float32),
        "Wca2": s * jax.random.normal(ks[7],  (C, CR, 1, 1), jnp.float32),
        "bca2": s * jax.random.normal(ks[8],  (C,), jnp.float32),
        "Wpa1": s * jax.random.normal(ks[9],  (CR, C, 1, 1), jnp.float32),
        "bpa1": s * jax.random.normal(ks[10], (CR,), jnp.float32),
        "Wpa2": s * jax.random.normal(ks[11], (1, CR, 1, 1), jnp.float32),
        "bpa2": s * jax.random.normal(ks[12], (1,), jnp.float32),
    }

    out = block3_forward(x, params)
    out = jax.block_until_ready(out)

    ref = jax.block_until_ready(ref_forward(x, params))
    max_diff = float(jnp.max(jnp.abs(out - ref)))
    assert out.shape == (N, C, H, W), out.shape
    assert max_diff < 5e-2, f"mismatch vs reference: {max_diff}"

    print("KERNEL_OK")
</pallas_src>

<mosaic_0001>
module attributes {stable_mosaic.version = 11 : i64} {
  func.func @_block3_kernel(%arg0: i32, %arg1: memref<1x80x128xbf16, #tpu.memory_space<vmem>>, %arg2: memref<80x1xf32, #tpu.memory_space<vmem>>, %arg3: memref<4x256x128xbf16, #tpu.memory_space<vmem>>, %arg4: memref<128x128xbf16, #tpu.memory_space<vmem>>, %arg5: memref<1x128xf32, #tpu.memory_space<vmem>>, %arg6: memref<4x256x128xbf16, #tpu.memory_space<vmem>>, %arg7: memref<128x128xbf16, #tpu.memory_space<vmem>>, %arg8: memref<1x128xf32, #tpu.memory_space<vmem>>, %arg9: memref<128x16xf32, #tpu.memory_space<vmem>>, %arg10: memref<1x16xf32, #tpu.memory_space<vmem>>, %arg11: memref<16x128xf32, #tpu.memory_space<vmem>>, %arg12: memref<1x128xf32, #tpu.memory_space<vmem>>, %arg13: memref<128x16xf32, #tpu.memory_space<vmem>>, %arg14: memref<1x16xf32, #tpu.memory_space<vmem>>, %arg15: memref<1x16xf32, #tpu.memory_space<vmem>>, %arg16: memref<1x1xf32, #tpu.memory_space<vmem>>, %arg17: memref<1x80x128xf32, #tpu.memory_space<vmem>>, %arg18: memref<112x128xbf16, #tpu.memory_space<vmem>>, %arg19: memref<112x128xbf16, #tpu.memory_space<vmem>>) attributes {dimension_semantics = [#tpu.dimension_semantics<parallel>], iteration_bounds = array<i64: 2>, scalar_prefetch = 0 : i64, scratch_operands = 2 : i64, tpu.core_type = #tpu.core_type<tc>, window_params = [{transform_indices = @transform_0, window_bounds = array<i64: 1, 80, 128>}, {pipeline_mode = #tpu.pipeline_mode<synchronous>, transform_indices = @transform_1, window_bounds = array<i64: 80, 1>}, {pipeline_mode = #tpu.pipeline_mode<synchronous>, transform_indices = @transform_2, window_bounds = array<i64: 4, 256, 128>}, {pipeline_mode = #tpu.pipeline_mode<synchronous>, transform_indices = @transform_3, window_bounds = array<i64: 128, 128>}, {pipeline_mode = #tpu.pipeline_mode<synchronous>, transform_indices = @transform_4, window_bounds = array<i64: 1, 128>}, {pipeline_mode = #tpu.pipeline_mode<synchronous>, transform_indices = @transform_5, window_bounds = array<i64: 4, 256, 128>}, {pipeline_mode = #tpu.pipeline_mode<synchronous>, transform_indices = @transform_6, window_bounds = array<i64: 128, 128>}, {pipeline_mode = #tpu.pipeline_mode<synchronous>, transform_indices = @transform_7, window_bounds = array<i64: 1, 128>}, {pipeline_mode = #tpu.pipeline_mode<synchronous>, transform_indices = @transform_8, window_bounds = array<i64: 128, 16>}, {pipeline_mode = #tpu.pipeline_mode<synchronous>, transform_indices = @transform_9, window_bounds = array<i64: 1, 16>}, {pipeline_mode = #tpu.pipeline_mode<synchronous>, transform_indices = @transform_10, window_bounds = array<i64: 16, 128>}, {pipeline_mode = #tpu.pipeline_mode<synchronous>, transform_indices = @transform_11, window_bounds = array<i64: 1, 128>}, {pipeline_mode = #tpu.pipeline_mode<synchronous>, transform_indices = @transform_12, window_bounds = array<i64: 128, 16>}, {pipeline_mode = #tpu.pipeline_mode<synchronous>, transform_indices = @transform_13, window_bounds = array<i64: 1, 16>}, {pipeline_mode = #tpu.pipeline_mode<synchronous>, transform_indices = @transform_14, window_bounds = array<i64: 1, 16>}, {pipeline_mode = #tpu.pipeline_mode<synchronous>, transform_indices = @transform_15, window_bounds = array<i64: 1, 1>}, {transform_indices = @transform_16, window_bounds = array<i64: 1, 80, 128>}]} {
    %cst = arith.constant 0.000000e+00 : bf16
    %0 = vector.broadcast %cst : bf16 to vector<16x128xbf16>
    %cst_0 = arith.constant 0.000000e+00 : bf16
    %1 = vector.broadcast %cst_0 : bf16 to vector<16x128xbf16>
    %c0 = arith.constant 0 : index
    %c0_1 = arith.constant 0 : index
    %2 = vector.load %arg18[%c0, %c0_1] : memref<112x128xbf16, #tpu.memory_space<vmem>>, vector<16x128xbf16>
    tpu.vector_store %arg18[%c0, %c0_1], %0 {strides = array<i32>} : memref<112x128xbf16, #tpu.memory_space<vmem>>, vector<16x128xbf16>,
    %c96 = arith.constant 96 : index
    %c0_2 = arith.constant 0 : index
    %3 = vector.load %arg18[%c96, %c0_2] : memref<112x128xbf16, #tpu.memory_space<vmem>>, vector<16x128xbf16>
    tpu.vector_store %arg18[%c96, %c0_2], %1 {strides = array<i32>} : memref<112x128xbf16, #tpu.memory_space<vmem>>, vector<16x128xbf16>,
    %c0_3 = arith.constant 0 : index
    %c0_4 = arith.constant 0 : index
    %4 = vector.load %arg19[%c0_3, %c0_4] : memref<112x128xbf16, #tpu.memory_space<vmem>>, vector<16x128xbf16>
    tpu.vector_store %arg19[%c0_3, %c0_4], %0 {strides = array<i32>} : memref<112x128xbf16, #tpu.memory_space<vmem>>, vector<16x128xbf16>,
    %c96_5 = arith.constant 96 : index
    %c0_6 = arith.constant 0 : index
    %5 = vector.load %arg19[%c96_5, %c0_6] : memref<112x128xbf16, #tpu.memory_space<vmem>>, vector<16x128xbf16>
    tpu.vector_store %arg19[%c96_5, %c0_6], %1 {strides = array<i32>} : memref<112x128xbf16, #tpu.memory_space<vmem>>, vector<16x128xbf16>,
    %c0_7 = arith.constant 0 : index
    %c0_8 = arith.constant 0 : index
    %c0_9 = arith.constant 0 : index
    %6 = vector.load %arg1[%c0_7, %c0_8, %c0_9] : memref<1x80x128xbf16, #tpu.memory_space<vmem>>, vector<1x80x128xbf16>
    %7 = vector.shape_cast %6 : vector<1x80x128xbf16> to vector<80x128xbf16>
    %c16 = arith.constant 16 : index
    %c0_10 = arith.constant 0 : index
    %8 = vector.load %arg18[%c16, %c0_10] : memref<112x128xbf16, #tpu.memory_space<vmem>>, vector<80x128xbf16>
    tpu.vector_store %arg18[%c16, %c0_10], %7 {strides = array<i32>} : memref<112x128xbf16, #tpu.memory_space<vmem>>, vector<80x128xbf16>,
    %9 = arith.extf %7 : vector<80x128xbf16> to vector<80x128xf32>
    %c0_11 = arith.constant 0 : index
    %c0_12 = arith.constant 0 : index
    %10 = vector.load %arg2[%c0_11, %c0_12] : memref<80x1xf32, #tpu.memory_space<vmem>>, vector<80x1xf32>
    %cst_13 = arith.constant 0.000000e+00 : f32
    %11 = vector.broadcast %cst_13 : f32 to vector<80x128xf32>
    %c5 = arith.constant 5 : index
    %c0_14 = arith.constant 0 : index
    %12 = vector.load %arg18[%c5, %c0_14] : memref<112x128xbf16, #tpu.memory_space<vmem>>, vector<80x128xbf16>
    %c6 = arith.constant 6 : index
    %c0_15 = arith.constant 0 : index
    %13 = vector.load %arg18[%c6, %c0_15] : memref<112x128xbf16, #tpu.memory_space<vmem>>, vector<80x128xbf16>
    %14 = tpu.concatenate %12, %13 in 1 : vector<80x128xbf16>, vector<80x128xbf16> -> vector<80x256xbf16>
    %c0_16 = arith.constant 0 : index
    %c0_17 = arith.constant 0 : index
    %c0_18 = arith.constant 0 : index
    %15 = vector.load %arg3[%c0_16, %c0_17, %c0_18] : memref<4x256x128xbf16, #tpu.memory_space<vmem>>, vector<1x256x128xbf16>
    %16 = vector.shape_cast %15 : vector<1x256x128xbf16> to vector<256x128xbf16>
    %cst_19 = arith.constant dense<0.000000e+00> : vector<80x128xf32>
    %17 = tpu.matmul %14, %16, %cst_19 {dimension_numbers = #tpu.dot_dimension_numbers<[1], [0], [0], [1], [0, 0, 1, 1], [], []>} : vector<80x256xbf16>, vector<256x128xbf16>, vector<80x128xf32> -> vector<80x128xf32>
    %18 = arith.addf %11, %17 : vector<80x128xf32>
    %c7 = arith.constant 7 : index
    %c0_20 = arith.constant 0 : index
    %19 = vector.load %arg18[%c7, %c0_20] : memref<112x128xbf16, #tpu.memory_space<vmem>>, vector<80x128xbf16>
    %c15 = arith.constant 15 : index
    %c0_21 = arith.constant 0 : index
    %20 = vector.load %arg18[%c15, %c0_21] : memref<112x128xbf16, #tpu.memory_space<vmem>>, vector<80x128xbf16>
    %21 = tpu.concatenate %19, %20 in 1 : vector<80x128xbf16>, vector<80x128xbf16> -> vector<80x256xbf16>
    %c1 = arith.constant 1 : index
    %c0_22 = arith.constant 0 : index
    %c0_23 = arith.constant 0 : index
    %22 = vector.load %arg3[%c1, %c0_22, %c0_23] : memref<4x256x128xbf16, #tpu.memory_space<vmem>>, vector<1x256x128xbf16>
    %23 = vector.shape_cast %22 : vector<1x256x128xbf16> to vector<256x128xbf16>
    %cst_24 = arith.constant dense<0.000000e+00> : vector<80x128xf32>
    %24 = tpu.matmul %21, %23, %cst_24 {dimension_numbers = #tpu.dot_dimension_numbers<[1], [0], [0], [1], [0, 0, 1, 1], [], []>} : vector<80x256xbf16>, vector<256x128xbf16>, vector<80x128xf32> -> vector<80x128xf32>
    %25 = arith.addf %18, %24 : vector<80x128xf32>
    %c16_25 = arith.constant 16 : index
    %c0_26 = arith.constant 0 : index
    %26 = vector.load %arg18[%c16_25, %c0_26] : memref<112x128xbf16, #tpu.memory_space<vmem>>, vector<80x128xbf16>
    %c17 = arith.constant 17 : index
    %c0_27 = arith.constant 0 : index
    %27 = vector.load %arg18[%c17, %c0_27] : memref<112x128xbf16, #tpu.memory_space<vmem>>, vector<80x128xbf16>
    %28 = tpu.concatenate %26, %27 in 1 : vector<80x128xbf16>, vector<80x128xbf16> -> vector<80x256xbf16>
    %c2 = arith.constant 2 : index
    %c0_28 = arith.constant 0 : index
    %c0_29 = arith.constant 0 : index
    %29 = vector.load %arg3[%c2, %c0_28, %c0_29] : memref<4x256x128xbf16, #tpu.memory_space<vmem>>, vector<1x256x128xbf16>
    %30 = vector.shape_cast %29 : vector<1x256x128xbf16> to vector<256x128xbf16>
    %cst_30 = arith.constant dense<0.000000e+00> : vector<80x128xf32>
    %31 = tpu.matmul %28, %30, %cst_30 {dimension_numbers = #tpu.dot_dimension_numbers<[1], [0], [0], [1], [0, 0, 1, 1], [], []>} : vector<80x256xbf16>, vector<256x128xbf16>, vector<80x128xf32> -> vector<80x128xf32>
    %32 = arith.addf %25, %31 : vector<80x128xf32>
    %c25 = arith.constant 25 : index
    %c0_31 = arith.constant 0 : index
    %33 = vector.load %arg18[%c25, %c0_31] : memref<112x128xbf16, #tpu.memory_space<vmem>>, vector<80x128xbf16>
    %c26 = arith.constant 26 : index
    %c0_32 = arith.constant 0 : index
    %34 = vector.load %arg18[%c26, %c0_32] : memref<112x128xbf16, #tpu.memory_space<vmem>>, vector<80x128xbf16>
    %35 = tpu.concatenate %33, %34 in 1 : vector<80x128xbf16>, vector<80x128xbf16> -> vector<80x256xbf16>
    %c3 = arith.constant 3 : index
    %c0_33 = arith.constant 0 : index
    %c0_34 = arith.constant 0 : index
    %36 = vector.load %arg3[%c3, %c0_33, %c0_34] : memref<4x256x128xbf16, #tpu.memory_space<vmem>>, vector<1x256x128xbf16>
    %37 = vector.shape_cast %36 : vector<1x256x128xbf16> to vector<256x128xbf16>
    %cst_35 = arith.constant dense<0.000000e+00> : vector<80x128xf32>
    %38 = tpu.matmul %35, %37, %cst_35 {dimension_numbers = #tpu.dot_dimension_numbers<[1], [0], [0], [1], [0, 0, 1, 1], [], []>} : vector<80x256xbf16>, vector<256x128xbf16>, vector<80x128xf32> -> vector<80x128xf32>
    %39 = arith.addf %32, %38 : vector<80x128xf32>
    %c27 = arith.constant 27 : index
    %c0_36 = arith.constant 0 : index
    %40 = vector.load %arg18[%c27, %c0_36] : memref<112x128xbf16, #tpu.memory_space<vmem>>, vector<80x128xbf16>
    %c0_37 = arith.constant 0 : index
    %c0_38 = arith.constant 0 : index
    %41 = vector.load %arg4[%c0_37, %c0_38] : memref<128x128xbf16, #tpu.memory_space<vmem>>, vector<128x128xbf16>
    %cst_39 = arith.constant dense<0.000000e+00> : vector<80x128xf32>
    %42 = tpu.matmul %40, %41, %cst_39 {dimension_numbers = #tpu.dot_dimension_numbers<[1], [0], [0], [1], [0, 0, 1, 1], [], []>} : vector<80x128xbf16>, vector<128x128xbf16>, vector<80x128xf32> -> vector<80x128xf32>
    %43 = arith.addf %39, %42 : vector<80x128xf32>
    %c0_40 = arith.constant 0 : index
    %c0_41 = arith.constant 0 : index
    %44 = vector.load %arg5[%c0_40, %c0_41] : memref<1x128xf32, #tpu.memory_space<vmem>>, vector<1x128xf32>
    %45 = vector.broadcast %44 : vector<1x128xf32> to vector<80x128xf32>
    %46 = arith.addf %43, %45 : vector<80x128xf32>
    %cst_42 = arith.constant 0.000000e+00 : f32
    %47 = vector.broadcast %cst_42 : f32 to vector<80x128xf32>
    %48 = arith.maximumf %46, %47 : vector<80x128xf32>
    %49 = arith.addf %48, %9 : vector<80x128xf32>
    %50 = vector.broadcast %10 : vector<80x1xf32> to vector<80x128xf32>
    %51 = arith.mulf %49, %50 : vector<80x128xf32>
    %52 = arith.truncf %51 : vector<80x128xf32> to vector<80x128xbf16>
    %c16_43 = arith.constant 16 : index
    %c0_44 = arith.constant 0 : index
    %53 = vector.load %arg19[%c16_43, %c0_44] : memref<112x128xbf16, #tpu.memory_space<vmem>>, vector<80x128xbf16>
    tpu.vector_store %arg19[%c16_43, %c0_44], %52 {strides = array<i32>} : memref<112x128xbf16, #tpu.memory_space<vmem>>, vector<80x128xbf16>,
    %cst_45 = arith.constant 0.000000e+00 : f32
    %54 = vector.broadcast %cst_45 : f32 to vector<80x128xf32>
    %c5_46 = arith.constant 5 : index
    %c0_47 = arith.constant 0 : index
    %55 = vector.load %arg19[%c5_46, %c0_47] : memref<112x128xbf16, #tpu.memory_space<vmem>>, vector<80x128xbf16>
    %c6_48 = arith.constant 6 : index
    %c0_49 = arith.constant 0 : index
    %56 = vector.load %arg19[%c6_48, %c0_49] : memref<112x128xbf16, #tpu.memory_space<vmem>>, vector<80x128xbf16>
    %57 = tpu.concatenate %55, %56 in 1 : vector<80x128xbf16>, vector<80x128xbf16> -> vector<80x256xbf16>
    %c0_50 = arith.constant 0 : index
    %c0_51 = arith.constant 0 : index
    %c0_52 = arith.constant 0 : index
    %58 = vector.load %arg6[%c0_50, %c0_51, %c0_52] : memref<4x256x128xbf16, #tpu.memory_space<vmem>>, vector<1x256x128xbf16>
    %59 = vector.shape_cast %58 : vector<1x256x128xbf16> to vector<256x128xbf16>
    %cst_53 = arith.constant dense<0.000000e+00> : vector<80x128xf32>
    %60 = tpu.matmul %57, %59, %cst_53 {dimension_numbers = #tpu.dot_dimension_numbers<[1], [0], [0], [1], [0, 0, 1, 1], [], []>} : vector<80x256xbf16>, vector<256x128xbf16>, vector<80x128xf32> -> vector<80x128xf32>
    %61 = arith.addf %54, %60 : vector<80x128xf32>
    %c7_54 = arith.constant 7 : index
    %c0_55 = arith.constant 0 : index
    %62 = vector.load %arg19[%c7_54, %c0_55] : memref<112x128xbf16, #tpu.memory_space<vmem>>, vector<80x128xbf16>
    %c15_56 = arith.constant 15 : index
    %c0_57 = arith.constant 0 : index
    %63 = vector.load %arg19[%c15_56, %c0_57] : memref<112x128xbf16, #tpu.memory_space<vmem>>, vector<80x128xbf16>
    %64 = tpu.concatenate %62, %63 in 1 : vector<80x128xbf16>, vector<80x128xbf16> -> vector<80x256xbf16>
    %c1_58 = arith.constant 1 : index
    %c0_59 = arith.constant 0 : index
    %c0_60 = arith.constant 0 : index
    %65 = vector.load %arg6[%c1_58, %c0_59, %c0_60] : memref<4x256x128xbf16, #tpu.memory_space<vmem>>, vector<1x256x128xbf16>
    %66 = vector.shape_cast %65 : vector<1x256x128xbf16> to vector<256x128xbf16>
    %cst_61 = arith.constant dense<0.000000e+00> : vector<80x128xf32>
    %67 = tpu.matmul %64, %66, %cst_61 {dimension_numbers = #tpu.dot_dimension_numbers<[1], [0], [0], [1], [0, 0, 1, 1], [], []>} : vector<80x256xbf16>, vector<256x128xbf16>, vector<80x128xf32> -> vector<80x128xf32>
    %68 = arith.addf %61, %67 : vector<80x128xf32>
    %c16_62 = arith.constant 16 : index
    %c0_63 = arith.constant 0 : index
    %69 = vector.load %arg19[%c16_62, %c0_63] : memref<112x128xbf16, #tpu.memory_space<vmem>>, vector<80x128xbf16>
    %c17_64 = arith.constant 17 : index
    %c0_65 = arith.constant 0 : index
    %70 = vector.load %arg19[%c17_64, %c0_65] : memref<112x128xbf16, #tpu.memory_space<vmem>>, vector<80x128xbf16>
    %71 = tpu.concatenate %69, %70 in 1 : vector<80x128xbf16>, vector<80x128xbf16> -> vector<80x256xbf16>
    %c2_66 = arith.constant 2 : index
    %c0_67 = arith.constant 0 : index
    %c0_68 = arith.constant 0 : index
    %72 = vector.load %arg6[%c2_66, %c0_67, %c0_68] : memref<4x256x128xbf16, #tpu.memory_space<vmem>>, vector<1x256x128xbf16>
    %73 = vector.shape_cast %72 : vector<1x256x128xbf16> to vector<256x128xbf16>
    %cst_69 = arith.constant dense<0.000000e+00> : vector<80x128xf32>
    %74 = tpu.matmul %71, %73, %cst_69 {dimension_numbers = #tpu.dot_dimension_numbers<[1], [0], [0], [1], [0, 0, 1, 1], [], []>} : vector<80x256xbf16>, vector<256x128xbf16>, vector<80x128xf32> -> vector<80x128xf32>
    %75 = arith.addf %68, %74 : vector<80x128xf32>
    %c25_70 = arith.constant 25 : index
    %c0_71 = arith.constant 0 : index
    %76 = vector.load %arg19[%c25_70, %c0_71] : memref<112x128xbf16, #tpu.memory_space<vmem>>, vector<80x128xbf16>
    %c26_72 = arith.constant 26 : index
    %c0_73 = arith.constant 0 : index
    %77 = vector.load %arg19[%c26_72, %c0_73] : memref<112x128xbf16, #tpu.memory_space<vmem>>, vector<80x128xbf16>
    %78 = tpu.concatenate %76, %77 in 1 : vector<80x128xbf16>, vector<80x128xbf16> -> vector<80x256xbf16>
    %c3_74 = arith.constant 3 : index
    %c0_75 = arith.constant 0 : index
    %c0_76 = arith.constant 0 : index
    %79 = vector.load %arg6[%c3_74, %c0_75, %c0_76] : memref<4x256x128xbf16, #tpu.memory_space<vmem>>, vector<1x256x128xbf16>
    %80 = vector.shape_cast %79 : vector<1x256x128xbf16> to vector<256x128xbf16>
    %cst_77 = arith.constant dense<0.000000e+00> : vector<80x128xf32>
    %81 = tpu.matmul %78, %80, %cst_77 {dimension_numbers = #tpu.dot_dimension_numbers<[1], [0], [0], [1], [0, 0, 1, 1], [], []>} : vector<80x256xbf16>, vector<256x128xbf16>, vector<80x128xf32> -> vector<80x128xf32>
    %82 = arith.addf %75, %81 : vector<80x128xf32>
    %c27_78 = arith.constant 27 : index
    %c0_79 = arith.constant 0 : index
    %83 = vector.load %arg19[%c27_78, %c0_79] : memref<112x128xbf16, #tpu.memory_space<vmem>>, vector<80x128xbf16>
    %c0_80 = arith.constant 0 : index
    %c0_81 = arith.constant 0 : index
    %84 = vector.load %arg7[%c0_80, %c0_81] : memref<128x128xbf16, #tpu.memory_space<vmem>>, vector<128x128xbf16>
    %cst_82 = arith.constant dense<0.000000e+00> : vector<80x128xf32>
    %85 = tpu.matmul %83, %84, %cst_82 {dimension_numbers = #tpu.dot_dimension_numbers<[1], [0], [0], [1], [0, 0, 1, 1], [], []>} : vector<80x128xbf16>, vector<128x128xbf16>, vector<80x128xf32> -> vector<80x128xf32>
    %86 = arith.addf %82, %85 : vector<80x128xf32>
    %c0_83 = arith.constant 0 : index
    %c0_84 = arith.constant 0 : index
    %87 = vector.load %arg8[%c0_83, %c0_84] : memref<1x128xf32, #tpu.memory_space<vmem>>, vector<1x128xf32>
    %88 = vector.broadcast %87 : vector<1x128xf32> to vector<80x128xf32>
    %89 = arith.addf %86, %88 : vector<80x128xf32>
    %90 = vector.broadcast %10 : vector<80x1xf32> to vector<80x128xf32>
    %91 = arith.mulf %89, %90 : vector<80x128xf32>
    %cst_85 = arith.constant dense<0.000000e+00> : vector<128xf32>
    %92 = vector.multi_reduction <add>, %91, %cst_85 [0] : vector<80x128xf32> to vector<128xf32>
    %93 = vector.shape_cast %92 : vector<128xf32> to vector<1x128xf32>
    %cst_86 = arith.constant 1.562500e-02 : f32
    %94 = vector.broadcast %cst_86 : f32 to vector<1x128xf32>
    %95 = arith.mulf %93, %94 : vector<1x128xf32>
    %c0_87 = arith.constant 0 : index
    %c0_88 = arith.constant 0 : index
    %96 = vector.load %arg9[%c0_87, %c0_88] : memref<128x16xf32, #tpu.memory_space<vmem>>, vector<128x16xf32>
    %cst_89 = arith.constant dense<0.000000e+00> : vector<1x16xf32>
    %97 = tpu.matmul %95, %96, %cst_89 {dimension_numbers = #tpu.dot_dimension_numbers<[1], [0], [0], [1], [0, 0, 1, 1], [], []>} : vector<1x128xf32>, vector<128x16xf32>, vector<1x16xf32> -> vector<1x16xf32>
    %c0_90 = arith.constant 0 : index
    %c0_91 = arith.constant 0 : index
    %98 = vector.load %arg10[%c0_90, %c0_91] : memref<1x16xf32, #tpu.memory_space<vmem>>, vector<1x16xf32>
    %99 = arith.addf %97, %98 : vector<1x16xf32>
    %cst_92 = arith.constant 0.000000e+00 : f32
    %100 = vector.broadcast %cst_92 : f32 to vector<1x16xf32>
    %101 = arith.maximumf %99, %100 : vector<1x16xf32>
    %c0_93 = arith.constant 0 : index
    %c0_94 = arith.constant 0 : index
    %102 = vector.load %arg11[%c0_93, %c0_94] : memref<16x128xf32, #tpu.memory_space<vmem>>, vector<16x128xf32>
    %cst_95 = arith.constant dense<0.000000e+00> : vector<1x128xf32>
    %103 = tpu.matmul %101, %102, %cst_95 {dimension_numbers = #tpu.dot_dimension_numbers<[1], [0], [0], [1], [0, 0, 1, 1], [], []>} : vector<1x16xf32>, vector<16x128xf32>, vector<1x128xf32> -> vector<1x128xf32>
    %c0_96 = arith.constant 0 : index
    %c0_97 = arith.constant 0 : index
    %104 = vector.load %arg12[%c0_96, %c0_97] : memref<1x128xf32, #tpu.memory_space<vmem>>, vector<1x128xf32>
    %105 = arith.addf %103, %104 : vector<1x128xf32>
    %106 = arith.negf %105 : vector<1x128xf32>
    %107 = math.exp %106 : vector<1x128xf32>
    %cst_98 = arith.constant 1.000000e+00 : f32
    %108 = vector.broadcast %cst_98 : f32 to vector<1x128xf32>
    %109 = arith.addf %108, %107 : vector<1x128xf32>
    %110 = arith.divf %108, %109 : vector<1x128xf32>
    %111 = vector.broadcast %110 : vector<1x128xf32> to vector<80x128xf32>
    %112 = arith.mulf %91, %111 : vector<80x128xf32>
    %c0_99 = arith.constant 0 : index
    %c0_100 = arith.constant 0 : index
    %113 = vector.load %arg13[%c0_99, %c0_100] : memref<128x16xf32, #tpu.memory_space<vmem>>, vector<128x16xf32>
    %cst_101 = arith.constant dense<0.000000e+00> : vector<80x16xf32>
    %114 = tpu.matmul %112, %113, %cst_101 {dimension_numbers = #tpu.dot_dimension_numbers<[1], [0], [0], [1], [0, 0, 1, 1], [], []>} : vector<80x128xf32>, vector<128x16xf32>, vector<80x16xf32> -> vector<80x16xf32>
    %c0_102 = arith.constant 0 : index
    %c0_103 = arith.constant 0 : index
    %115 = vector.load %arg14[%c0_102, %c0_103] : memref<1x16xf32, #tpu.memory_space<vmem>>, vector<1x16xf32>
    %116 = vector.broadcast %115 : vector<1x16xf32> to vector<80x16xf32>
    %117 = arith.addf %114, %116 : vector<80x16xf32>
    %cst_104 = arith.constant 0.000000e+00 : f32
    %118 = vector.broadcast %cst_104 : f32 to vector<80x16xf32>
    %119 = arith.maximumf %117, %118 : vector<80x16xf32>
    %c0_105 = arith.constant 0 : index
    %c0_106 = arith.constant 0 : index
    %120 = vector.load %arg15[%c0_105, %c0_106] : memref<1x16xf32, #tpu.memory_space<vmem>>, vector<1x16xf32>
    %121 = vector.broadcast %120 : vector<1x16xf32> to vector<80x16xf32>
    %122 = arith.mulf %119, %121 : vector<80x16xf32>
    %cst_107 = arith.constant dense<0.000000e+00> : vector<80xf32>
    %123 = vector.multi_reduction <add>, %122, %cst_107 [1] : vector<80x16xf32> to vector<80xf32>
    %124 = vector.shape_cast %123 : vector<80xf32> to vector<80x1xf32>
    %c0_108 = arith.constant 0 : index
    %c0_109 = arith.constant 0 : index
    %125 = vector.load %arg16[%c0_108, %c0_109] : memref<1x1xf32, #tpu.memory_space<vmem>>, vector<1x1xf32>
    %126 = vector.broadcast %125 : vector<1x1xf32> to vector<80x1xf32>
    %127 = arith.addf %124, %126 : vector<80x1xf32>
    %128 = arith.negf %127 : vector<80x1xf32>
    %129 = math.exp %128 : vector<80x1xf32>
    %cst_110 = arith.constant 1.000000e+00 : f32
    %130 = vector.broadcast %cst_110 : f32 to vector<80x1xf32>
    %131 = arith.addf %130, %129 : vector<80x1xf32>
    %132 = arith.divf %130, %131 : vector<80x1xf32>
    %133 = vector.broadcast %132 : vector<80x1xf32> to vector<80x128xf32>
    %134 = arith.mulf %112, %133 : vector<80x128xf32>
    %135 = arith.addf %134, %9 : vector<80x128xf32>
    %c0_111 = arith.constant 0 : index
    %c0_112 = arith.constant 0 : index
    %c0_113 = arith.constant 0 : index
    %136 = vector.load %arg17[%c0_111, %c0_112, %c0_113] : memref<1x80x128xf32, #tpu.memory_space<vmem>>, vector<1x80x128xf32>
    %137 = vector.shape_cast %136 : vector<1x80x128xf32> to vector<80x128xf32>
    %138 = vector.shape_cast %135 : vector<80x128xf32> to vector<1x80x128xf32>
    tpu.vector_store %arg17[%c0_111, %c0_112, %c0_113], %138 {strides = array<i32>} : memref<1x80x128xf32, #tpu.memory_space<vmem>>, vector<1x80x128xf32>,
    return
  }
  func.func @transform_0(%arg0: i32) -> (i32, i32, i32) {
    %c0_i32 = arith.constant 0 : i32
    %c0_i32_0 = arith.constant 0 : i32
    %c0_i32_1 = arith.constant 0 : i32
    return %arg0, %c0_i32, %c0_i32_0 : i32, i32, i32
  }
  func.func @transform_1(%arg0: i32) -> (i32, i32) {
    %c0_i32 = arith.constant 0 : i32
    %c0_i32_0 = arith.constant 0 : i32
    %c0_i32_1 = arith.constant 0 : i32
    return %c0_i32, %c0_i32_0 : i32, i32
  }
  func.func @transform_2(%arg0: i32) -> (i32, i32, i32) {
    %c0_i32 = arith.constant 0 : i32
    %c0_i32_0 = arith.constant 0 : i32
    %c0_i32_1 = arith.constant 0 : i32
    %c0_i32_2 = arith.constant 0 : i32
    return %c0_i32, %c0_i32_0, %c0_i32_1 : i32, i32, i32
  }
  func.func @transform_3(%arg0: i32) -> (i32, i32) {
    %c0_i32 = arith.constant 0 : i32
    %c0_i32_0 = arith.constant 0 : i32
    %c0_i32_1 = arith.constant 0 : i32
    return %c0_i32, %c0_i32_0 : i32, i32
  }
  func.func @transform_4(%arg0: i32) -> (i32, i32) {
    %c0_i32 = arith.constant 0 : i32
    %c0_i32_0 = arith.constant 0 : i32
    %c0_i32_1 = arith.constant 0 : i32
    return %c0_i32, %c0_i32_0 : i32, i32
  }
  func.func @transform_5(%arg0: i32) -> (i32, i32, i32) {
    %c0_i32 = arith.constant 0 : i32
    %c0_i32_0 = arith.constant 0 : i32
    %c0_i32_1 = arith.constant 0 : i32
    %c0_i32_2 = arith.constant 0 : i32
    return %c0_i32, %c0_i32_0, %c0_i32_1 : i32, i32, i32
  }
  func.func @transform_6(%arg0: i32) -> (i32, i32) {
    %c0_i32 = arith.constant 0 : i32
    %c0_i32_0 = arith.constant 0 : i32
    %c0_i32_1 = arith.constant 0 : i32
    return %c0_i32, %c0_i32_0 : i32, i32
  }
  func.func @transform_7(%arg0: i32) -> (i32, i32) {
    %c0_i32 = arith.constant 0 : i32
    %c0_i32_0 = arith.constant 0 : i32
    %c0_i32_1 = arith.constant 0 : i32
    return %c0_i32, %c0_i32_0 : i32, i32
  }
  func.func @transform_8(%arg0: i32) -> (i32, i32) {
    %c0_i32 = arith.constant 0 : i32
    %c0_i32_0 = arith.constant 0 : i32
    %c0_i32_1 = arith.constant 0 : i32
    return %c0_i32, %c0_i32_0 : i32, i32
  }
  func.func @transform_9(%arg0: i32) -> (i32, i32) {
    %c0_i32 = arith.constant 0 : i32
    %c0_i32_0 = arith.constant 0 : i32
    %c0_i32_1 = arith.constant 0 : i32
    return %c0_i32, %c0_i32_0 : i32, i32
  }
  func.func @transform_10(%arg0: i32) -> (i32, i32) {
    %c0_i32 = arith.constant 0 : i32
    %c0_i32_0 = arith.constant 0 : i32
    %c0_i32_1 = arith.constant 0 : i32
    return %c0_i32, %c0_i32_0 : i32, i32
  }
  func.func @transform_11(%arg0: i32) -> (i32, i32) {
    %c0_i32 = arith.constant 0 : i32
    %c0_i32_0 = arith.constant 0 : i32
    %c0_i32_1 = arith.constant 0 : i32
    return %c0_i32, %c0_i32_0 : i32, i32
  }
  func.func @transform_12(%arg0: i32) -> (i32, i32) {
    %c0_i32 = arith.constant 0 : i32
    %c0_i32_0 = arith.constant 0 : i32
    %c0_i32_1 = arith.constant 0 : i32
    return %c0_i32, %c0_i32_0 : i32, i32
  }
  func.func @transform_13(%arg0: i32) -> (i32, i32) {
    %c0_i32 = arith.constant 0 : i32
    %c0_i32_0 = arith.constant 0 : i32
    %c0_i32_1 = arith.constant 0 : i32
    return %c0_i32, %c0_i32_0 : i32, i32
  }
  func.func @transform_14(%arg0: i32) -> (i32, i32) {
    %c0_i32 = arith.constant 0 : i32
    %c0_i32_0 = arith.constant 0 : i32
    %c0_i32_1 = arith.constant 0 : i32
    return %c0_i32, %c0_i32_0 : i32, i32
  }
  func.func @transform_15(%arg0: i32) -> (i32, i32) {
    %c0_i32 = arith.constant 0 : i32
    %c0_i32_0 = arith.constant 0 : i32
    %c0_i32_1 = arith.constant 0 : i32
    return %c0_i32, %c0_i32_0 : i32, i32
  }
  func.func @transform_16(%arg0: i32) -> (i32, i32, i32) {
    %c0_i32 = arith.constant 0 : i32
    %c0_i32_0 = arith.constant 0 : i32
    %c0_i32_1 = arith.constant 0 : i32
    return %arg0, %c0_i32, %c0_i32_0 : i32, i32, i32
  }
}

</mosaic_0001>

<llo_original>
// kernel: tpu_custom_call.1
$region0: #{tpu_custom_call.1}
  #allocation0 [shape = 'u32[]', space=smem, size = 0x4, offset = 0x4, fixed_abs, tag = 'smem constant byte address 0x4 - core index']
  #allocation1 [shape = 'u32[144,128]{1,0:T(1,128)}', space=vmem, size = 0x12000, scoped, tag = 'internal scratch']
  #allocation2 [shape = 'bf16[112,128]{1,0:T(16,128)(2,1)}', space=vmem, size = 0x7000, scoped, tag = 'scratch operand']
  #allocation3 [shape = 'bf16[112,128]{1,0:T(16,128)(2,1)}', space=vmem, size = 0x7000, scoped, tag = 'scratch operand']
  #allocation4 [shape = 'f32[1,1]{1,0:T(1,128)S(1)}', space=vmem, size = 0x200, scoped, tag = 'scoped memory for tpu_custom_call.1']
  %s0 = inlined_call_operand.vmem [shape: bf16[2,80,128], index: 0, kind: input, shape index: {}]
  %s1 = inlined_call_operand.vmem [shape: f32[80,1], index: 1, kind: input, shape index: {}]
  %s2 = inlined_call_operand.hbm [shape: bf16[4,256,128], index: 2, kind: input, shape index: {}]
  %s3 = inlined_call_operand.vmem [shape: bf16[128,128], index: 3, kind: input, shape index: {}]
  %s4 = inlined_call_operand.vmem [shape: f32[1,128], index: 4, kind: input, shape index: {}]
  %s5 = inlined_call_operand.hbm [shape: bf16[4,256,128], index: 5, kind: input, shape index: {}]
  %s6 = inlined_call_operand.vmem [shape: bf16[128,128], index: 6, kind: input, shape index: {}]
  %s7 = inlined_call_operand.vmem [shape: f32[1,128], index: 7, kind: input, shape index: {}]
  %s8 = inlined_call_operand.vmem [shape: f32[128,16], index: 8, kind: input, shape index: {}]
  %s9 = inlined_call_operand.vmem [shape: f32[1,16], index: 9, kind: input, shape index: {}]
  %s10 = inlined_call_operand.vmem [shape: f32[16,128], index: 10, kind: input, shape index: {}]
  %s11 = inlined_call_operand.vmem [shape: f32[1,128], index: 11, kind: input, shape index: {}]
  %s12 = inlined_call_operand.vmem [shape: f32[128,16], index: 12, kind: input, shape index: {}]
  %s13 = inlined_call_operand.vmem [shape: f32[1,16], index: 13, kind: input, shape index: {}]
  %s14 = inlined_call_operand.vmem [shape: f32[1,16], index: 14, kind: input, shape index: {}]
  %s15 = inlined_call_operand.<no memory space> [shape: f32[1,1], index: 15, kind: input, shape index: {}]
  %s16 = inlined_call_operand.hbm [shape: f32[2,80,128], index: 16, kind: output, shape index: {}]
  %s17 = sld [smem:[#allocation0]]
  $region105: #{tpu_custom_call.1} parent=0
    _
  %s19 = ssub.s32 1, %s17
  %s20 = scalar_select 0, %s19, %s17
  %v21 = vstv %s15
  %22 = vst [vmem:[#allocation4] sm:$0x1] %v21
  $region1: #{tpu_custom_call.1} parent=0
    #allocation5 [shape = 'u8[262144]{0}', space=vmem, size = 0x40000, scoped, tag = 'input window, operand 2, single buffered']
    #allocation6 [shape = 's32[2]{0}', space=sflag, size = 0x8, scoped, tag = 'scoped memory for tpu_custom_call.1']
    #allocation7 [shape = 's32[2]{0}', space=sflag, size = 0x8, scoped, tag = 'scoped memory for tpu_custom_call.1']
    #allocation8 [shape = 'u8[262144]{0}', space=vmem, size = 0x40000, scoped, tag = 'input window, operand 5, single buffered']
    #allocation9 [shape = 's32[1]{0}', space=sflag, size = 0x4, scoped, tag = 'scoped memory for tpu_custom_call.1']
    #allocation10 [shape = 'u8[81920]{0}', space=vmem, size = 0x14000, scoped, tag = 'output window, operand 0']
    %23 = vsyncpa [#allocation6], 0
    %24 = vsyncpa [#allocation9], 0
    %25 = vsyncpa [#allocation7], 0
    %s26 = scalar_lea.sflag [#allocation7], 1
    %27 = vsyncpa %s26, 0
    loop: start=0, step=1, limit=4
    $region2: #{tpu_custom_call.1} parent=1 // loop_pre_header
      _
    $region3: #{tpu_custom_call.1} parent=1 // loop_header
      %s29 = sphi 0, %s33
      %p30 = scmp.ge.s32.totalorder %s29, 4
      %s39 = sphi 0, %s41
      %s42 = sphi 0, %s39
      %s43 = sphi 0, %s42
      %s59 = sphi 0, %s43
      %s63 = sphi 0, %s63
      %s65 = sphi 0, %s63
      %s66 = sphi 0, %s65
      %s80 = sphi 0, %s66
      %s84 = sphi 0, %s84
      %s86 = sphi 0, %s84
      %s87 = sphi 0, %s86
      %s101 = sphi 0, %s87
      %s105 = sphi 0, %s105
      %s107 = sphi 0, %s105
      %s108 = sphi 0, %s107
      %s122 = sphi 0, %s108
      %s126 = sphi 0, %s126
      %s128 = sphi 0, %s126
      %s129 = sphi 0, %s128
      %s143 = sphi 0, %s129
      %s147 = sphi 0, %s147
      %s149 = sphi 0, %s147
      %s150 = sphi 0, %s149
      %s164 = sphi 0, %s150
      %s168 = sphi 0, %s168
      %s170 = sphi 0, %s168
      %s171 = sphi 0, %s170
      %s185 = sphi 0, %s171
      %s189 = sphi 0, %s189
      %s191 = sphi 0, %s189
      %s192 = sphi 0, %s191
      %s206 = sphi 0, %s192
      %s210 = sphi 0, %s210
      %s212 = sphi 0, %s210
      %s213 = sphi 0, %s212
      %s227 = sphi 0, %s213
      %s231 = sphi 0, %s231
      %s233 = sphi 0, %s231
      %s234 = sphi 0, %s233
      %s248 = sphi 0, %s234
      %s252 = sphi 0, %s252
      %s254 = sphi 0, %s252
      %s255 = sphi 0, %s254
      %s269 = sphi 0, %s255
      %s273 = sphi 0, %s273
      %s275 = sphi 0, %s273
      %s276 = sphi 0, %s275
      %s290 = sphi 0, %s276
      %s294 = sphi 0, %s294
      %s296 = sphi 0, %s294
      %s297 = sphi 0, %s296
      %s311 = sphi 0, %s297
      %s315 = sphi 0, %s315
      %s317 = sphi 0, %s315
      %s318 = sphi 0, %s317
      %s332 = sphi 0, %s318
      %s336 = sphi 0, %s336
      %s338 = sphi 0, %s336
      %s339 = sphi 0, %s338
      %s353 = sphi 0, %s339
      %s357 = sphi 0, %s357
      %s359 = sphi 0, %s357
      %s360 = sphi 0, %s359
      %s374 = sphi 0, %s360
      %s380 = sphi 0, %s382
      %s383 = sphi 0, %s380
      %s384 = sphi 0, %s383
      %s400 = sphi 0, %s384
    $region4: #{tpu_custom_call.1} parent=1 // loop_header_branch
      %32 = sbr.rel (%p30) target = $region8
    $region5: #{tpu_custom_call.1} parent=1 // loop_body
      %s34 = ssub.s32 %s29, 1
      %s35 = ssub.s32 %s29, 2
      %s36 = sadd.s32 %s29, 1
      %s37 = ssub.s32 %s29, %s36
      %p38 = scmp.eq.s32.totalorder %s37, 0
      %s40 = sadd.s32 %s39, 1
      %s41 = scalar_select %p38, %s39, %s40
      %p44 = pneg %p38
      %p45 = scmp.eq.s32.totalorder %s29, 1
      %p46 = por %p44, %p45
      %p47 = scmp.ne.s32.totalorder %s39, %s42
      %p48 = scmp.eq.s32.totalorder %s29, 0
      %p49 = por %p47, %p48
      %p50 = scmp.ne.s32.totalorder %s39, %s42
      %p51 = scmp.eq.s32.totalorder %s34, 1
      %p52 = por %p50, %p51
      %p53 = scmp.ne.s32.totalorder %s42, %s43
      %p54 = scmp.eq.s32.totalorder %s34, 0
      %p55 = por %p53, %p54
      %p56 = scmp.ne.s32.totalorder %s42, %s43
      %p57 = scmp.eq.s32.totalorder %s35, 1
      %p58 = por %p56, %p57
      %p60 = scmp.ne.s32.totalorder %s43, %s59
      %p61 = scmp.eq.s32.totalorder %s35, 0
      %p62 = por %p60, %p61
      %s64 = sadd.s32 %s63, 1
      %p67 = scmp.eq.s32.totalorder %s29, 1
      %p68 = scmp.ne.s32.totalorder %s63, %s65
      %p69 = scmp.eq.s32.totalorder %s29, 0
      %p70 = por %p68, %p69
      %p71 = scmp.ne.s32.totalorder %s63, %s65
      %p72 = scmp.eq.s32.totalorder %s34, 1
      %p73 = por %p71, %p72
      %p74 = scmp.ne.s32.totalorder %s65, %s66
      %p75 = scmp.eq.s32.totalorder %s34, 0
      %p76 = por %p74, %p75
      %p77 = scmp.ne.s32.totalorder %s65, %s66
      %p78 = scmp.eq.s32.totalorder %s35, 1
      %p79 = por %p77, %p78
      %p81 = scmp.ne.s32.totalorder %s66, %s80
      %p82 = scmp.eq.s32.totalorder %s35, 0
      %p83 = por %p81, %p82
      %s85 = sadd.s32 %s84, 1
      %p88 = scmp.eq.s32.totalorder %s29, 1
      %p89 = scmp.ne.s32.totalorder %s84, %s86
      %p90 = scmp.eq.s32.totalorder %s29, 0
      %p91 = por %p89, %p90
      %p92 = scmp.ne.s32.totalorder %s84, %s86
      %p93 = scmp.eq.s32.totalorder %s34, 1
      %p94 = por %p92, %p93
      %p95 = scmp.ne.s32.totalorder %s86, %s87
      %p96 = scmp.eq.s32.totalorder %s34, 0
      %p97 = por %p95, %p96
      %p98 = scmp.ne.s32.totalorder %s86, %s87
      %p99 = scmp.eq.s32.totalorder %s35, 1
      %p100 = por %p98, %p99
      %p102 = scmp.ne.s32.totalorder %s87, %s101
      %p103 = scmp.eq.s32.totalorder %s35, 0
      %p104 = por %p102, %p103
      %s106 = sadd.s32 %s105, 1
      %p109 = scmp.eq.s32.totalorder %s29, 1
      %p110 = scmp.ne.s32.totalorder %s105, %s107
      %p111 = scmp.eq.s32.totalorder %s29, 0
      %p112 = por %p110, %p111
      %p113 = scmp.ne.s32.totalorder %s105, %s107
      %p114 = scmp.eq.s32.totalorder %s34, 1
      %p115 = por %p113, %p114
      %p116 = scmp.ne.s32.totalorder %s107, %s108
      %p117 = scmp.eq.s32.totalorder %s34, 0
      %p118 = por %p116, %p117
      %p119 = scmp.ne.s32.totalorder %s107, %s108
      %p120 = scmp.eq.s32.totalorder %s35, 1
      %p121 = por %p119, %p120
      %p123 = scmp.ne.s32.totalorder %s108, %s122
      %p124 = scmp.eq.s32.totalorder %s35, 0
      %p125 = por %p123, %p124
      %s127 = sadd.s32 %s126, 1
      %p130 = scmp.eq.s32.totalorder %s29, 1
      %p131 = scmp.ne.s32.totalorder %s126, %s128
      %p132 = scmp.eq.s32.totalorder %s29, 0
      %p133 = por %p131, %p132
      %p134 = scmp.ne.s32.totalorder %s126, %s128
      %p135 = scmp.eq.s32.totalorder %s34, 1
      %p136 = por %p134, %p135
      %p137 = scmp.ne.s32.totalorder %s128, %s129
      %p138 = scmp.eq.s32.totalorder %s34, 0
      %p139 = por %p137, %p138
      %p140 = scmp.ne.s32.totalorder %s128, %s129
      %p141 = scmp.eq.s32.totalorder %s35, 1
      %p142 = por %p140, %p141
      %p144 = scmp.ne.s32.totalorder %s129, %s143
      %p145 = scmp.eq.s32.totalorder %s35, 0
      %p146 = por %p144, %p145
      %s148 = sadd.s32 %s147, 1
      %p151 = scmp.eq.s32.totalorder %s29, 1
      %p152 = scmp.ne.s32.totalorder %s147, %s149
      %p153 = scmp.eq.s32.totalorder %s29, 0
      %p154 = por %p152, %p153
      %p155 = scmp.ne.s32.totalorder %s147, %s149
      %p156 = scmp.eq.s32.totalorder %s34, 1
      %p157 = por %p155, %p156
      %p158 = scmp.ne.s32.totalorder %s149, %s150
      %p159 = scmp.eq.s32.totalorder %s34, 0
      %p160 = por %p158, %p159
      %p161 = scmp.ne.s32.totalorder %s149, %s150
      %p162 = scmp.eq.s32.totalorder %s35, 1
      %p163 = por %p161, %p162
      %p165 = scmp.ne.s32.totalorder %s150, %s164
      %p166 = scmp.eq.s32.totalorder %s35, 0
      %p167 = por %p165, %p166
      %s169 = sadd.s32 %s168, 1
      %p172 = scmp.eq.s32.totalorder %s29, 1
      %p173 = scmp.ne.s32.totalorder %s168, %s170
      %p174 = scmp.eq.s32.totalorder %s29, 0
      %p175 = por %p173, %p174
      %p176 = scmp.ne.s32.totalorder %s168, %s170
      %p177 = scmp.eq.s32.totalorder %s34, 1
      %p178 = por %p176, %p177
      %p179 = scmp.ne.s32.totalorder %s170, %s171
      %p180 = scmp.eq.s32.totalorder %s34, 0
      %p181 = por %p179, %p180
      %p182 = scmp.ne.s32.totalorder %s170, %s171
      %p183 = scmp.eq.s32.totalorder %s35, 1
      %p184 = por %p182, %p183
      %p186 = scmp.ne.s32.totalorder %s171, %s185
      %p187 = scmp.eq.s32.totalorder %s35, 0
      %p188 = por %p186, %p187
      %s190 = sadd.s32 %s189, 1
      %p193 = scmp.eq.s32.totalorder %s29, 1
      %p194 = scmp.ne.s32.totalorder %s189, %s191
      %p195 = scmp.eq.s32.totalorder %s29, 0
      %p196 = por %p194, %p195
      %p197 = scmp.ne.s32.totalorder %s189, %s191
      %p198 = scmp.eq.s32.totalorder %s34, 1
      %p199 = por %p197, %p198
      %p200 = scmp.ne.s32.totalorder %s191, %s192
      %p201 = scmp.eq.s32.totalorder %s34, 0
      %p202 = por %p200, %p201
      %p203 = scmp.ne.s32.totalorder %s191, %s192
      %p204 = scmp.eq.s32.totalorder %s35, 1
      %p205 = por %p203, %p204
      %p207 = scmp.ne.s32.totalorder %s192, %s206
      %p208 = scmp.eq.s32.totalorder %s35, 0
      %p209 = por %p207, %p208
      %s211 = sadd.s32 %s210, 1
      %p214 = scmp.eq.s32.totalorder %s29, 1
      %p215 = scmp.ne.s32.totalorder %s210, %s212
      %p216 = scmp.eq.s32.totalorder %s29, 0
      %p217 = por %p215, %p216
      %p218 = scmp.ne.s32.totalorder %s210, %s212
      %p219 = scmp.eq.s32.totalorder %s34, 1
      %p220 = por %p218, %p219
      %p221 = scmp.ne.s32.totalorder %s212, %s213
      %p222 = scmp.eq.s32.totalorder %s34, 0
      %p223 = por %p221, %p222
      %p224 = scmp.ne.s32.totalorder %s212, %s213
      %p225 = scmp.eq.s32.totalorder %s35, 1
      %p226 = por %p224, %p225
      %p228 = scmp.ne.s32.totalorder %s213, %s227
      %p229 = scmp.eq.s32.totalorder %s35, 0
      %p230 = por %p228, %p229
      %s232 = sadd.s32 %s231, 1
      %p235 = scmp.eq.s32.totalorder %s29, 1
      %p236 = scmp.ne.s32.totalorder %s231, %s233
      %p237 = scmp.eq.s32.totalorder %s29, 0
      %p238 = por %p236, %p237
      %p239 = scmp.ne.s32.totalorder %s231, %s233
      %p240 = scmp.eq.s32.totalorder %s34, 1
      %p241 = por %p239, %p240
      %p242 = scmp.ne.s32.totalorder %s233, %s234
      %p243 = scmp.eq.s32.totalorder %s34, 0
      %p244 = por %p242, %p243
      %p245 = scmp.ne.s32.totalorder %s233, %s234
      %p246 = scmp.eq.s32.totalorder %s35, 1
      %p247 = por %p245, %p246
      %p249 = scmp.ne.s32.totalorder %s234, %s248
      %p250 = scmp.eq.s32.totalorder %s35, 0
      %p251 = por %p249, %p250
      %s253 = sadd.s32 %s252, 1
      %p256 = scmp.eq.s32.totalorder %s29, 1
      %p257 = scmp.ne.s32.totalorder %s252, %s254
      %p258 = scmp.eq.s32.totalorder %s29, 0
      %p259 = por %p257, %p258
      %p260 = scmp.ne.s32.totalorder %s252, %s254
      %p261 = scmp.eq.s32.totalorder %s34, 1
      %p262 = por %p260, %p261
      %p263 = scmp.ne.s32.totalorder %s254, %s255
      %p264 = scmp.eq.s32.totalorder %s34, 0
      %p265 = por %p263, %p264
      %p266 = scmp.ne.s32.totalorder %s254, %s255
      %p267 = scmp.eq.s32.totalorder %s35, 1
      %p268 = por %p266, %p267
      %p270 = scmp.ne.s32.totalorder %s255, %s269
      %p271 = scmp.eq.s32.totalorder %s35, 0
      %p272 = por %p270, %p271
      %s274 = sadd.s32 %s273, 1
      %p277 = scmp.eq.s32.totalorder %s29, 1
      %p278 = scmp.ne.s32.totalorder %s273, %s275
      %p279 = scmp.eq.s32.totalorder %s29, 0
      %p280 = por %p278, %p279
      %p281 = scmp.ne.s32.totalorder %s273, %s275
      %p282 = scmp.eq.s32.totalorder %s34, 1
      %p283 = por %p281, %p282
      %p284 = scmp.ne.s32.totalorder %s275, %s276
      %p285 = scmp.eq.s32.totalorder %s34, 0
      %p286 = por %p284, %p285
      %p287 = scmp.ne.s32.totalorder %s275, %s276
      %p288 = scmp.eq.s32.totalorder %s35, 1
      %p289 = por %p287, %p288
      %p291 = scmp.ne.s32.totalorder %s276, %s290
      %p292 = scmp.eq.s32.totalorder %s35, 0
      %p293 = por %p291, %p292
      %s295 = sadd.s32 %s294, 1
      %p298 = scmp.eq.s32.totalorder %s29, 1
      %p299 = scmp.ne.s32.totalorder %s294, %s296
      %p300 = scmp.eq.s32.totalorder %s29, 0
      %p301 = por %p299, %p300
      %p302 = scmp.ne.s32.totalorder %s294, %s296
      %p303 = scmp.eq.s32.totalorder %s34, 1
      %p304 = por %p302, %p303
      %p305 = scmp.ne.s32.totalorder %s296, %s297
      %p306 = scmp.eq.s32.totalorder %s34, 0
      %p307 = por %p305, %p306
      %p308 = scmp.ne.s32.totalorder %s296, %s297
      %p309 = scmp.eq.s32.totalorder %s35, 1
      %p310 = por %p308, %p309
      %p312 = scmp.ne.s32.totalorder %s297, %s311
      %p313 = scmp.eq.s32.totalorder %s35, 0
      %p314 = por %p312, %p313
      %s316 = sadd.s32 %s315, 1
      %p319 = scmp.eq.s32.totalorder %s29, 1
      %p320 = scmp.ne.s32.totalorder %s315, %s317
      %p321 = scmp.eq.s32.totalorder %s29, 0
      %p322 = por %p320, %p321
      %p323 = scmp.ne.s32.totalorder %s315, %s317
      %p324 = scmp.eq.s32.totalorder %s34, 1
      %p325 = por %p323, %p324
      %p326 = scmp.ne.s32.totalorder %s317, %s318
      %p327 = scmp.eq.s32.totalorder %s34, 0
      %p328 = por %p326, %p327
      %p329 = scmp.ne.s32.totalorder %s317, %s318
      %p330 = scmp.eq.s32.totalorder %s35, 1
      %p331 = por %p329, %p330
      %p333 = scmp.ne.s32.totalorder %s318, %s332
      %p334 = scmp.eq.s32.totalorder %s35, 0
      %p335 = por %p333, %p334
      %s337 = sadd.s32 %s336, 1
      %p340 = scmp.eq.s32.totalorder %s29, 1
      %p341 = scmp.ne.s32.totalorder %s336, %s338
      %p342 = scmp.eq.s32.totalorder %s29, 0
      %p343 = por %p341, %p342
      %p344 = scmp.ne.s32.totalorder %s336, %s338
      %p345 = scmp.eq.s32.totalorder %s34, 1
      %p346 = por %p344, %p345
      %p347 = scmp.ne.s32.totalorder %s338, %s339
      %p348 = scmp.eq.s32.totalorder %s34, 0
      %p349 = por %p347, %p348
      %p350 = scmp.ne.s32.totalorder %s338, %s339
      %p351 = scmp.eq.s32.totalorder %s35, 1
      %p352 = por %p350, %p351
      %p354 = scmp.ne.s32.totalorder %s339, %s353
      %p355 = scmp.eq.s32.totalorder %s35, 0
      %p356 = por %p354, %p355
      %s358 = sadd.s32 %s357, 1
      %p361 = scmp.eq.s32.totalorder %s29, 1
      %p362 = scmp.ne.s32.totalorder %s357, %s359
      %p363 = scmp.eq.s32.totalorder %s29, 0
      %p364 = por %p362, %p363
      %p365 = scmp.ne.s32.totalorder %s357, %s359
      %p366 = scmp.eq.s32.totalorder %s34, 1
      %p367 = por %p365, %p366
      %p368 = scmp.ne.s32.totalorder %s359, %s360
      %p369 = scmp.eq.s32.totalorder %s34, 0
      %p370 = por %p368, %p369
      %p371 = scmp.ne.s32.totalorder %s359, %s360
      %p372 = scmp.eq.s32.totalorder %s35, 1
      %p373 = por %p371, %p372
      %p375 = scmp.ne.s32.totalorder %s360, %s374
      %p376 = scmp.eq.s32.totalorder %s35, 0
      %p377 = por %p375, %p376
      %s378 = ssub.s32 %s29, %s36
      %p379 = scmp.eq.s32.totalorder %s378, 0
      %s381 = sadd.s32 %s380, 1
      %s382 = scalar_select %p379, %s380, %s381
      %p385 = pneg %p379
      %p386 = scmp.eq.s32.totalorder %s29, 1
      %p387 = por %p385, %p386
      %p388 = scmp.ne.s32.totalorder %s380, %s383
      %p389 = scmp.eq.s32.totalorder %s29, 0
      %p390 = por %p388, %p389
      %p391 = scmp.ne.s32.totalorder %s380, %s383
      %p392 = scmp.eq.s32.totalorder %s34, 1
      %p393 = por %p391, %p392
      %p394 = scmp.ne.s32.totalorder %s383, %s384
      %p395 = scmp.eq.s32.totalorder %s34, 0
      %p396 = por %p394, %p395
      %p397 = scmp.ne.s32.totalorder %s383, %s384
      %p398 = scmp.eq.s32.totalorder %s35, 1
      %p399 = por %p397, %p398
      %p401 = scmp.ne.s32.totalorder %s384, %s400
      %p402 = scmp.eq.s32.totalorder %s35, 0
      %p403 = por %p401, %p402
      %p404 = scmp.le.s32.totalorder 1, %s29
      %p405 = scmp.lt.s32.totalorder %s29, 3
      %p406 = pnand %p404, %p405
      %p407 = pneg %p406
      // Predicated region
      $region9: #{tpu_custom_call.1} parent=5 // pred_check
        _
      $region10: #{tpu_custom_call.1} parent=5 // pred_check_branch
        %409 = sbr.rel (%p406) target = $region12
      $region11: #{tpu_custom_call.1} parent=5 // pred_region
        %s410 = ssub.s32 %s29, 1
        // Predicated region
        $region13: #{tpu_custom_call.1} parent=11 // pred_check
          %p411 = pneg %p76
        $region14: #{tpu_custom_call.1} parent=11 // pred_check_branch
          %413 = sbr.rel (%p411) target = $region16
        $region15: #{tpu_custom_call.1} parent=11 // pred_region
          _
        $region16: #{tpu_custom_call.1} parent=11 // pred_fallthru
          _
        // Predicated region
        $region17: #{tpu_custom_call.1} parent=11 // pred_check
          %p414 = pneg %p97
        $region18: #{tpu_custom_call.1} parent=11 // pred_check_branch
          %416 = sbr.rel (%p414) target = $region20
        $region19: #{tpu_custom_call.1} parent=11 // pred_region
          %s418 = ssub.s32 8192, 8192
          %419 = vsyncadd [#allocation6], %s418
          %s420 = sshll.u32 [#allocation5], 4
          %s421 = int_to_ptr.vmem [resolvable:$true] %s420
          %426 = dma.hbm_to_vmem [thread:$0]  %s2, 8192, %s421, [#allocation6], 64, 64, 4
        $region20: #{tpu_custom_call.1} parent=11 // pred_fallthru
          _
        // Predicated region
        $region21: #{tpu_custom_call.1} parent=11 // pred_check
          %p427 = pneg %p118
        $region22: #{tpu_custom_call.1} parent=11 // pred_check_branch
          %429 = sbr.rel (%p427) target = $region24
        $region23: #{tpu_custom_call.1} parent=11 // pred_region
          _
        $region24: #{tpu_custom_call.1} parent=11 // pred_fallthru
          _
        // Predicated region
        $region25: #{tpu_custom_call.1} parent=11 // pred_check
          %p430 = pneg %p139
        $region26: #{tpu_custom_call.1} parent=11 // pred_check_branch
          %432 = sbr.rel (%p430) target = $region28
        $region27: #{tpu_custom_call.1} parent=11 // pred_region
          _
        $region28: #{tpu_custom_call.1} parent=11 // pred_fallthru
          _
        // Predicated region
        $region29: #{tpu_custom_call.1} parent=11 // pred_check
          %p433 = pneg %p160
        $region30: #{tpu_custom_call.1} parent=11 // pred_check_branch
          %435 = sbr.rel (%p433) target = $region32
        $region31: #{tpu_custom_call.1} parent=11 // pred_region
          %s437 = ssub.s32 8192, 8192
          %438 = vsyncadd [#allocation9], %s437
          %s439 = sshll.u32 [#allocation8], 4
          %s440 = int_to_ptr.vmem [resolvable:$true] %s439
          %445 = dma.hbm_to_vmem [thread:$0]  %s5, 8192, %s440, [#allocation9], 64, 64, 4
        $region32: #{tpu_custom_call.1} parent=11 // pred_fallthru
          _
        // Predicated region
        $region33: #{tpu_custom_call.1} parent=11 // pred_check
          %p446 = pneg %p181
        $region34: #{tpu_custom_call.1} parent=11 // pred_check_branch
          %448 = sbr.rel (%p446) target = $region36
        $region35: #{tpu_custom_call.1} parent=11 // pred_region
          _
        $region36: #{tpu_custom_call.1} parent=11 // pred_fallthru
          _
        // Predicated region
        $region37: #{tpu_custom_call.1} parent=11 // pred_check
          %p449 = pneg %p202
        $region38: #{tpu_custom_call.1} parent=11 // pred_check_branch
          %451 = sbr.rel (%p449) target = $region40
        $region39: #{tpu_custom_call.1} parent=11 // pred_region
          _
        $region40: #{tpu_custom_call.1} parent=11 // pred_fallthru
          _
        // Predicated region
        $region41: #{tpu_custom_call.1} parent=11 // pred_check
          %p452 = pneg %p223
        $region42: #{tpu_custom_call.1} parent=11 // pred_check_branch
          %454 = sbr.rel (%p452) target = $region44
        $region43: #{tpu_custom_call.1} parent=11 // pred_region
          _
        $region44: #{tpu_custom_call.1} parent=11 // pred_fallthru
          _
        // Predicated region
        $region45: #{tpu_custom_call.1} parent=11 // pred_check
          %p455 = pneg %p244
        $region46: #{tpu_custom_call.1} parent=11 // pred_check_branch
          %457 = sbr.rel (%p455) target = $region48
        $region47: #{tpu_custom_call.1} parent=11 // pred_region
          _
        $region48: #{tpu_custom_call.1} parent=11 // pred_fallthru
          _
        // Predicated region
        $region49: #{tpu_custom_call.1} parent=11 // pred_check
          %p458 = pneg %p265
        $region50: #{tpu_custom_call.1} parent=11 // pred_check_branch
          %460 = sbr.rel (%p458) target = $region52
        $region51: #{tpu_custom_call.1} parent=11 // pred_region
          _
        $region52: #{tpu_custom_call.1} parent=11 // pred_fallthru
          _
        // Predicated region
        $region53: #{tpu_custom_call.1} parent=11 // pred_check
          %p461 = pneg %p286
        $region54: #{tpu_custom_call.1} parent=11 // pred_check_branch
          %463 = sbr.rel (%p461) target = $region56
        $region55: #{tpu_custom_call.1} parent=11 // pred_region
          _
        $region56: #{tpu_custom_call.1} parent=11 // pred_fallthru
          _
        // Predicated region
        $region57: #{tpu_custom_call.1} parent=11 // pred_check
          %p464 = pneg %p307
        $region58: #{tpu_custom_call.1} parent=11 // pred_check_branch
          %466 = sbr.rel (%p464) target = $region60
        $region59: #{tpu_custom_call.1} parent=11 // pred_region
          _
        $region60: #{tpu_custom_call.1} parent=11 // pred_fallthru
          _
        // Predicated region
        $region61: #{tpu_custom_call.1} parent=11 // pred_check
          %p467 = pneg %p328
        $region62: #{tpu_custom_call.1} parent=11 // pred_check_branch
          %469 = sbr.rel (%p467) target = $region64
        $region63: #{tpu_custom_call.1} parent=11 // pred_region
          _
        $region64: #{tpu_custom_call.1} parent=11 // pred_fallthru
          _
        // Predicated region
        $region65: #{tpu_custom_call.1} parent=11 // pred_check
          %p470 = pneg %p349
        $region66: #{tpu_custom_call.1} parent=11 // pred_check_branch
          %472 = sbr.rel (%p470) target = $region68
        $region67: #{tpu_custom_call.1} parent=11 // pred_region
          _
        $region68: #{tpu_custom_call.1} parent=11 // pred_fallthru
          _
        // Predicated region
        $region69: #{tpu_custom_call.1} parent=11 // pred_check
          %p473 = pneg %p370
        $region70: #{tpu_custom_call.1} parent=11 // pred_check_branch
          %475 = sbr.rel (%p473) target = $region72
        $region71: #{tpu_custom_call.1} parent=11 // pred_region
          _
        $region72: #{tpu_custom_call.1} parent=11 // pred_fallthru
          _
      $region12: #{tpu_custom_call.1} parent=5 // pred_fallthru
        _
      %p476 = scmp.lt.s32.totalorder %s29, 2
      // Predicated region
      $region73: #{tpu_custom_call.1} parent=5 // pred_check
        %p477 = pneg %p476
      $region74: #{tpu_custom_call.1} parent=5 // pred_check_branch
        %479 = sbr.rel (%p477) target = $region76
      $region75: #{tpu_custom_call.1} parent=5 // pred_region
        // Predicated region
        $region77: #{tpu_custom_call.1} parent=75 // pred_check
          %p480 = pneg %p49
        $region78: #{tpu_custom_call.1} parent=75 // pred_check_branch
          %482 = sbr.rel (%p480) target = $region80
        $region79: #{tpu_custom_call.1} parent=75 // pred_region
          %p483 = scmp.lt.s32.totalorder %s29, 1
          %s484 = scalar_select %p483, %s29, 1
          %s485 = smul.addr %s484, 10
          %s486 = smul.addr %s485, 4
          %s487 = scalar_lea.vmem %s0, %s486
        $region80: #{tpu_custom_call.1} parent=75 // pred_fallthru
          _
      $region76: #{tpu_custom_call.1} parent=5 // pred_fallthru
        _
      %p488 = scmp.le.s32.totalorder 1, %s29
      %p489 = scmp.lt.s32.totalorder %s29, 3
      %p490 = pnand %p488, %p489
      %p491 = pneg %p490
      // Predicated region
      $region81: #{tpu_custom_call.1} parent=5 // pred_check
        _
      $region82: #{tpu_custom_call.1} parent=5 // pred_check_branch
        %493 = sbr.rel (%p490) target = $region84
      $region83: #{tpu_custom_call.1} parent=5 // pred_region
        %s494 = ssub.s32 %s29, 1
        // Predicated region
        $region85: #{tpu_custom_call.1} parent=83 // pred_check
          %p495 = pneg %p97
        $region86: #{tpu_custom_call.1} parent=83 // pred_check_branch
          %497 = sbr.rel (%p495) target = $region88
        $region87: #{tpu_custom_call.1} parent=83 // pred_region
          %498 = dma.done [#allocation6], 8192
        $region88: #{tpu_custom_call.1} parent=83 // pred_fallthru
          _
        // Predicated region
        $region89: #{tpu_custom_call.1} parent=83 // pred_check
          %p499 = pneg %p160
        $region90: #{tpu_custom_call.1} parent=83 // pred_check_branch
          %501 = sbr.rel (%p499) target = $region92
        $region91: #{tpu_custom_call.1} parent=83 // pred_region
          %502 = dma.done [#allocation9], 8192
        $region92: #{tpu_custom_call.1} parent=83 // pred_fallthru
          _
        %p503 = scmp.lt.s32.totalorder %s34, 1
        %s504 = scalar_select %p503, %s34, 1
        %s505 = smul.addr %s504, 10
        %s506 = smul.addr %s505, 4
        %s507 = scalar_lea.vmem %s0, %s506
        %p508 = pneg %p55
        %p509 = pneg %p52
        %p510 = pneg %p76
        %p511 = pneg %p73
        %p512 = pneg %p97
        %p513 = pneg %p94
        %p514 = pneg %p118
        %p515 = pneg %p115
        %p516 = pneg %p139
        %p517 = pneg %p136
        %p518 = pneg %p160
        %p519 = pneg %p157
        %p520 = pneg %p181
        %p521 = pneg %p178
        %p522 = pneg %p202
        %p523 = pneg %p199
        %p524 = pneg %p223
        %p525 = pneg %p220
        %p526 = pneg %p244
        %p527 = pneg %p241
        %p528 = pneg %p265
        %p529 = pneg %p262
        %p530 = pneg %p286
        %p531 = pneg %p283
        %p532 = pneg %p307
        %p533 = pneg %p304
        %p534 = pneg %p328
        %p535 = pneg %p325
        %p536 = pneg %p349
        %p537 = pneg %p346
        %p538 = pneg %p370
        %p539 = pneg %p367
        %p540 = pneg %p396
        %p541 = pneg %p393
        %s542 = sand.u32 %s383, 1
        %s543 = scalar_lea.sflag [#allocation7], %s542
        %s544 = sand.u32 %s383, 1
        %s545 = smul.addr %s544, 80
        %s546 = scalar_lea.vmem [#allocation10], %s545
        %p547 = scmp.lt.s32.totalorder %s34, 1
        %s548 = scalar_select %p547, %s34, 1
        %s549 = smul.addr %s548, 10
        %s550 = smul.addr %s549, 4
        %s551 = scalar_lea.vmem %s0, %s550
        %553 = vst [vmem:[#allocation2] sm:$0xff] 0
        %554 = vst [vmem:[#allocation2 + $0x30] sm:$0xff] 0
        %555 = vst [vmem:[#allocation3] sm:$0xff] 0
        %556 = vst [vmem:[#allocation3 + $0x30] sm:$0xff] 0
        %v557 = vld [vmem:[%s551] sm:$0xf]
        %v558 = vld [vmem:[%s551 + $0x4] sm:$0xf]
        %v559 = vld [vmem:[%s551 + $0x8] sm:$0xf]
        %v560 = vld [vmem:[%s551 + $0xc] sm:$0xf]
        %v561 = vld [vmem:[%s551 + $0x10] sm:$0xf]
        %v562 = vld [vmem:[%s551 + $0x14] sm:$0xf]
        %v563 = vld [vmem:[%s551 + $0x18] sm:$0xf]
        %v564 = vld [vmem:[%s551 + $0x1c] sm:$0xf]
        %v565 = vld [vmem:[%s551 + $0x20] sm:$0xf]
        %v566 = vld [vmem:[%s551 + $0x24] sm:$0xf]
        %v577 = vunpack.c.l.b16 %v557
        %v578 = vunpack.c.l.b16 %v558
        %v579 = vunpack.c.l.b16 %v559
        %v580 = vunpack.c.l.b16 %v560
        %v581 = vunpack.c.l.b16 %v561
        %v582 = vunpack.c.l.b16 %v562
        %v583 = vunpack.c.l.b16 %v563
        %v584 = vunpack.c.l.b16 %v564
        %v585 = vunpack.c.l.b16 %v565
        %v586 = vunpack.c.l.b16 %v566
        %v587 = vpack.c.b16 %v578, %v577
        %v588 = vpack.c.b16 %v580, %v579
        %v589 = vpack.c.b16 %v582, %v581
        %v590 = vpack.c.b16 %v584, %v583
        %v591 = vpack.c.b16 %v586, %v585
        %597 = vst [vmem:[#allocation2 + $0x8] sm:$0xff] %v587
        %598 = vst [vmem:[#allocation2 + $0x10] sm:$0xff] %v588
        %599 = vst [vmem:[#allocation2 + $0x18] sm:$0xff] %v589
        %600 = vst [vmem:[#allocation2 + $0x20] sm:$0xff] %v590
        %601 = vst [vmem:[#allocation2 + $0x28] sm:$0xff] %v591
        %v602 = vunpack.c.l.bf16 %v557
        %v603 = vunpack.c.l.bf16 %v558
        %v604 = vunpack.c.l.bf16 %v559
        %v605 = vunpack.c.l.bf16 %v560
        %v606 = vunpack.c.l.bf16 %v561
        %v607 = vunpack.c.l.bf16 %v562
        %v608 = vunpack.c.l.bf16 %v563
        %v609 = vunpack.c.l.bf16 %v564
        %v610 = vunpack.c.l.bf16 %v565
        %v611 = vunpack.c.l.bf16 %v566
        %v612 = vld [vmem:[%s1] sm:$0xff]
        %v613 = vld [vmem:[%s1 + $0x8] sm:$0xff]
        %v614 = vld [vmem:[%s1 + $0x10] sm:$0xff]
        %v615 = vld [vmem:[%s1 + $0x18] sm:$0xff]
        %v616 = vld [vmem:[%s1 + $0x20] sm:$0xff]
        %v617 = vld [vmem:[%s1 + $0x28] sm:$0xff]
        %v618 = vld [vmem:[%s1 + $0x30] sm:$0xff]
        %v619 = vld [vmem:[%s1 + $0x38] sm:$0xff]
        %v620 = vld [vmem:[%s1 + $0x40] sm:$0xff]
        %v621 = vld [vmem:[%s1 + $0x48] sm:$0xff]
        %v622 = vld [vmem:[#allocation2] sm:$0xfc]
        %v623 = vld [vmem:[#allocation2 + $0x8] sm:$0xff]
        %v624 = vld [vmem:[#allocation2 + $0x10] sm:$0xff]
        %v625 = vld [vmem:[#allocation2 + $0x18] sm:$0xff]
        %v626 = vld [vmem:[#allocation2 + $0x20] sm:$0xff]
        %v627 = vld [vmem:[#allocation2 + $0x28] sm:$0x7]
        %v628 = vld [vmem:[#allocation2] sm:$0xf8]
        %vm629 = vsmask.f32 7424
        %v631 = vshrl.u32 %v628, 16
        %v633 = vshll.u32 %v628, 16
        %v635 = vrot.slane %v633, 1
        %v636 = vor.u32 %v631, %v635
        %v638 = vshll.u32 %v623, 16
        %v640 = vrot.slane %v638, 1
        %v641 = vsel %vm629, %v636, %v640
        %v642 = vshrl.u32 %v623, 16
        %v644 = vor.u32 %v642, %v640
        %v646 = vshll.u32 %v624, 16
        %v648 = vrot.slane %v646, 1
        %v649 = vsel %vm629, %v644, %v648
        %v650 = vshrl.u32 %v624, 16
        %v652 = vor.u32 %v650, %v648
        %v654 = vshll.u32 %v625, 16
        %v656 = vrot.slane %v654, 1
        %v657 = vsel %vm629, %v652, %v656
        %v658 = vshrl.u32 %v625, 16
        %v660 = vor.u32 %v658, %v656
        %v662 = vshll.u32 %v626, 16
        %v664 = vrot.slane %v662, 1
        %v665 = vsel %vm629, %v660, %v664
        %v666 = vshrl.u32 %v626, 16
        %v668 = vor.u32 %v666, %v664
        %v670 = vshll.u32 %v627, 16
        %v672 = vrot.slane %v670, 1
        %v673 = vsel %vm629, %v668, %v672
        %v674 = vshrl.u32 %v627, 16
        %v676 = vor.u32 %v674, %v672
        %v677 = vld [vmem:[#allocation5] sm:$0xf]
        %v678 = vld [vmem:[#allocation5 + $0x4] sm:$0xf]
        %v679 = vld [vmem:[#allocation5 + $0x8] sm:$0xf]
        %v680 = vld [vmem:[#allocation5 + $0xc] sm:$0xf]
        %v681 = vld [vmem:[#allocation5 + $0x10] sm:$0xf]
        %v682 = vld [vmem:[#allocation5 + $0x14] sm:$0xf]
        %v683 = vld [vmem:[#allocation5 + $0x18] sm:$0xf]
        %v684 = vld [vmem:[#allocation5 + $0x1c] sm:$0xf]
        %v685 = vld [vmem:[#allocation5 + $0x20] sm:$0xf]
        %v686 = vld [vmem:[#allocation5 + $0x24] sm:$0xf]
        %v687 = vld [vmem:[#allocation5 + $0x28] sm:$0xf]
        %v688 = vld [vmem:[#allocation5 + $0x2c] sm:$0xf]
        %v689 = vld [vmem:[#allocation5 + $0x30] sm:$0xf]
        %v690 = vld [vmem:[#allocation5 + $0x34] sm:$0xf]
        %v691 = vld [vmem:[#allocation5 + $0x38] sm:$0xf]
        %v692 = vld [vmem:[#allocation5 + $0x3c] sm:$0xf]
        %v693 = vld [vmem:[#allocation5 + $0x40] sm:$0xf]
        %v694 = vld [vmem:[#allocation5 + $0x44] sm:$0xf]
        %v695 = vld [vmem:[#allocation5 + $0x48] sm:$0xf]
        %v696 = vld [vmem:[#allocation5 + $0x4c] sm:$0xf]
        %v697 = vld [vmem:[#allocation5 + $0x50] sm:$0xf]
        %v698 = vld [vmem:[#allocation5 + $0x54] sm:$0xf]
        %v699 = vld [vmem:[#allocation5 + $0x58] sm:$0xf]
        %v700 = vld [vmem:[#allocation5 + $0x5c] sm:$0xf]
        %v701 = vld [vmem:[#allocation5 + $0x60] sm:$0xf]
        %v702 = vld [vmem:[#allocation5 + $0x64] sm:$0xf]
        %v703 = vld [vmem:[#allocation5 + $0x68] sm:$0xf]
        %v704 = vld [vmem:[#allocation5 + $0x6c] sm:$0xf]
        %v705 = vld [vmem:[#allocation5 + $0x70] sm:$0xf]
        %v706 = vld [vmem:[#allocation5 + $0x74] sm:$0xf]
        %v707 = vld [vmem:[#allocation5 + $0x78] sm:$0xf]
        %v708 = vld [vmem:[#allocation5 + $0x7c] sm:$0xf]
        %v709 = vld [vmem:[#allocation2 + $0x28] sm:$0xf]
        %v710 = vld [vmem:[#allocation2] sm:$0x80]
        %v711 = vld [vmem:[#allocation2 + $0x28] sm:$0xff]
        %vm718 = vcmask 1043456
        %v719 = vrot.slane %v710, 4
        %v720 = vrot.slane %v623, 4
        %v721 = vsel %vm718, %v719, %v720
        %v722 = vrot.slane %v624, 4
        %v723 = vsel %vm718, %v720, %v722
        %v724 = vrot.slane %v625, 4
        %v725 = vsel %vm718, %v722, %v724
        %v726 = vrot.slane %v626, 4
        %v727 = vsel %vm718, %v724, %v726
        %v728 = vrot.slane %v711, 4
        %v729 = vsel %vm718, %v726, %v728
        %s730 = scalar_lea.vmem [#allocation5], 128
        %v731 = vld [vmem:[%s730] sm:$0xf]
        %v732 = vld [vmem:[%s730 + $0x4] sm:$0xf]
        %v733 = vld [vmem:[%s730 + $0x8] sm:$0xf]
        %v734 = vld [vmem:[%s730 + $0xc] sm:$0xf]
        %v735 = vld [vmem:[%s730 + $0x10] sm:$0xf]
        %v736 = vld [vmem:[%s730 + $0x14] sm:$0xf]
        %v737 = vld [vmem:[%s730 + $0x18] sm:$0xf]
        %v738 = vld [vmem:[%s730 + $0x1c] sm:$0xf]
        %v739 = vld [vmem:[%s730 + $0x20] sm:$0xf]
        %v740 = vld [vmem:[%s730 + $0x24] sm:$0xf]
        %v741 = vld [vmem:[%s730 + $0x28] sm:$0xf]
        %v742 = vld [vmem:[%s730 + $0x2c] sm:$0xf]
        %v743 = vld [vmem:[%s730 + $0x30] sm:$0xf]
        %v744 = vld [vmem:[%s730 + $0x34] sm:$0xf]
        %v745 = vld [vmem:[%s730 + $0x38] sm:$0xf]
        %v746 = vld [vmem:[%s730 + $0x3c] sm:$0xf]
        %v747 = vld [vmem:[%s730 + $0x40] sm:$0xf]
        %v748 = vld [vmem:[%s730 + $0x44] sm:$0xf]
        %v749 = vld [vmem:[%s730 + $0x48] sm:$0xf]
        %v750 = vld [vmem:[%s730 + $0x4c] sm:$0xf]
        %v751 = vld [vmem:[%s730 + $0x50] sm:$0xf]
        %v752 = vld [vmem:[%s730 + $0x54] sm:$0xf]
        %v753 = vld [vmem:[%s730 + $0x58] sm:$0xf]
        %v754 = vld [vmem:[%s730 + $0x5c] sm:$0xf]
        %v755 = vld [vmem:[%s730 + $0x60] sm:$0xf]
        %v756 = vld [vmem:[%s730 + $0x64] sm:$0xf]
        %v757 = vld [vmem:[%s730 + $0x68] sm:$0xf]
        %v758 = vld [vmem:[%s730 + $0x6c] sm:$0xf]
        %v759 = vld [vmem:[%s730 + $0x70] sm:$0xf]
        %v760 = vld [vmem:[%s730 + $0x74] sm:$0xf]
        %v761 = vld [vmem:[%s730 + $0x78] sm:$0xf]
        %v762 = vld [vmem:[%s730 + $0x7c] sm:$0xf]
        %vm763 = vsmask.f32 4352
        %v764 = vrot.slane %v631, 3
        %v765 = vrot.slane %v633, 4
        %v766 = vor.u32 %v764, %v765
        %v767 = vrot.slane %v642, 3
        %v768 = vrot.slane %v638, 4
        %v769 = vor.u32 %v767, %v768
        %v770 = vsel %vm763, %v766, %v769
        %v772 = vshrl.u32 %v721, 16
        %v774 = vrot.slane %v772, 3
        %v775 = vshll.u32 %v721, 16
        %v777 = vrot.slane %v775, 4
        %v778 = vor.u32 %v774, %v777
        %v780 = vshrl.u32 %v723, 16
        %v782 = vrot.slane %v780, 3
        %v783 = vshll.u32 %v723, 16
        %v785 = vrot.slane %v783, 4
        %v786 = vor.u32 %v782, %v785
        %v787 = vsel %vm763, %v778, %v786
        %v788 = vrot.slane %v650, 3
        %v789 = vrot.slane %v646, 4
        %v790 = vor.u32 %v788, %v789
        %v791 = vsel %vm763, %v769, %v790
        %v793 = vshrl.u32 %v725, 16
        %v795 = vrot.slane %v793, 3
        %v796 = vshll.u32 %v725, 16
        %v798 = vrot.slane %v796, 4
        %v799 = vor.u32 %v795, %v798
        %v800 = vsel %vm763, %v786, %v799
        %v801 = vrot.slane %v658, 3
        %v802 = vrot.slane %v654, 4
        %v803 = vor.u32 %v801, %v802
        %v804 = vsel %vm763, %v790, %v803
        %v806 = vshrl.u32 %v727, 16
        %v808 = vrot.slane %v806, 3
        %v809 = vshll.u32 %v727, 16
        %v811 = vrot.slane %v809, 4
        %v812 = vor.u32 %v808, %v811
        %v813 = vsel %vm763, %v799, %v812
        %v814 = vrot.slane %v666, 3
        %v815 = vrot.slane %v662, 4
        %v816 = vor.u32 %v814, %v815
        %v817 = vsel %vm763, %v803, %v816
        %v819 = vshrl.u32 %v729, 16
        %v821 = vrot.slane %v819, 3
        %v822 = vshll.u32 %v729, 16
        %v824 = vrot.slane %v822, 4
        %v825 = vor.u32 %v821, %v824
        %v826 = vsel %vm763, %v812, %v825
        %v828 = vshrl.u32 %v709, 16
        %v830 = vrot.slane %v828, 3
        %v831 = vshll.u32 %v709, 16
        %v833 = vrot.slane %v831, 4
        %v834 = vor.u32 %v830, %v833
        %v835 = vsel %vm763, %v816, %v834
        %v837 = vshrl.u32 %v728, 16
        %v839 = vrot.slane %v837, 3
        %v840 = vshll.u32 %v728, 16
        %v842 = vrot.slane %v840, 4
        %v843 = vor.u32 %v839, %v842
        %v844 = vsel %vm763, %v825, %v843
        %v887 = vunpack.c.l.b16 %v731
        %v888 = vunpack.c.l.b16 %v732
        %v889 = vunpack.c.l.b16 %v733
        %v890 = vunpack.c.l.b16 %v734
        %v891 = vunpack.c.l.b16 %v735
        %v892 = vunpack.c.l.b16 %v736
        %v893 = vunpack.c.l.b16 %v737
        %v894 = vunpack.c.l.b16 %v738
        %v895 = vunpack.c.l.b16 %v739
        %v896 = vunpack.c.l.b16 %v740
        %v897 = vunpack.c.l.b16 %v741
        %v898 = vunpack.c.l.b16 %v742
        %v899 = vunpack.c.l.b16 %v743
        %v900 = vunpack.c.l.b16 %v744
        %v901 = vunpack.c.l.b16 %v745
        %v902 = vunpack.c.l.b16 %v746
        %v903 = vunpack.c.l.b16 %v747
        %v904 = vunpack.c.l.b16 %v748
        %v905 = vunpack.c.l.b16 %v749
        %v906 = vunpack.c.l.b16 %v750
        %v907 = vunpack.c.l.b16 %v751
        %v908 = vunpack.c.l.b16 %v752
        %v909 = vunpack.c.l.b16 %v753
        %v910 = vunpack.c.l.b16 %v754
        %v911 = vunpack.c.l.b16 %v755
        %v912 = vunpack.c.l.b16 %v756
        %v913 = vunpack.c.l.b16 %v757
        %v914 = vunpack.c.l.b16 %v758
        %v915 = vunpack.c.l.b16 %v759
        %v916 = vunpack.c.l.b16 %v760
        %v917 = vunpack.c.l.b16 %v761
        %v918 = vunpack.c.l.b16 %v762
        %v919 = vpack.c.b16 %v888, %v887
        %v920 = vpack.c.b16 %v890, %v889
        %v921 = vpack.c.b16 %v892, %v891
        %v922 = vpack.c.b16 %v894, %v893
        %v923 = vpack.c.b16 %v896, %v895
        %v924 = vpack.c.b16 %v898, %v897
        %v925 = vpack.c.b16 %v900, %v899
        %v926 = vpack.c.b16 %v902, %v901
        %v927 = vpack.c.b16 %v904, %v903
        %v928 = vpack.c.b16 %v906, %v905
        %v929 = vpack.c.b16 %v908, %v907
        %v930 = vpack.c.b16 %v910, %v909
        %v931 = vpack.c.b16 %v912, %v911
        %v932 = vpack.c.b16 %v914, %v913
        %v933 = vpack.c.b16 %v916, %v915
        %v934 = vpack.c.b16 %v918, %v917
        %951 = vmatprep.subr.bf16.mxu0 0
        %952 = vmatpush1.bf16.msra.mxu0 %v919
        %953 = vmatprep.subr.bf16.mxu0 0
        %954 = vmatpush1.bf16.msra.mxu0 %v920
        %955 = vmatprep.subr.bf16.mxu0 0
        %956 = vmatpush1.bf16.msra.mxu0 %v921
        %957 = vmatprep.subr.bf16.mxu0 0
        %958 = vmatpush1.bf16.msra.mxu0 %v922
        %959 = vmatprep.subr.bf16.mxu0 0
        %960 = vmatpush1.bf16.msra.mxu0 %v923
        %961 = vmatprep.subr.bf16.mxu0 0
        %962 = vmatpush1.bf16.msra.mxu0 %v924
        %963 = vmatprep.subr.bf16.mxu0 0
        %964 = vmatpush1.bf16.msra.mxu0 %v925
        %965 = vmatprep.subr.bf16.mxu0 0
        %966 = vmatpush1.bf16.msra.mxu0 %v926
        %967 = vmatprep.subr.bf16.mxu0 0
        %968 = vmatpush1.bf16.msra.mxu0 %v927
        %969 = vmatprep.subr.bf16.mxu0 0
        %970 = vmatpush1.bf16.msra.mxu0 %v928
        %971 = vmatprep.subr.bf16.mxu0 0
        %972 = vmatpush1.bf16.msra.mxu0 %v929
        %973 = vmatprep.subr.bf16.mxu0 0
        %974 = vmatpush1.bf16.msra.mxu0 %v930
        %975 = vmatprep.subr.bf16.mxu0 0
        %976 = vmatpush1.bf16.msra.mxu0 %v931
        %977 = vmatprep.subr.bf16.mxu0 0
        %978 = vmatpush1.bf16.msra.mxu0 %v932
        %979 = vmatprep.subr.bf16.mxu0 0
        %980 = vmatpush1.bf16.msra.mxu0 %v933
        %981 = vmatprep.subr.bf16.mxu0 0
        %982 = vmatpush1.bf16.msra.mxu0 %v934
        %983 = vmatprep.mubr.bf16.mxu0 %v787
        %984 = vmatmul.mubr.bf16.gmra.mrb[0].mxu0 %v770
        %v985 = vpop.f32.mrb[0].mxu0
        %v986 = vadd.f32 0.0, %v985
        %v987 = vpop.f32.mrb[0].mxu0
        %v988 = vpop.f32.mrb[0].mxu0
        %v989 = vadd.f32 0.0, %v988
        %v990 = vpop.f32.mrb[0].mxu0
        %991 = vmatprep.mubr.bf16.mxu0 %v800
        %992 = vmatmul.mubr.bf16.gmra.mrb[0].mxu0 %v791
        %v993 = vpop.f32.mrb[0].mxu0
        %v994 = vadd.f32 0.0, %v993
        %v995 = vpop.f32.mrb[0].mxu0
        %v996 = vpop.f32.mrb[0].mxu0
        %v997 = vadd.f32 0.0, %v996
        %v998 = vpop.f32.mrb[0].mxu0
        %999 = vmatprep.mubr.bf16.mxu0 %v813
        %1000 = vmatmul.mubr.bf16.gmra.mrb[0].mxu0 %v804
        %v1001 = vpop.f32.mrb[0].mxu0
        %v1002 = vadd.f32 0.0, %v1001
        %v1003 = vpop.f32.mrb[0].mxu0
        %v1004 = vpop.f32.mrb[0].mxu0
        %v1005 = vadd.f32 0.0, %v1004
        %v1006 = vpop.f32.mrb[0].mxu0
        %1007 = vmatprep.mubr.bf16.mxu0 %v826
        %1008 = vmatmul.mubr.bf16.gmra.mrb[0].mxu0 %v817
        %v1009 = vpop.f32.mrb[0].mxu0
        %v1010 = vadd.f32 0.0, %v1009
        %v1011 = vpop.f32.mrb[0].mxu0
        %v1012 = vpop.f32.mrb[0].mxu0
        %v1013 = vadd.f32 0.0, %v1012
        %v1014 = vpop.f32.mrb[0].mxu0
        %1015 = vmatprep.mubr.bf16.mxu0 %v844
        %1016 = vmatmul.mubr.bf16.gmra.mrb[0].mxu0 %v835
        %v1017 = vpop.f32.mrb[0].mxu0
        %v1018 = vadd.f32 0.0, %v1017
        %v1019 = vpop.f32.mrb[0].mxu0
        %v1020 = vpop.f32.mrb[0].mxu0
        %v1021 = vadd.f32 0.0, %v1020
        %v1022 = vpop.f32.mrb[0].mxu0
        %1023 = vdwg.mxu0
        %vm1024 = vsmask.f32 5376
        %v1026 = vshrl.u32 %v622, 16
        %v1028 = vrot.slane %v1026, 2
        %v1029 = vshll.u32 %v622, 16
        %v1031 = vrot.slane %v1029, 3
        %v1032 = vor.u32 %v1028, %v1031
        %v1033 = vrot.slane %v642, 2
        %v1034 = vrot.slane %v638, 3
        %v1035 = vor.u32 %v1033, %v1034
        %v1036 = vsel %vm1024, %v1032, %v1035
        %v1038 = vshrl.u32 %v641, 16
        %v1040 = vrot.slane %v1038, 2
        %v1041 = vshll.u32 %v641, 16
        %v1043 = vrot.slane %v1041, 3
        %v1044 = vor.u32 %v1040, %v1043
        %v1046 = vshrl.u32 %v649, 16
        %v1048 = vrot.slane %v1046, 2
        %v1049 = vshll.u32 %v649, 16
        %v1051 = vrot.slane %v1049, 3
        %v1052 = vor.u32 %v1048, %v1051
        %v1053 = vsel %vm1024, %v1044, %v1052
        %v1054 = vrot.slane %v650, 2
        %v1055 = vrot.slane %v646, 3
        %v1056 = vor.u32 %v1054, %v1055
        %v1057 = vsel %vm1024, %v1035, %v1056
        %v1059 = vshrl.u32 %v657, 16
        %v1061 = vrot.slane %v1059, 2
        %v1062 = vshll.u32 %v657, 16
        %v1064 = vrot.slane %v1062, 3
        %v1065 = vor.u32 %v1061, %v1064
        %v1066 = vsel %vm1024, %v1052, %v1065
        %v1067 = vrot.slane %v658, 2
        %v1068 = vrot.slane %v654, 3
        %v1069 = vor.u32 %v1067, %v1068
        %v1070 = vsel %vm1024, %v1056, %v1069
        %v1072 = vshrl.u32 %v665, 16
        %v1074 = vrot.slane %v1072, 2
        %v1075 = vshll.u32 %v665, 16
        %v1077 = vrot.slane %v1075, 3
        %v1078 = vor.u32 %v1074, %v1077
        %v1079 = vsel %vm1024, %v1065, %v1078
        %v1080 = vrot.slane %v666, 2
        %v1081 = vrot.slane %v662, 3
        %v1082 = vor.u32 %v1080, %v1081
        %v1083 = vsel %vm1024, %v1069, %v1082
        %v1085 = vshrl.u32 %v673, 16
        %v1087 = vrot.slane %v1085, 2
        %v1088 = vshll.u32 %v673, 16
        %v1090 = vrot.slane %v1088, 3
        %v1091 = vor.u32 %v1087, %v1090
        %v1092 = vsel %vm1024, %v1078, %v1091
        %v1093 = vrot.slane %v674, 2
        %v1094 = vrot.slane %v670, 3
        %v1095 = vor.u32 %v1093, %v1094
        %v1096 = vsel %vm1024, %v1082, %v1095
        %v1098 = vshrl.u32 %v676, 16
        %v1100 = vrot.slane %v1098, 2
        %v1101 = vshll.u32 %v676, 16
        %v1103 = vrot.slane %v1101, 3
        %v1104 = vor.u32 %v1100, %v1103
        %v1105 = vsel %vm1024, %v1091, %v1104
        %v1148 = vunpack.c.l.b16 %v677
        %v1149 = vunpack.c.l.b16 %v678
        %v1150 = vunpack.c.l.b16 %v679
        %v1151 = vunpack.c.l.b16 %v680
        %v1152 = vunpack.c.l.b16 %v681
        %v1153 = vunpack.c.l.b16 %v682
        %v1154 = vunpack.c.l.b16 %v683
        %v1155 = vunpack.c.l.b16 %v684
        %v1156 = vunpack.c.l.b16 %v685
        %v1157 = vunpack.c.l.b16 %v686
        %v1158 = vunpack.c.l.b16 %v687
        %v1159 = vunpack.c.l.b16 %v688
        %v1160 = vunpack.c.l.b16 %v689
        %v1161 = vunpack.c.l.b16 %v690
        %v1162 = vunpack.c.l.b16 %v691
        %v1163 = vunpack.c.l.b16 %v692
        %v1164 = vunpack.c.l.b16 %v693
        %v1165 = vunpack.c.l.b16 %v694
        %v1166 = vunpack.c.l.b16 %v695
        %v1167 = vunpack.c.l.b16 %v696
        %v1168 = vunpack.c.l.b16 %v697
        %v1169 = vunpack.c.l.b16 %v698
        %v1170 = vunpack.c.l.b16 %v699
        %v1171 = vunpack.c.l.b16 %v700
        %v1172 = vunpack.c.l.b16 %v701
        %v1173 = vunpack.c.l.b16 %v702
        %v1174 = vunpack.c.l.b16 %v703
        %v1175 = vunpack.c.l.b16 %v704
        %v1176 = vunpack.c.l.b16 %v705
        %v1177 = vunpack.c.l.b16 %v706
        %v1178 = vunpack.c.l.b16 %v707
        %v1179 = vunpack.c.l.b16 %v708
        %v1180 = vpack.c.b16 %v1149, %v1148
        %v1181 = vpack.c.b16 %v1151, %v1150
        %v1182 = vpack.c.b16 %v1153, %v1152
        %v1183 = vpack.c.b16 %v1155, %v1154
        %v1184 = vpack.c.b16 %v1157, %v1156
        %v1185 = vpack.c.b16 %v1159, %v1158
        %v1186 = vpack.c.b16 %v1161, %v1160
        %v1187 = vpack.c.b16 %v1163, %v1162
        %v1188 = vpack.c.b16 %v1165, %v1164
        %v1189 = vpack.c.b16 %v1167, %v1166
        %v1190 = vpack.c.b16 %v1169, %v1168
        %v1191 = vpack.c.b16 %v1171, %v1170
        %v1192 = vpack.c.b16 %v1173, %v1172
        %v1193 = vpack.c.b16 %v1175, %v1174
        %v1194 = vpack.c.b16 %v1177, %v1176
        %v1195 = vpack.c.b16 %v1179, %v1178
        %1212 = vmatprep.subr.bf16.mxu0 0
        %1213 = vmatpush1.bf16.msra.mxu0 %v1180
        %1214 = vmatprep.subr.bf16.mxu0 0
        %1215 = vmatpush1.bf16.msra.mxu0 %v1181
        %1216 = vmatprep.subr.bf16.mxu0 0
        %1217 = vmatpush1.bf16.msra.mxu0 %v1182
        %1218 = vmatprep.subr.bf16.mxu0 0
        %1219 = vmatpush1.bf16.msra.mxu0 %v1183
        %1220 = vmatprep.subr.bf16.mxu0 0
        %1221 = vmatpush1.bf16.msra.mxu0 %v1184
        %1222 = vmatprep.subr.bf16.mxu0 0
        %1223 = vmatpush1.bf16.msra.mxu0 %v1185
        %1224 = vmatprep.subr.bf16.mxu0 0
        %1225 = vmatpush1.bf16.msra.mxu0 %v1186
        %1226 = vmatprep.subr.bf16.mxu0 0
        %1227 = vmatpush1.bf16.msra.mxu0 %v1187
        %1228 = vmatprep.subr.bf16.mxu0 0
        %1229 = vmatpush1.bf16.msra.mxu0 %v1188
        %1230 = vmatprep.subr.bf16.mxu0 0
        %1231 = vmatpush1.bf16.msra.mxu0 %v1189
        %1232 = vmatprep.subr.bf16.mxu0 0
        %1233 = vmatpush1.bf16.msra.mxu0 %v1190
        %1234 = vmatprep.subr.bf16.mxu0 0
        %1235 = vmatpush1.bf16.msra.mxu0 %v1191
        %1236 = vmatprep.subr.bf16.mxu0 0
        %1237 = vmatpush1.bf16.msra.mxu0 %v1192
        %1238 = vmatprep.subr.bf16.mxu0 0
        %1239 = vmatpush1.bf16.msra.mxu0 %v1193
        %1240 = vmatprep.subr.bf16.mxu0 0
        %1241 = vmatpush1.bf16.msra.mxu0 %v1194
        %1242 = vmatprep.subr.bf16.mxu0 0
        %1243 = vmatpush1.bf16.msra.mxu0 %v1195
        %1244 = vmatprep.mubr.bf16.mxu0 %v1053
        %1245 = vmatmul.mubr.bf16.gmra.mrb[0].mxu0 %v1036
        %v1246 = vpop.f32.mrb[0].mxu0
        %v1247 = vadd.f32 %v986, %v1246
        %v1248 = vpop.f32.mrb[0].mxu0
        %v1249 = vpop.f32.mrb[0].mxu0
        %v1250 = vadd.f32 %v989, %v1249
        %v1251 = vpop.f32.mrb[0].mxu0
        %1252 = vmatprep.mubr.bf16.mxu0 %v1066
        %1253 = vmatmul.mubr.bf16.gmra.mrb[0].mxu0 %v1057
        %v1254 = vpop.f32.mrb[0].mxu0
        %v1255 = vadd.f32 %v994, %v1254
        %v1256 = vpop.f32.mrb[0].mxu0
        %v1257 = vpop.f32.mrb[0].mxu0
        %v1258 = vadd.f32 %v997, %v1257
        %v1259 = vpop.f32.mrb[0].mxu0
        %1260 = vmatprep.mubr.bf16.mxu0 %v1079
        %1261 = vmatmul.mubr.bf16.gmra.mrb[0].mxu0 %v1070
        %v1262 = vpop.f32.mrb[0].mxu0
        %v1263 = vadd.f32 %v1002, %v1262
        %v1264 = vpop.f32.mrb[0].mxu0
        %v1265 = vpop.f32.mrb[0].mxu0
        %v1266 = vadd.f32 %v1005, %v1265
        %v1267 = vpop.f32.mrb[0].mxu0
        %1268 = vmatprep.mubr.bf16.mxu0 %v1092
        %1269 = vmatmul.mubr.bf16.gmra.mrb[0].mxu0 %v1083
        %v1270 = vpop.f32.mrb[0].mxu0
        %v1271 = vadd.f32 %v1010, %v1270
        %v1272 = vpop.f32.mrb[0].mxu0
        %v1273 = vpop.f32.mrb[0].mxu0
        %v1274 = vadd.f32 %v1013, %v1273
        %v1275 = vpop.f32.mrb[0].mxu0
        %1276 = vmatprep.mubr.bf16.mxu0 %v1105
        %1277 = vmatmul.mubr.bf16.gmra.mrb[0].mxu0 %v1096
        %v1278 = vpop.f32.mrb[0].mxu0
        %v1279 = vadd.f32 %v1018, %v1278
        %v1280 = vpop.f32.mrb[0].mxu0
        %v1281 = vpop.f32.mrb[0].mxu0
        %v1282 = vadd.f32 %v1021, %v1281
        %v1283 = vpop.f32.mrb[0].mxu0
        %1284 = vdwg.mxu0
        %v1285 = vld [vmem:[#allocation2 + $0x8] sm:$0xff]
        %v1286 = vld [vmem:[#allocation2 + $0x10] sm:$0xff]
        %v1287 = vld [vmem:[#allocation2 + $0x18] sm:$0xff]
        %v1288 = vld [vmem:[#allocation2 + $0x20] sm:$0xff]
        %v1289 = vld [vmem:[#allocation2 + $0x28] sm:$0xff]
        %v1290 = vld [vmem:[#allocation2 + $0x30] sm:$0x1]
        %v1292 = vshrl.u32 %v1285, 16
        %v1294 = vshll.u32 %v1285, 16
        %v1296 = vrot.slane %v1294, 1
        %v1297 = vor.u32 %v1292, %v1296
        %v1299 = vshll.u32 %v1286, 16
        %v1301 = vrot.slane %v1299, 1
        %v1302 = vsel %vm629, %v1297, %v1301
        %v1303 = vshrl.u32 %v1286, 16
        %v1305 = vor.u32 %v1303, %v1301
        %v1307 = vshll.u32 %v1287, 16
        %v1309 = vrot.slane %v1307, 1
        %v1310 = vsel %vm629, %v1305, %v1309
        %v1311 = vshrl.u32 %v1287, 16
        %v1313 = vor.u32 %v1311, %v1309
        %v1315 = vshll.u32 %v1288, 16
        %v1317 = vrot.slane %v1315, 1
        %v1318 = vsel %vm629, %v1313, %v1317
        %v1319 = vshrl.u32 %v1288, 16
        %v1321 = vor.u32 %v1319, %v1317
        %v1323 = vshll.u32 %v1289, 16
        %v1325 = vrot.slane %v1323, 1
        %v1326 = vsel %vm629, %v1321, %v1325
        %v1327 = vshrl.u32 %v1289, 16
        %v1329 = vor.u32 %v1327, %v1325
        %v1331 = vshll.u32 %v1290, 16
        %v1333 = vrot.slane %v1331, 1
        %v1334 = vsel %vm629, %v1329, %v1333
        %s1340 = scalar_lea.vmem [#allocation5], 256
        %v1341 = vld [vmem:[%s1340] sm:$0xf]
        %v1342 = vld [vmem:[%s1340 + $0x4] sm:$0xf]
        %v1343 = vld [vmem:[%s1340 + $0x8] sm:$0xf]
        %v1344 = vld [vmem:[%s1340 + $0xc] sm:$0xf]
        %v1345 = vld [vmem:[%s1340 + $0x10] sm:$0xf]
        %v1346 = vld [vmem:[%s1340 + $0x14] sm:$0xf]
        %v1347 = vld [vmem:[%s1340 + $0x18] sm:$0xf]
        %v1348 = vld [vmem:[%s1340 + $0x1c] sm:$0xf]
        %v1349 = vld [vmem:[%s1340 + $0x20] sm:$0xf]
        %v1350 = vld [vmem:[%s1340 + $0x24] sm:$0xf]
        %v1351 = vld [vmem:[%s1340 + $0x28] sm:$0xf]
        %v1352 = vld [vmem:[%s1340 + $0x2c] sm:$0xf]
        %v1353 = vld [vmem:[%s1340 + $0x30] sm:$0xf]
        %v1354 = vld [vmem:[%s1340 + $0x34] sm:$0xf]
        %v1355 = vld [vmem:[%s1340 + $0x38] sm:$0xf]
        %v1356 = vld [vmem:[%s1340 + $0x3c] sm:$0xf]
        %v1357 = vld [vmem:[%s1340 + $0x40] sm:$0xf]
        %v1358 = vld [vmem:[%s1340 + $0x44] sm:$0xf]
        %v1359 = vld [vmem:[%s1340 + $0x48] sm:$0xf]
        %v1360 = vld [vmem:[%s1340 + $0x4c] sm:$0xf]
        %v1361 = vld [vmem:[%s1340 + $0x50] sm:$0xf]
        %v1362 = vld [vmem:[%s1340 + $0x54] sm:$0xf]
        %v1363 = vld [vmem:[%s1340 + $0x58] sm:$0xf]
        %v1364 = vld [vmem:[%s1340 + $0x5c] sm:$0xf]
        %v1365 = vld [vmem:[%s1340 + $0x60] sm:$0xf]
        %v1366 = vld [vmem:[%s1340 + $0x64] sm:$0xf]
        %v1367 = vld [vmem:[%s1340 + $0x68] sm:$0xf]
        %v1368 = vld [vmem:[%s1340 + $0x6c] sm:$0xf]
        %v1369 = vld [vmem:[%s1340 + $0x70] sm:$0xf]
        %v1370 = vld [vmem:[%s1340 + $0x74] sm:$0xf]
        %v1371 = vld [vmem:[%s1340 + $0x78] sm:$0xf]
        %v1372 = vld [vmem:[%s1340 + $0x7c] sm:$0xf]
        %v1405 = vunpack.c.l.b16 %v1341
        %v1406 = vunpack.c.l.b16 %v1342
        %v1407 = vunpack.c.l.b16 %v1343
        %v1408 = vunpack.c.l.b16 %v1344
        %v1409 = vunpack.c.l.b16 %v1345
        %v1410 = vunpack.c.l.b16 %v1346
        %v1411 = vunpack.c.l.b16 %v1347
        %v1412 = vunpack.c.l.b16 %v1348
        %v1413 = vunpack.c.l.b16 %v1349
        %v1414 = vunpack.c.l.b16 %v1350
        %v1415 = vunpack.c.l.b16 %v1351
        %v1416 = vunpack.c.l.b16 %v1352
        %v1417 = vunpack.c.l.b16 %v1353
        %v1418 = vunpack.c.l.b16 %v1354
        %v1419 = vunpack.c.l.b16 %v1355
        %v1420 = vunpack.c.l.b16 %v1356
        %v1421 = vunpack.c.l.b16 %v1357
        %v1422 = vunpack.c.l.b16 %v1358
        %v1423 = vunpack.c.l.b16 %v1359
        %v1424 = vunpack.c.l.b16 %v1360
        %v1425 = vunpack.c.l.b16 %v1361
        %v1426 = vunpack.c.l.b16 %v1362
        %v1427 = vunpack.c.l.b16 %v1363
        %v1428 = vunpack.c.l.b16 %v1364
        %v1429 = vunpack.c.l.b16 %v1365
        %v1430 = vunpack.c.l.b16 %v1366
        %v1431 = vunpack.c.l.b16 %v1367
        %v1432 = vunpack.c.l.b16 %v1368
        %v1433 = vunpack.c.l.b16 %v1369
        %v1434 = vunpack.c.l.b16 %v1370
        %v1435 = vunpack.c.l.b16 %v1371
        %v1436 = vunpack.c.l.b16 %v1372
        %v1437 = vpack.c.b16 %v1406, %v1405
        %v1438 = vpack.c.b16 %v1408, %v1407
        %v1439 = vpack.c.b16 %v1410, %v1409
        %v1440 = vpack.c.b16 %v1412, %v1411
        %v1441 = vpack.c.b16 %v1414, %v1413
        %v1442 = vpack.c.b16 %v1416, %v1415
        %v1443 = vpack.c.b16 %v1418, %v1417
        %v1444 = vpack.c.b16 %v1420, %v1419
        %v1445 = vpack.c.b16 %v1422, %v1421
        %v1446 = vpack.c.b16 %v1424, %v1423
        %v1447 = vpack.c.b16 %v1426, %v1425
        %v1448 = vpack.c.b16 %v1428, %v1427
        %v1449 = vpack.c.b16 %v1430, %v1429
        %v1450 = vpack.c.b16 %v1432, %v1431
        %v1451 = vpack.c.b16 %v1434, %v1433
        %v1452 = vpack.c.b16 %v1436, %v1435
        %1469 = vmatprep.subr.bf16.mxu0 0
        %1470 = vmatpush1.bf16.msra.mxu0 %v1437
        %1471 = vmatprep.subr.bf16.mxu0 0
        %1472 = vmatpush1.bf16.msra.mxu0 %v1438
        %1473 = vmatprep.subr.bf16.mxu0 0
        %1474 = vmatpush1.bf16.msra.mxu0 %v1439
        %1475 = vmatprep.subr.bf16.mxu0 0
        %1476 = vmatpush1.bf16.msra.mxu0 %v1440
        %1477 = vmatprep.subr.bf16.mxu0 0
        %1478 = vmatpush1.bf16.msra.mxu0 %v1441
        %1479 = vmatprep.subr.bf16.mxu0 0
        %1480 = vmatpush1.bf16.msra.mxu0 %v1442
        %1481 = vmatprep.subr.bf16.mxu0 0
        %1482 = vmatpush1.bf16.msra.mxu0 %v1443
        %1483 = vmatprep.subr.bf16.mxu0 0
        %1484 = vmatpush1.bf16.msra.mxu0 %v1444
        %1485 = vmatprep.subr.bf16.mxu0 0
        %1486 = vmatpush1.bf16.msra.mxu0 %v1445
        %1487 = vmatprep.subr.bf16.mxu0 0
        %1488 = vmatpush1.bf16.msra.mxu0 %v1446
        %1489 = vmatprep.subr.bf16.mxu0 0
        %1490 = vmatpush1.bf16.msra.mxu0 %v1447
        %1491 = vmatprep.subr.bf16.mxu0 0
        %1492 = vmatpush1.bf16.msra.mxu0 %v1448
        %1493 = vmatprep.subr.bf16.mxu0 0
        %1494 = vmatpush1.bf16.msra.mxu0 %v1449
        %1495 = vmatprep.subr.bf16.mxu0 0
        %1496 = vmatpush1.bf16.msra.mxu0 %v1450
        %1497 = vmatprep.subr.bf16.mxu0 0
        %1498 = vmatpush1.bf16.msra.mxu0 %v1451
        %1499 = vmatprep.subr.bf16.mxu0 0
        %1500 = vmatpush1.bf16.msra.mxu0 %v1452
        %1501 = vmatprep.mubr.bf16.mxu0 %v1302
        %1502 = vmatmul.mubr.bf16.gmra.mrb[0].mxu0 %v623
        %v1503 = vpop.f32.mrb[0].mxu0
        %v1504 = vadd.f32 0.0, %v1503
        %v1505 = vpop.f32.mrb[0].mxu0
        %v1506 = vpop.f32.mrb[0].mxu0
        %v1507 = vadd.f32 0.0, %v1506
        %v1508 = vpop.f32.mrb[0].mxu0
        %1509 = vmatprep.mubr.bf16.mxu0 %v1310
        %1510 = vmatmul.mubr.bf16.gmra.mrb[0].mxu0 %v624
        %v1511 = vpop.f32.mrb[0].mxu0
        %v1512 = vadd.f32 0.0, %v1511
        %v1513 = vpop.f32.mrb[0].mxu0
        %v1514 = vpop.f32.mrb[0].mxu0
        %v1515 = vadd.f32 0.0, %v1514
        %v1516 = vpop.f32.mrb[0].mxu0
        %1517 = vmatprep.mubr.bf16.mxu0 %v1318
        %1518 = vmatmul.mubr.bf16.gmra.mrb[0].mxu0 %v625
        %v1519 = vpop.f32.mrb[0].mxu0
        %v1520 = vadd.f32 0.0, %v1519
        %v1521 = vpop.f32.mrb[0].mxu0
        %v1522 = vpop.f32.mrb[0].mxu0
        %v1523 = vadd.f32 0.0, %v1522
        %v1524 = vpop.f32.mrb[0].mxu0
        %1525 = vmatprep.mubr.bf16.mxu0 %v1326
        %1526 = vmatmul.mubr.bf16.gmra.mrb[0].mxu0 %v626
        %v1527 = vpop.f32.mrb[0].mxu0
        %v1528 = vadd.f32 0.0, %v1527
        %v1529 = vpop.f32.mrb[0].mxu0
        %v1530 = vpop.f32.mrb[0].mxu0
        %v1531 = vadd.f32 0.0, %v1530
        %v1532 = vpop.f32.mrb[0].mxu0
        %1533 = vmatprep.mubr.bf16.mxu0 %v1334
        %1534 = vmatmul.mubr.bf16.gmra.mrb[0].mxu0 %v711
        %v1535 = vpop.f32.mrb[0].mxu0
        %v1536 = vadd.f32 0.0, %v1535
        %v1537 = vpop.f32.mrb[0].mxu0
        %v1538 = vpop.f32.mrb[0].mxu0
        %v1539 = vadd.f32 0.0, %v1538
        %v1540 = vpop.f32.mrb[0].mxu0
        %1541 = vdwg.mxu0
        %v1542 = vadd.f32 %v1247, %v1504
        %v1543 = vadd.f32 %v1250, %v1507
        %v1544 = vadd.f32 %v1255, %v1512
        %v1545 = vadd.f32 %v1258, %v1515
        %v1546 = vadd.f32 %v1263, %v1520
        %v1547 = vadd.f32 %v1266, %v1523
        %v1548 = vadd.f32 %v1271, %v1528
        %v1549 = vadd.f32 %v1274, %v1531
        %v1550 = vadd.f32 %v1279, %v1536
        %v1551 = vadd.f32 %v1282, %v1539
        %v1552 = vld [vmem:[#allocation2 + $0x8] sm:$0xf0]
        %v1553 = vld [vmem:[#allocation2 + $0x30] sm:$0x1f]
        %v1554 = vld [vmem:[#allocation2 + $0x8] sm:$0xe0]
        %v1556 = vshrl.u32 %v1554, 16
        %v1558 = vshll.u32 %v1554, 16
        %v1560 = vrot.slane %v1558, 1
        %v1561 = vor.u32 %v1556, %v1560
        %v1562 = vsel %vm629, %v1561, %v1301
        %v1564 = vshll.u32 %v1553, 16
        %v1566 = vrot.slane %v1564, 1
        %v1567 = vsel %vm629, %v1329, %v1566
        %v1568 = vshrl.u32 %v1553, 16
        %v1570 = vor.u32 %v1568, %v1566
        %s1571 = scalar_lea.vmem [#allocation5], 384
        %v1572 = vld [vmem:[%s1571] sm:$0xf]
        %v1573 = vld [vmem:[%s1571 + $0x4] sm:$0xf]
        %v1574 = vld [vmem:[%s1571 + $0x8] sm:$0xf]
        %v1575 = vld [vmem:[%s1571 + $0xc] sm:$0xf]
        %v1576 = vld [vmem:[%s1571 + $0x10] sm:$0xf]
        %v1577 = vld [vmem:[%s1571 + $0x14] sm:$0xf]
        %v1578 = vld [vmem:[%s1571 + $0x18] sm:$0xf]
        %v1579 = vld [vmem:[%s1571 + $0x1c] sm:$0xf]
        %v1580 = vld [vmem:[%s1571 + $0x20] sm:$0xf]
        %v1581 = vld [vmem:[%s1571 + $0x24] sm:$0xf]
        %v1582 = vld [vmem:[%s1571 + $0x28] sm:$0xf]
        %v1583 = vld [vmem:[%s1571 + $0x2c] sm:$0xf]
        %v1584 = vld [vmem:[%s1571 + $0x30] sm:$0xf]
        %v1585 = vld [vmem:[%s1571 + $0x34] sm:$0xf]
        %v1586 = vld [vmem:[%s1571 + $0x38] sm:$0xf]
        %v1587 = vld [vmem:[%s1571 + $0x3c] sm:$0xf]
        %v1588 = vld [vmem:[%s1571 + $0x40] sm:$0xf]
        %v1589 = vld [vmem:[%s1571 + $0x44] sm:$0xf]
        %v1590 = vld [vmem:[%s1571 + $0x48] sm:$0xf]
        %v1591 = vld [vmem:[%s1571 + $0x4c] sm:$0xf]
        %v1592 = vld [vmem:[%s1571 + $0x50] sm:$0xf]
        %v1593 = vld [vmem:[%s1571 + $0x54] sm:$0xf]
        %v1594 = vld [vmem:[%s1571 + $0x58] sm:$0xf]
        %v1595 = vld [vmem:[%s1571 + $0x5c] sm:$0xf]
        %v1596 = vld [vmem:[%s1571 + $0x60] sm:$0xf]
        %v1597 = vld [vmem:[%s1571 + $0x64] sm:$0xf]
        %v1598 = vld [vmem:[%s1571 + $0x68] sm:$0xf]
        %v1599 = vld [vmem:[%s1571 + $0x6c] sm:$0xf]
        %v1600 = vld [vmem:[%s1571 + $0x70] sm:$0xf]
        %v1601 = vld [vmem:[%s1571 + $0x74] sm:$0xf]
        %v1602 = vld [vmem:[%s1571 + $0x78] sm:$0xf]
        %v1603 = vld [vmem:[%s1571 + $0x7c] sm:$0xf]
        %vm1604 = vsmask.f32 3328
        %v1606 = vshrl.u32 %v1552, 16
        %v1608 = vrot.slane %v1606, 4
        %v1609 = vshll.u32 %v1552, 16
        %v1611 = vrot.slane %v1609, 5
        %v1612 = vor.u32 %v1608, %v1611
        %v1613 = vrot.slane %v1303, 4
        %v1614 = vrot.slane %v1299, 5
        %v1615 = vor.u32 %v1613, %v1614
        %v1616 = vsel %vm1604, %v1612, %v1615
        %v1618 = vshrl.u32 %v1562, 16
        %v1620 = vrot.slane %v1618, 4
        %v1621 = vshll.u32 %v1562, 16
        %v1623 = vrot.slane %v1621, 5
        %v1624 = vor.u32 %v1620, %v1623
        %v1626 = vshrl.u32 %v1310, 16
        %v1628 = vrot.slane %v1626, 4
        %v1629 = vshll.u32 %v1310, 16
        %v1631 = vrot.slane %v1629, 5
        %v1632 = vor.u32 %v1628, %v1631
        %v1633 = vsel %vm1604, %v1624, %v1632
        %v1634 = vrot.slane %v1311, 4
        %v1635 = vrot.slane %v1307, 5
        %v1636 = vor.u32 %v1634, %v1635
        %v1637 = vsel %vm1604, %v1615, %v1636
        %v1639 = vshrl.u32 %v1318, 16
        %v1641 = vrot.slane %v1639, 4
        %v1642 = vshll.u32 %v1318, 16
        %v1644 = vrot.slane %v1642, 5
        %v1645 = vor.u32 %v1641, %v1644
        %v1646 = vsel %vm1604, %v1632, %v1645
        %v1647 = vrot.slane %v1319, 4
        %v1648 = vrot.slane %v1315, 5
        %v1649 = vor.u32 %v1647, %v1648
        %v1650 = vsel %vm1604, %v1636, %v1649
        %v1652 = vshrl.u32 %v1326, 16
        %v1654 = vrot.slane %v1652, 4
        %v1655 = vshll.u32 %v1326, 16
        %v1657 = vrot.slane %v1655, 5
        %v1658 = vor.u32 %v1654, %v1657
        %v1659 = vsel %vm1604, %v1645, %v1658
        %v1660 = vrot.slane %v1327, 4
        %v1661 = vrot.slane %v1323, 5
        %v1662 = vor.u32 %v1660, %v1661
        %v1663 = vsel %vm1604, %v1649, %v1662
        %v1665 = vshrl.u32 %v1567, 16
        %v1667 = vrot.slane %v1665, 4
        %v1668 = vshll.u32 %v1567, 16
        %v1670 = vrot.slane %v1668, 5
        %v1671 = vor.u32 %v1667, %v1670
        %v1672 = vsel %vm1604, %v1658, %v1671
        %v1673 = vrot.slane %v1568, 4
        %v1674 = vrot.slane %v1564, 5
        %v1675 = vor.u32 %v1673, %v1674
        %v1676 = vsel %vm1604, %v1662, %v1675
        %v1678 = vshrl.u32 %v1570, 16
        %v1680 = vrot.slane %v1678, 4
        %v1681 = vshll.u32 %v1570, 16
        %v1683 = vrot.slane %v1681, 5
        %v1684 = vor.u32 %v1680, %v1683
        %v1685 = vsel %vm1604, %v1671, %v1684
        %v1728 = vunpack.c.l.b16 %v1572
        %v1729 = vunpack.c.l.b16 %v1573
        %v1730 = vunpack.c.l.b16 %v1574
        %v1731 = vunpack.c.l.b16 %v1575
        %v1732 = vunpack.c.l.b16 %v1576
        %v1733 = vunpack.c.l.b16 %v1577
        %v1734 = vunpack.c.l.b16 %v1578
        %v1735 = vunpack.c.l.b16 %v1579
        %v1736 = vunpack.c.l.b16 %v1580
        %v1737 = vunpack.c.l.b16 %v1581
        %v1738 = vunpack.c.l.b16 %v1582
        %v1739 = vunpack.c.l.b16 %v1583
        %v1740 = vunpack.c.l.b16 %v1584
        %v1741 = vunpack.c.l.b16 %v1585
        %v1742 = vunpack.c.l.b16 %v1586
        %v1743 = vunpack.c.l.b16 %v1587
        %v1744 = vunpack.c.l.b16 %v1588
        %v1745 = vunpack.c.l.b16 %v1589
        %v1746 = vunpack.c.l.b16 %v1590
        %v1747 = vunpack.c.l.b16 %v1591
        %v1748 = vunpack.c.l.b16 %v1592
        %v1749 = vunpack.c.l.b16 %v1593
        %v1750 = vunpack.c.l.b16 %v1594
        %v1751 = vunpack.c.l.b16 %v1595
        %v1752 = vunpack.c.l.b16 %v1596
        %v1753 = vunpack.c.l.b16 %v1597
        %v1754 = vunpack.c.l.b16 %v1598
        %v1755 = vunpack.c.l.b16 %v1599
        %v1756 = vunpack.c.l.b16 %v1600
        %v1757 = vunpack.c.l.b16 %v1601
        %v1758 = vunpack.c.l.b16 %v1602
        %v1759 = vunpack.c.l.b16 %v1603
        %v1760 = vpack.c.b16 %v1729, %v1728
        %v1761 = vpack.c.b16 %v1731, %v1730
        %v1762 = vpack.c.b16 %v1733, %v1732
        %v1763 = vpack.c.b16 %v1735, %v1734
        %v1764 = vpack.c.b16 %v1737, %v1736
        %v1765 = vpack.c.b16 %v1739, %v1738
        %v1766 = vpack.c.b16 %v1741, %v1740
        %v1767 = vpack.c.b16 %v1743, %v1742
        %v1768 = vpack.c.b16 %v1745, %v1744
        %v1769 = vpack.c.b16 %v1747, %v1746
        %v1770 = vpack.c.b16 %v1749, %v1748
        %v1771 = vpack.c.b16 %v1751, %v1750
        %v1772 = vpack.c.b16 %v1753, %v1752
        %v1773 = vpack.c.b16 %v1755, %v1754
        %v1774 = vpack.c.b16 %v1757, %v1756
        %v1775 = vpack.c.b16 %v1759, %v1758
        %1792 = vmatprep.subr.bf16.mxu0 0
        %1793 = vmatpush1.bf16.msra.mxu0 %v1760
        %1794 = vmatprep.subr.bf16.mxu0 0
        %1795 = vmatpush1.bf16.msra.mxu0 %v1761
        %1796 = vmatprep.subr.bf16.mxu0 0
        %1797 = vmatpush1.bf16.msra.mxu0 %v1762
        %1798 = vmatprep.subr.bf16.mxu0 0
        %1799 = vmatpush1.bf16.msra.mxu0 %v1763
        %1800 = vmatprep.subr.bf16.mxu0 0
        %1801 = vmatpush1.bf16.msra.mxu0 %v1764
        %1802 = vmatprep.subr.bf16.mxu0 0
        %1803 = vmatpush1.bf16.msra.mxu0 %v1765
        %1804 = vmatprep.subr.bf16.mxu0 0
        %1805 = vmatpush1.bf16.msra.mxu0 %v1766
        %1806 = vmatprep.subr.bf16.mxu0 0
        %1807 = vmatpush1.bf16.msra.mxu0 %v1767
        %1808 = vmatprep.subr.bf16.mxu0 0
        %1809 = vmatpush1.bf16.msra.mxu0 %v1768
        %1810 = vmatprep.subr.bf16.mxu0 0
        %1811 = vmatpush1.bf16.msra.mxu0 %v1769
        %1812 = vmatprep.subr.bf16.mxu0 0
        %1813 = vmatpush1.bf16.msra.mxu0 %v1770
        %1814 = vmatprep.subr.bf16.mxu0 0
        %1815 = vmatpush1.bf16.msra.mxu0 %v1771
        %1816 = vmatprep.subr.bf16.mxu0 0
        %1817 = vmatpush1.bf16.msra.mxu0 %v1772
        %1818 = vmatprep.subr.bf16.mxu0 0
        %1819 = vmatpush1.bf16.msra.mxu0 %v1773
        %1820 = vmatprep.subr.bf16.mxu0 0
        %1821 = vmatpush1.bf16.msra.mxu0 %v1774
        %1822 = vmatprep.subr.bf16.mxu0 0
        %1823 = vmatpush1.bf16.msra.mxu0 %v1775
        %1824 = vmatprep.mubr.bf16.mxu0 %v1633
        %1825 = vmatmul.mubr.bf16.gmra.mrb[0].mxu0 %v1616
        %v1826 = vpop.f32.mrb[0].mxu0
        %v1827 = vadd.f32 0.0, %v1826
        %v1828 = vpop.f32.mrb[0].mxu0
        %v1829 = vpop.f32.mrb[0].mxu0
        %v1830 = vadd.f32 0.0, %v1829
        %v1831 = vpop.f32.mrb[0].mxu0
        %1832 = vmatprep.mubr.bf16.mxu0 %v1646
        %1833 = vmatmul.mubr.bf16.gmra.mrb[0].mxu0 %v1637
        %v1834 = vpop.f32.mrb[0].mxu0
        %v1835 = vadd.f32 0.0, %v1834
        %v1836 = vpop.f32.mrb[0].mxu0
        %v1837 = vpop.f32.mrb[0].mxu0
        %v1838 = vadd.f32 0.0, %v1837
        %v1839 = vpop.f32.mrb[0].mxu0
        %1840 = vmatprep.mubr.bf16.mxu0 %v1659
        %1841 = vmatmul.mubr.bf16.gmra.mrb[0].mxu0 %v1650
        %v1842 = vpop.f32.mrb[0].mxu0
        %v1843 = vadd.f32 0.0, %v1842
        %v1844 = vpop.f32.mrb[0].mxu0
        %v1845 = vpop.f32.mrb[0].mxu0
        %v1846 = vadd.f32 0.0, %v1845
        %v1847 = vpop.f32.mrb[0].mxu0
        %1848 = vmatprep.mubr.bf16.mxu0 %v1672
        %1849 = vmatmul.mubr.bf16.gmra.mrb[0].mxu0 %v1663
        %v1850 = vpop.f32.mrb[0].mxu0
        %v1851 = vadd.f32 0.0, %v1850
        %v1852 = vpop.f32.mrb[0].mxu0
        %v1853 = vpop.f32.mrb[0].mxu0
        %v1854 = vadd.f32 0.0, %v1853
        %v1855 = vpop.f32.mrb[0].mxu0
        %1856 = vmatprep.mubr.bf16.mxu0 %v1685
        %1857 = vmatmul.mubr.bf16.gmra.mrb[0].mxu0 %v1676
        %v1858 = vpop.f32.mrb[0].mxu0
        %v1859 = vadd.f32 0.0, %v1858
        %v1860 = vpop.f32.mrb[0].mxu0
        %v1861 = vpop.f32.mrb[0].mxu0
        %v1862 = vadd.f32 0.0, %v1861
        %v1863 = vpop.f32.mrb[0].mxu0
        %1864 = vdwg.mxu0
        %v1865 = vadd.f32 %v1542, %v1827
        %v1866 = vadd.f32 %v1543, %v1830
        %v1867 = vadd.f32 %v1544, %v1835
        %v1868 = vadd.f32 %v1545, %v1838
        %v1869 = vadd.f32 %v1546, %v1843
        %v1870 = vadd.f32 %v1547, %v1846
        %v1871 = vadd.f32 %v1548, %v1851
        %v1872 = vadd.f32 %v1549, %v1854
        %v1873 = vadd.f32 %v1550, %v1859
        %v1874 = vadd.f32 %v1551, %v1862
        %v1875 = vld [vmem:[#allocation2 + $0x30] sm:$0x3f]
        %v1876 = vld [vmem:[%s3] sm:$0xf]
        %v1877 = vld [vmem:[%s3 + $0x4] sm:$0xf]
        %v1878 = vld [vmem:[%s3 + $0x8] sm:$0xf]
        %v1879 = vld [vmem:[%s3 + $0xc] sm:$0xf]
        %v1880 = vld [vmem:[%s3 + $0x10] sm:$0xf]
        %v1881 = vld [vmem:[%s3 + $0x14] sm:$0xf]
        %v1882 = vld [vmem:[%s3 + $0x18] sm:$0xf]
        %v1883 = vld [vmem:[%s3 + $0x1c] sm:$0xf]
        %v1884 = vld [vmem:[%s3 + $0x20] sm:$0xf]
        %v1885 = vld [vmem:[%s3 + $0x24] sm:$0xf]
        %v1886 = vld [vmem:[%s3 + $0x28] sm:$0xf]
        %v1887 = vld [vmem:[%s3 + $0x2c] sm:$0xf]
        %v1888 = vld [vmem:[%s3 + $0x30] sm:$0xf]
        %v1889 = vld [vmem:[%s3 + $0x34] sm:$0xf]
        %v1890 = vld [vmem:[%s3 + $0x38] sm:$0xf]
        %v1891 = vld [vmem:[%s3 + $0x3c] sm:$0xf]
        %vm1892 = vsmask.f32 2304
        %v1893 = vrot.slane %v1556, 5
        %v1894 = vrot.slane %v1558, 6
        %v1895 = vor.u32 %v1893, %v1894
        %v1896 = vrot.slane %v1303, 5
        %v1897 = vrot.slane %v1299, 6
        %v1898 = vor.u32 %v1896, %v1897
        %v1899 = vsel %vm1892, %v1895, %v1898
        %v1900 = vrot.slane %v1311, 5
        %v1901 = vrot.slane %v1307, 6
        %v1902 = vor.u32 %v1900, %v1901
        %v1903 = vsel %vm1892, %v1898, %v1902
        %v1904 = vrot.slane %v1319, 5
        %v1905 = vrot.slane %v1315, 6
        %v1906 = vor.u32 %v1904, %v1905
        %v1907 = vsel %vm1892, %v1902, %v1906
        %v1908 = vrot.slane %v1327, 5
        %v1909 = vrot.slane %v1323, 6
        %v1910 = vor.u32 %v1908, %v1909
        %v1911 = vsel %vm1892, %v1906, %v1910
        %v1913 = vshrl.u32 %v1875, 16
        %v1915 = vrot.slane %v1913, 5
        %v1916 = vshll.u32 %v1875, 16
        %v1918 = vrot.slane %v1916, 6
        %v1919 = vor.u32 %v1915, %v1918
        %v1920 = vsel %vm1892, %v1910, %v1919
        %v1942 = vunpack.c.l.b16 %v1876
        %v1943 = vunpack.c.l.b16 %v1877
        %v1944 = vunpack.c.l.b16 %v1878
        %v1945 = vunpack.c.l.b16 %v1879
        %v1946 = vunpack.c.l.b16 %v1880
        %v1947 = vunpack.c.l.b16 %v1881
        %v1948 = vunpack.c.l.b16 %v1882
        %v1949 = vunpack.c.l.b16 %v1883
        %v1950 = vunpack.c.l.b16 %v1884
        %v1951 = vunpack.c.l.b16 %v1885
        %v1952 = vunpack.c.l.b16 %v1886
        %v1953 = vunpack.c.l.b16 %v1887
        %v1954 = vunpack.c.l.b16 %v1888
        %v1955 = vunpack.c.l.b16 %v1889
        %v1956 = vunpack.c.l.b16 %v1890
        %v1957 = vunpack.c.l.b16 %v1891
        %v1958 = vpack.c.b16 %v1943, %v1942
        %v1959 = vpack.c.b16 %v1945, %v1944
        %v1960 = vpack.c.b16 %v1947, %v1946
        %v1961 = vpack.c.b16 %v1949, %v1948
        %v1962 = vpack.c.b16 %v1951, %v1950
        %v1963 = vpack.c.b16 %v1953, %v1952
        %v1964 = vpack.c.b16 %v1955, %v1954
        %v1965 = vpack.c.b16 %v1957, %v1956
        %1974 = vmatprep.subr.bf16.mxu0 0
        %1975 = vmatpush1.bf16.msra.mxu0 %v1958
        %1976 = vmatprep.subr.bf16.mxu0 0
        %1977 = vmatpush1.bf16.msra.mxu0 %v1959
        %1978 = vmatprep.subr.bf16.mxu0 0
        %1979 = vmatpush1.bf16.msra.mxu0 %v1960
        %1980 = vmatprep.subr.bf16.mxu0 0
        %1981 = vmatpush1.bf16.msra.mxu0 %v1961
        %1982 = vmatprep.subr.bf16.mxu0 0
        %1983 = vmatpush1.bf16.msra.mxu0 %v1962
        %1984 = vmatprep.subr.bf16.mxu0 0
        %1985 = vmatpush1.bf16.msra.mxu0 %v1963
        %1986 = vmatprep.subr.bf16.mxu0 0
        %1987 = vmatpush1.bf16.msra.mxu0 %v1964
        %1988 = vmatprep.subr.bf16.mxu0 0
        %1989 = vmatpush1.bf16.msra.mxu0 %v1965
        %1990 = vmatprep.subr.bf16.mxu0 0
        %1991 = vmatpush1.bf16.msra.mxu0 0
        %1992 = vmatprep.subr.bf16.mxu0 0
        %1993 = vmatpush1.bf16.msra.mxu0 0
        %1994 = vmatprep.subr.bf16.mxu0 0
        %1995 = vmatpush1.bf16.msra.mxu0 0
        %1996 = vmatprep.subr.bf16.mxu0 0
        %1997 = vmatpush1.bf16.msra.mxu0 0
        %1998 = vmatprep.subr.bf16.mxu0 0
        %1999 = vmatpush1.bf16.msra.mxu0 0
        %2000 = vmatprep.subr.bf16.mxu0 0
        %2001 = vmatpush1.bf16.msra.mxu0 0
        %2002 = vmatprep.subr.bf16.mxu0 0
        %2003 = vmatpush1.bf16.msra.mxu0 0
        %2004 = vmatprep.subr.bf16.mxu0 0
        %2005 = vmatpush1.bf16.msra.mxu0 0
        %2006 = vmatprep.mubr.bf16.mxu0 0
        %2007 = vmatmul.mubr.bf16.gmra.mrb[0].mxu0 %v1899
        %v2008 = vpop.f32.mrb[0].mxu0
        %v2009 = vadd.f32 0.0, %v2008
        %v2010 = vpop.f32.mrb[0].mxu0
        %v2011 = vpop.f32.mrb[0].mxu0
        %v2012 = vadd.f32 0.0, %v2011
        %v2013 = vpop.f32.mrb[0].mxu0
        %2014 = vmatprep.mubr.bf16.mxu0 0
        %2015 = vmatmul.mubr.bf16.gmra.mrb[0].mxu0 %v1903
        %v2016 = vpop.f32.mrb[0].mxu0
        %v2017 = vadd.f32 0.0, %v2016
        %v2018 = vpop.f32.mrb[0].mxu0
        %v2019 = vpop.f32.mrb[0].mxu0
        %v2020 = vadd.f32 0.0, %v2019
        %v2021 = vpop.f32.mrb[0].mxu0
        %2022 = vmatprep.mubr.bf16.mxu0 0
        %2023 = vmatmul.mubr.bf16.gmra.mrb[0].mxu0 %v1907
        %v2024 = vpop.f32.mrb[0].mxu0
        %v2025 = vadd.f32 0.0, %v2024
        %v2026 = vpop.f32.mrb[0].mxu0
        %v2027 = vpop.f32.mrb[0].mxu0
        %v2028 = vadd.f32 0.0, %v2027
        %v2029 = vpop.f32.mrb[0].mxu0
        %2030 = vmatprep.mubr.bf16.mxu0 0
        %2031 = vmatmul.mubr.bf16.gmra.mrb[0].mxu0 %v1911
        %v2032 = vpop.f32.mrb[0].mxu0
        %v2033 = vadd.f32 0.0, %v2032
        %v2034 = vpop.f32.mrb[0].mxu0
        %v2035 = vpop.f32.mrb[0].mxu0
        %v2036 = vadd.f32 0.0, %v2035
        %v2037 = vpop.f32.mrb[0].mxu0
        %2038 = vmatprep.mubr.bf16.mxu0 0
        %2039 = vmatmul.mubr.bf16.gmra.mrb[0].mxu0 %v1920
        %v2040 = vpop.f32.mrb[0].mxu0
        %v2041 = vadd.f32 0.0, %v2040
        %v2042 = vpop.f32.mrb[0].mxu0
        %v2043 = vpop.f32.mrb[0].mxu0
        %v2044 = vadd.f32 0.0, %v2043
        %v2045 = vpop.f32.mrb[0].mxu0
        %2046 = vdwg.mxu0
        %v2047 = vadd.f32 %v1865, %v2009
        %v2048 = vadd.f32 %v1866, %v2012
        %v2049 = vadd.f32 %v1867, %v2017
        %v2050 = vadd.f32 %v1868, %v2020
        %v2051 = vadd.f32 %v1869, %v2025
        %v2052 = vadd.f32 %v1870, %v2028
        %v2053 = vadd.f32 %v1871, %v2033
        %v2054 = vadd.f32 %v1872, %v2036
        %v2055 = vadd.f32 %v1873, %v2041
        %v2056 = vadd.f32 %v1874, %v2044
        %v2057 = vld [vmem:[%s4] sm:$0x1]
        %v2059 = vlaneseq
        %v2060 = vshrl.u32 %v2059, 7
        %v2061 = vsub.s32 0, %v2060
        %v2062 = vrot.slane %v2057, %v2061
        %v2064 = vadd.f32 %v2047, %v2062
        %v2065 = vadd.f32 %v2048, %v2062
        %v2066 = vadd.f32 %v2049, %v2062
        %v2067 = vadd.f32 %v2050, %v2062
        %v2068 = vadd.f32 %v2051, %v2062
        %v2069 = vadd.f32 %v2052, %v2062
        %v2070 = vadd.f32 %v2053, %v2062
        %v2071 = vadd.f32 %v2054, %v2062
        %v2072 = vadd.f32 %v2055, %v2062
        %v2073 = vadd.f32 %v2056, %v2062
        %v2074 = vmax.f32 %v2064, 0.0
        %v2075 = vmax.f32 %v2065, 0.0
        %v2076 = vmax.f32 %v2066, 0.0
        %v2077 = vmax.f32 %v2067, 0.0
        %v2078 = vmax.f32 %v2068, 0.0
        %v2079 = vmax.f32 %v2069, 0.0
        %v2080 = vmax.f32 %v2070, 0.0
        %v2081 = vmax.f32 %v2071, 0.0
        %v2082 = vmax.f32 %v2072, 0.0
        %v2083 = vmax.f32 %v2073, 0.0
        %v2084 = vadd.f32 %v2074, %v602
        %v2085 = vadd.f32 %v2075, %v603
        %v2086 = vadd.f32 %v2076, %v604
        %v2087 = vadd.f32 %v2077, %v605
        %v2088 = vadd.f32 %v2078, %v606
        %v2089 = vadd.f32 %v2079, %v607
        %v2090 = vadd.f32 %v2080, %v608
        %v2091 = vadd.f32 %v2081, %v609
        %v2092 = vadd.f32 %v2082, %v610
        %v2093 = vadd.f32 %v2083, %v611
        %2095 = vset.pattern.permute.xlu0 0
        %2096 = vperm.xlu0 %2095, %v612
        %v2097 = vpop.permute.xlu0 %2096
        %2100 = vset.pattern.permute.xlu0 0
        %2101 = vperm.xlu0 %2100, %v613
        %v2102 = vpop.permute.xlu0 %2101
        %2105 = vset.pattern.permute.xlu0 0
        %2106 = vperm.xlu0 %2105, %v614
        %v2107 = vpop.permute.xlu0 %2106
        %2110 = vset.pattern.permute.xlu0 0
        %2111 = vperm.xlu0 %2110, %v615
        %v2112 = vpop.permute.xlu0 %2111
        %2115 = vset.pattern.permute.xlu0 0
        %2116 = vperm.xlu0 %2115, %v616
        %v2117 = vpop.permute.xlu0 %2116
        %2120 = vset.pattern.permute.xlu0 0
        %2121 = vperm.xlu0 %2120, %v617
        %v2122 = vpop.permute.xlu0 %2121
        %2125 = vset.pattern.permute.xlu0 0
        %2126 = vperm.xlu0 %2125, %v618
        %v2127 = vpop.permute.xlu0 %2126
        %2130 = vset.pattern.permute.xlu0 0
        %2131 = vperm.xlu0 %2130, %v619
        %v2132 = vpop.permute.xlu0 %2131
        %2135 = vset.pattern.permute.xlu0 0
        %2136 = vperm.xlu0 %2135, %v620
        %v2137 = vpop.permute.xlu0 %2136
        %2140 = vset.pattern.permute.xlu0 0
        %2141 = vperm.xlu0 %2140, %v621
        %v2142 = vpop.permute.xlu0 %2141
        %v2144 = vmul.f32 %v2084, %v2097
        %v2145 = vmul.f32 %v2085, %v2102
        %v2146 = vmul.f32 %v2086, %v2107
        %v2147 = vmul.f32 %v2087, %v2112
        %v2148 = vmul.f32 %v2088, %v2117
        %v2149 = vmul.f32 %v2089, %v2122
        %v2150 = vmul.f32 %v2090, %v2127
        %v2151 = vmul.f32 %v2091, %v2132
        %v2152 = vmul.f32 %v2092, %v2137
        %v2153 = vmul.f32 %v2093, %v2142
        %v2154 = vpack.c.bf16 %v2145, %v2144
        %v2155 = vpack.c.bf16 %v2147, %v2146
        %v2156 = vpack.c.bf16 %v2149, %v2148
        %v2157 = vpack.c.bf16 %v2151, %v2150
        %v2158 = vpack.c.bf16 %v2153, %v2152
        %2159 = vst [vmem:[#allocation3 + $0x8] sm:$0xff] %v2154
        %2160 = vst [vmem:[#allocation3 + $0x10] sm:$0xff] %v2155
        %2161 = vst [vmem:[#allocation3 + $0x18] sm:$0xff] %v2156
        %2162 = vst [vmem:[#allocation3 + $0x20] sm:$0xff] %v2157
        %2163 = vst [vmem:[#allocation3 + $0x28] sm:$0xff] %v2158
        %v2164 = vld [vmem:[#allocation3] sm:$0xfc]
        %v2165 = vld [vmem:[#allocation3 + $0x8] sm:$0xff]
        %v2166 = vld [vmem:[#allocation3 + $0x10] sm:$0xff]
        %v2167 = vld [vmem:[#allocation3 + $0x18] sm:$0xff]
        %v2168 = vld [vmem:[#allocation3 + $0x20] sm:$0xff]
        %v2169 = vld [vmem:[#allocation3 + $0x28] sm:$0x7]
        %v2170 = vld [vmem:[#allocation3] sm:$0xf8]
        %v2172 = vshrl.u32 %v2170, 16
        %v2174 = vshll.u32 %v2170, 16
        %v2176 = vrot.slane %v2174, 1
        %v2177 = vor.u32 %v2172, %v2176
        %v2179 = vshll.u32 %v2165, 16
        %v2181 = vrot.slane %v2179, 1
        %v2182 = vsel %vm629, %v2177, %v2181
        %v2183 = vshrl.u32 %v2165, 16
        %v2185 = vor.u32 %v2183, %v2181
        %v2187 = vshll.u32 %v2166, 16
        %v2189 = vrot.slane %v2187, 1
        %v2190 = vsel %vm629, %v2185, %v2189
        %v2191 = vshrl.u32 %v2166, 16
        %v2193 = vor.u32 %v2191, %v2189
        %v2195 = vshll.u32 %v2167, 16
        %v2197 = vrot.slane %v2195, 1
        %v2198 = vsel %vm629, %v2193, %v2197
        %v2199 = vshrl.u32 %v2167, 16
        %v2201 = vor.u32 %v2199, %v2197
        %v2203 = vshll.u32 %v2168, 16
        %v2205 = vrot.slane %v2203, 1
        %v2206 = vsel %vm629, %v2201, %v2205
        %v2207 = vshrl.u32 %v2168, 16
        %v2209 = vor.u32 %v2207, %v2205
        %v2211 = vshll.u32 %v2169, 16
        %v2213 = vrot.slane %v2211, 1
        %v2214 = vsel %vm629, %v2209, %v2213
        %v2215 = vshrl.u32 %v2169, 16
        %v2217 = vor.u32 %v2215, %v2213
        %v2218 = vld [vmem:[#allocation8] sm:$0xf]
        %v2219 = vld [vmem:[#allocation8 + $0x4] sm:$0xf]
        %v2220 = vld [vmem:[#allocation8 + $0x8] sm:$0xf]
        %v2221 = vld [vmem:[#allocation8 + $0xc] sm:$0xf]
        %v2222 = vld [vmem:[#allocation8 + $0x10] sm:$0xf]
        %v2223 = vld [vmem:[#allocation8 + $0x14] sm:$0xf]
        %v2224 = vld [vmem:[#allocation8 + $0x18] sm:$0xf]
        %v2225 = vld [vmem:[#allocation8 + $0x1c] sm:$0xf]
        %v2226 = vld [vmem:[#allocation8 + $0x20] sm:$0xf]
        %v2227 = vld [vmem:[#allocation8 + $0x24] sm:$0xf]
        %v2228 = vld [vmem:[#allocation8 + $0x28] sm:$0xf]
        %v2229 = vld [vmem:[#allocation8 + $0x2c] sm:$0xf]
        %v2230 = vld [vmem:[#allocation8 + $0x30] sm:$0xf]
        %v2231 = vld [vmem:[#allocation8 + $0x34] sm:$0xf]
        %v2232 = vld [vmem:[#allocation8 + $0x38] sm:$0xf]
        %v2233 = vld [vmem:[#allocation8 + $0x3c] sm:$0xf]
        %v2234 = vld [vmem:[#allocation8 + $0x40] sm:$0xf]
        %v2235 = vld [vmem:[#allocation8 + $0x44] sm:$0xf]
        %v2236 = vld [vmem:[#allocation8 + $0x48] sm:$0xf]
        %v2237 = vld [vmem:[#allocation8 + $0x4c] sm:$0xf]
        %v2238 = vld [vmem:[#allocation8 + $0x50] sm:$0xf]
        %v2239 = vld [vmem:[#allocation8 + $0x54] sm:$0xf]
        %v2240 = vld [vmem:[#allocation8 + $0x58] sm:$0xf]
        %v2241 = vld [vmem:[#allocation8 + $0x5c] sm:$0xf]
        %v2242 = vld [vmem:[#allocation8 + $0x60] sm:$0xf]
        %v2243 = vld [vmem:[#allocation8 + $0x64] sm:$0xf]
        %v2244 = vld [vmem:[#allocation8 + $0x68] sm:$0xf]
        %v2245 = vld [vmem:[#allocation8 + $0x6c] sm:$0xf]
        %v2246 = vld [vmem:[#allocation8 + $0x70] sm:$0xf]
        %v2247 = vld [vmem:[#allocation8 + $0x74] sm:$0xf]
        %v2248 = vld [vmem:[#allocation8 + $0x78] sm:$0xf]
        %v2249 = vld [vmem:[#allocation8 + $0x7c] sm:$0xf]
        %v2250 = vld [vmem:[#allocation3 + $0x28] sm:$0xf]
        %v2251 = vld [vmem:[#allocation3] sm:$0x80]
        %v2252 = vld [vmem:[#allocation3 + $0x28] sm:$0xff]
        %v2259 = vrot.slane %v2251, 4
        %v2260 = vrot.slane %v2165, 4
        %v2261 = vsel %vm718, %v2259, %v2260
        %v2262 = vrot.slane %v2166, 4
        %v2263 = vsel %vm718, %v2260, %v2262
        %v2264 = vrot.slane %v2167, 4
        %v2265 = vsel %vm718, %v2262, %v2264
        %v2266 = vrot.slane %v2168, 4
        %v2267 = vsel %vm718, %v2264, %v2266
        %v2268 = vrot.slane %v2252, 4
        %v2269 = vsel %vm718, %v2266, %v2268
        %s2270 = scalar_lea.vmem [#allocation8], 128
        %v2271 = vld [vmem:[%s2270] sm:$0xf]
        %v2272 = vld [vmem:[%s2270 + $0x4] sm:$0xf]
        %v2273 = vld [vmem:[%s2270 + $0x8] sm:$0xf]
        %v2274 = vld [vmem:[%s2270 + $0xc] sm:$0xf]
        %v2275 = vld [vmem:[%s2270 + $0x10] sm:$0xf]
        %v2276 = vld [vmem:[%s2270 + $0x14] sm:$0xf]
        %v2277 = vld [vmem:[%s2270 + $0x18] sm:$0xf]
        %v2278 = vld [vmem:[%s2270 + $0x1c] sm:$0xf]
        %v2279 = vld [vmem:[%s2270 + $0x20] sm:$0xf]
        %v2280 = vld [vmem:[%s2270 + $0x24] sm:$0xf]
        %v2281 = vld [vmem:[%s2270 + $0x28] sm:$0xf]
        %v2282 = vld [vmem:[%s2270 + $0x2c] sm:$0xf]
        %v2283 = vld [vmem:[%s2270 + $0x30] sm:$0xf]
        %v2284 = vld [vmem:[%s2270 + $0x34] sm:$0xf]
        %v2285 = vld [vmem:[%s2270 + $0x38] sm:$0xf]
        %v2286 = vld [vmem:[%s2270 + $0x3c] sm:$0xf]
        %v2287 = vld [vmem:[%s2270 + $0x40] sm:$0xf]
        %v2288 = vld [vmem:[%s2270 + $0x44] sm:$0xf]
        %v2289 = vld [vmem:[%s2270 + $0x48] sm:$0xf]
        %v2290 = vld [vmem:[%s2270 + $0x4c] sm:$0xf]
        %v2291 = vld [vmem:[%s2270 + $0x50] sm:$0xf]
        %v2292 = vld [vmem:[%s2270 + $0x54] sm:$0xf]
        %v2293 = vld [vmem:[%s2270 + $0x58] sm:$0xf]
        %v2294 = vld [vmem:[%s2270 + $0x5c] sm:$0xf]
        %v2295 = vld [vmem:[%s2270 + $0x60] sm:$0xf]
        %v2296 = vld [vmem:[%s2270 + $0x64] sm:$0xf]
        %v2297 = vld [vmem:[%s2270 + $0x68] sm:$0xf]
        %v2298 = vld [vmem:[%s2270 + $0x6c] sm:$0xf]
        %v2299 = vld [vmem:[%s2270 + $0x70] sm:$0xf]
        %v2300 = vld [vmem:[%s2270 + $0x74] sm:$0xf]
        %v2301 = vld [vmem:[%s2270 + $0x78] sm:$0xf]
        %v2302 = vld [vmem:[%s2270 + $0x7c] sm:$0xf]
        %v2303 = vrot.slane %v2172, 3
        %v2304 = vrot.slane %v2174, 4
        %v2305 = vor.u32 %v2303, %v2304
        %v2306 = vrot.slane %v2183, 3
        %v2307 = vrot.slane %v2179, 4
        %v2308 = vor.u32 %v2306, %v2307
        %v2309 = vsel %vm763, %v2305, %v2308
        %v2311 = vshrl.u32 %v2261, 16
        %v2313 = vrot.slane %v2311, 3
        %v2314 = vshll.u32 %v2261, 16
        %v2316 = vrot.slane %v2314, 4
        %v2317 = vor.u32 %v2313, %v2316
        %v2319 = vshrl.u32 %v2263, 16
        %v2321 = vrot.slane %v2319, 3
        %v2322 = vshll.u32 %v2263, 16
        %v2324 = vrot.slane %v2322, 4
        %v2325 = vor.u32 %v2321, %v2324
        %v2326 = vsel %vm763, %v2317, %v2325
        %v2327 = vrot.slane %v2191, 3
        %v2328 = vrot.slane %v2187, 4
        %v2329 = vor.u32 %v2327, %v2328
        %v2330 = vsel %vm763, %v2308, %v2329
        %v2332 = vshrl.u32 %v2265, 16
        %v2334 = vrot.slane %v2332, 3
        %v2335 = vshll.u32 %v2265, 16
        %v2337 = vrot.slane %v2335, 4
        %v2338 = vor.u32 %v2334, %v2337
        %v2339 = vsel %vm763, %v2325, %v2338
        %v2340 = vrot.slane %v2199, 3
        %v2341 = vrot.slane %v2195, 4
        %v2342 = vor.u32 %v2340, %v2341
        %v2343 = vsel %vm763, %v2329, %v2342
        %v2345 = vshrl.u32 %v2267, 16
        %v2347 = vrot.slane %v2345, 3
        %v2348 = vshll.u32 %v2267, 16
        %v2350 = vrot.slane %v2348, 4
        %v2351 = vor.u32 %v2347, %v2350
        %v2352 = vsel %vm763, %v2338, %v2351
        %v2353 = vrot.slane %v2207, 3
        %v2354 = vrot.slane %v2203, 4
        %v2355 = vor.u32 %v2353, %v2354
        %v2356 = vsel %vm763, %v2342, %v2355
        %v2358 = vshrl.u32 %v2269, 16
        %v2360 = vrot.slane %v2358, 3
        %v2361 = vshll.u32 %v2269, 16
        %v2363 = vrot.slane %v2361, 4
        %v2364 = vor.u32 %v2360, %v2363
        %v2365 = vsel %vm763, %v2351, %v2364
        %v2367 = vshrl.u32 %v2250, 16
        %v2369 = vrot.slane %v2367, 3
        %v2370 = vshll.u32 %v2250, 16
        %v2372 = vrot.slane %v2370, 4
        %v2373 = vor.u32 %v2369, %v2372
        %v2374 = vsel %vm763, %v2355, %v2373
        %v2376 = vshrl.u32 %v2268, 16
        %v2378 = vrot.slane %v2376, 3
        %v2379 = vshll.u32 %v2268, 16
        %v2381 = vrot.slane %v2379, 4
        %v2382 = vor.u32 %v2378, %v2381
        %v2383 = vsel %vm763, %v2364, %v2382
        %v2426 = vunpack.c.l.b16 %v2271
        %v2427 = vunpack.c.l.b16 %v2272
        %v2428 = vunpack.c.l.b16 %v2273
        %v2429 = vunpack.c.l.b16 %v2274
        %v2430 = vunpack.c.l.b16 %v2275
        %v2431 = vunpack.c.l.b16 %v2276
        %v2432 = vunpack.c.l.b16 %v2277
        %v2433 = vunpack.c.l.b16 %v2278
        %v2434 = vunpack.c.l.b16 %v2279
        %v2435 = vunpack.c.l.b16 %v2280
        %v2436 = vunpack.c.l.b16 %v2281
        %v2437 = vunpack.c.l.b16 %v2282
        %v2438 = vunpack.c.l.b16 %v2283
        %v2439 = vunpack.c.l.b16 %v2284
        %v2440 = vunpack.c.l.b16 %v2285
        %v2441 = vunpack.c.l.b16 %v2286
        %v2442 = vunpack.c.l.b16 %v2287
        %v2443 = vunpack.c.l.b16 %v2288
        %v2444 = vunpack.c.l.b16 %v2289
        %v2445 = vunpack.c.l.b16 %v2290
        %v2446 = vunpack.c.l.b16 %v2291
        %v2447 = vunpack.c.l.b16 %v2292
        %v2448 = vunpack.c.l.b16 %v2293
        %v2449 = vunpack.c.l.b16 %v2294
        %v2450 = vunpack.c.l.b16 %v2295
        %v2451 = vunpack.c.l.b16 %v2296
        %v2452 = vunpack.c.l.b16 %v2297
        %v2453 = vunpack.c.l.b16 %v2298
        %v2454 = vunpack.c.l.b16 %v2299
        %v2455 = vunpack.c.l.b16 %v2300
        %v2456 = vunpack.c.l.b16 %v2301
        %v2457 = vunpack.c.l.b16 %v2302
        %v2458 = vpack.c.b16 %v2427, %v2426
        %v2459 = vpack.c.b16 %v2429, %v2428
        %v2460 = vpack.c.b16 %v2431, %v2430
        %v2461 = vpack.c.b16 %v2433, %v2432
        %v2462 = vpack.c.b16 %v2435, %v2434
        %v2463 = vpack.c.b16 %v2437, %v2436
        %v2464 = vpack.c.b16 %v2439, %v2438
        %v2465 = vpack.c.b16 %v2441, %v2440
        %v2466 = vpack.c.b16 %v2443, %v2442
        %v2467 = vpack.c.b16 %v2445, %v2444
        %v2468 = vpack.c.b16 %v2447, %v2446
        %v2469 = vpack.c.b16 %v2449, %v2448
        %v2470 = vpack.c.b16 %v2451, %v2450
        %v2471 = vpack.c.b16 %v2453, %v2452
        %v2472 = vpack.c.b16 %v2455, %v2454
        %v2473 = vpack.c.b16 %v2457, %v2456
        %2490 = vmatprep.subr.bf16.mxu0 0
        %2491 = vmatpush1.bf16.msra.mxu0 %v2458
        %2492 = vmatprep.subr.bf16.mxu0 0
        %2493 = vmatpush1.bf16.msra.mxu0 %v2459
        %2494 = vmatprep.subr.bf16.mxu0 0
        %2495 = vmatpush1.bf16.msra.mxu0 %v2460
        %2496 = vmatprep.subr.bf16.mxu0 0
        %2497 = vmatpush1.bf16.msra.mxu0 %v2461
        %2498 = vmatprep.subr.bf16.mxu0 0
        %2499 = vmatpush1.bf16.msra.mxu0 %v2462
        %2500 = vmatprep.subr.bf16.mxu0 0
        %2501 = vmatpush1.bf16.msra.mxu0 %v2463
        %2502 = vmatprep.subr.bf16.mxu0 0
        %2503 = vmatpush1.bf16.msra.mxu0 %v2464
        %2504 = vmatprep.subr.bf16.mxu0 0
        %2505 = vmatpush1.bf16.msra.mxu0 %v2465
        %2506 = vmatprep.subr.bf16.mxu0 0
        %2507 = vmatpush1.bf16.msra.mxu0 %v2466
        %2508 = vmatprep.subr.bf16.mxu0 0
        %2509 = vmatpush1.bf16.msra.mxu0 %v2467
        %2510 = vmatprep.subr.bf16.mxu0 0
        %2511 = vmatpush1.bf16.msra.mxu0 %v2468
        %2512 = vmatprep.subr.bf16.mxu0 0
        %2513 = vmatpush1.bf16.msra.mxu0 %v2469
        %2514 = vmatprep.subr.bf16.mxu0 0
        %2515 = vmatpush1.bf16.msra.mxu0 %v2470
        %2516 = vmatprep.subr.bf16.mxu0 0
        %2517 = vmatpush1.bf16.msra.mxu0 %v2471
        %2518 = vmatprep.subr.bf16.mxu0 0
        %2519 = vmatpush1.bf16.msra.mxu0 %v2472
        %2520 = vmatprep.subr.bf16.mxu0 0
        %2521 = vmatpush1.bf16.msra.mxu0 %v2473
        %2522 = vmatprep.mubr.bf16.mxu0 %v2326
        %2523 = vmatmul.mubr.bf16.gmra.mrb[0].mxu0 %v2309
        %v2524 = vpop.f32.mrb[0].mxu0
        %v2525 = vadd.f32 0.0, %v2524
        %v2526 = vpop.f32.mrb[0].mxu0
        %v2527 = vpop.f32.mrb[0].mxu0
        %v2528 = vadd.f32 0.0, %v2527
        %v2529 = vpop.f32.mrb[0].mxu0
        %2530 = vmatprep.mubr.bf16.mxu0 %v2339
        %2531 = vmatmul.mubr.bf16.gmra.mrb[0].mxu0 %v2330
        %v2532 = vpop.f32.mrb[0].mxu0
        %v2533 = vadd.f32 0.0, %v2532
        %v2534 = vpop.f32.mrb[0].mxu0
        %v2535 = vpop.f32.mrb[0].mxu0
        %v2536 = vadd.f32 0.0, %v2535
        %v2537 = vpop.f32.mrb[0].mxu0
        %2538 = vmatprep.mubr.bf16.mxu0 %v2352
        %2539 = vmatmul.mubr.bf16.gmra.mrb[0].mxu0 %v2343
        %v2540 = vpop.f32.mrb[0].mxu0
        %v2541 = vadd.f32 0.0, %v2540
        %v2542 = vpop.f32.mrb[0].mxu0
        %v2543 = vpop.f32.mrb[0].mxu0
        %v2544 = vadd.f32 0.0, %v2543
        %v2545 = vpop.f32.mrb[0].mxu0
        %2546 = vmatprep.mubr.bf16.mxu0 %v2365
        %2547 = vmatmul.mubr.bf16.gmra.mrb[0].mxu0 %v2356
        %v2548 = vpop.f32.mrb[0].mxu0
        %v2549 = vadd.f32 0.0, %v2548
        %v2550 = vpop.f32.mrb[0].mxu0
        %v2551 = vpop.f32.mrb[0].mxu0
        %v2552 = vadd.f32 0.0, %v2551
        %v2553 = vpop.f32.mrb[0].mxu0
        %2554 = vmatprep.mubr.bf16.mxu0 %v2383
        %2555 = vmatmul.mubr.bf16.gmra.mrb[0].mxu0 %v2374
        %v2556 = vpop.f32.mrb[0].mxu0
        %v2557 = vadd.f32 0.0, %v2556
        %v2558 = vpop.f32.mrb[0].mxu0
        %v2559 = vpop.f32.mrb[0].mxu0
        %v2560 = vadd.f32 0.0, %v2559
        %v2561 = vpop.f32.mrb[0].mxu0
        %2562 = vdwg.mxu0
        %v2564 = vshrl.u32 %v2164, 16
        %v2566 = vrot.slane %v2564, 2
        %v2567 = vshll.u32 %v2164, 16
        %v2569 = vrot.slane %v2567, 3
        %v2570 = vor.u32 %v2566, %v2569
        %v2571 = vrot.slane %v2183, 2
        %v2572 = vrot.slane %v2179, 3
        %v2573 = vor.u32 %v2571, %v2572
        %v2574 = vsel %vm1024, %v2570, %v2573
        %v2576 = vshrl.u32 %v2182, 16
        %v2578 = vrot.slane %v2576, 2
        %v2579 = vshll.u32 %v2182, 16
        %v2581 = vrot.slane %v2579, 3
        %v2582 = vor.u32 %v2578, %v2581
        %v2584 = vshrl.u32 %v2190, 16
        %v2586 = vrot.slane %v2584, 2
        %v2587 = vshll.u32 %v2190, 16
        %v2589 = vrot.slane %v2587, 3
        %v2590 = vor.u32 %v2586, %v2589
        %v2591 = vsel %vm1024, %v2582, %v2590
        %v2592 = vrot.slane %v2191, 2
        %v2593 = vrot.slane %v2187, 3
        %v2594 = vor.u32 %v2592, %v2593
        %v2595 = vsel %vm1024, %v2573, %v2594
        %v2597 = vshrl.u32 %v2198, 16
        %v2599 = vrot.slane %v2597, 2
        %v2600 = vshll.u32 %v2198, 16
        %v2602 = vrot.slane %v2600, 3
        %v2603 = vor.u32 %v2599, %v2602
        %v2604 = vsel %vm1024, %v2590, %v2603
        %v2605 = vrot.slane %v2199, 2
        %v2606 = vrot.slane %v2195, 3
        %v2607 = vor.u32 %v2605, %v2606
        %v2608 = vsel %vm1024, %v2594, %v2607
        %v2610 = vshrl.u32 %v2206, 16
        %v2612 = vrot.slane %v2610, 2
        %v2613 = vshll.u32 %v2206, 16
        %v2615 = vrot.slane %v2613, 3
        %v2616 = vor.u32 %v2612, %v2615
        %v2617 = vsel %vm1024, %v2603, %v2616
        %v2618 = vrot.slane %v2207, 2
        %v2619 = vrot.slane %v2203, 3
        %v2620 = vor.u32 %v2618, %v2619
        %v2621 = vsel %vm1024, %v2607, %v2620
        %v2623 = vshrl.u32 %v2214, 16
        %v2625 = vrot.slane %v2623, 2
        %v2626 = vshll.u32 %v2214, 16
        %v2628 = vrot.slane %v2626, 3
        %v2629 = vor.u32 %v2625, %v2628
        %v2630 = vsel %vm1024, %v2616, %v2629
        %v2631 = vrot.slane %v2215, 2
        %v2632 = vrot.slane %v2211, 3
        %v2633 = vor.u32 %v2631, %v2632
        %v2634 = vsel %vm1024, %v2620, %v2633
        %v2636 = vshrl.u32 %v2217, 16
        %v2638 = vrot.slane %v2636, 2
        %v2639 = vshll.u32 %v2217, 16
        %v2641 = vrot.slane %v2639, 3
        %v2642 = vor.u32 %v2638, %v2641
        %v2643 = vsel %vm1024, %v2629, %v2642
        %v2686 = vunpack.c.l.b16 %v2218
        %v2687 = vunpack.c.l.b16 %v2219
        %v2688 = vunpack.c.l.b16 %v2220
        %v2689 = vunpack.c.l.b16 %v2221
        %v2690 = vunpack.c.l.b16 %v2222
        %v2691 = vunpack.c.l.b16 %v2223
        %v2692 = vunpack.c.l.b16 %v2224
        %v2693 = vunpack.c.l.b16 %v2225
        %v2694 = vunpack.c.l.b16 %v2226
        %v2695 = vunpack.c.l.b16 %v2227
        %v2696 = vunpack.c.l.b16 %v2228
        %v2697 = vunpack.c.l.b16 %v2229
        %v2698 = vunpack.c.l.b16 %v2230
        %v2699 = vunpack.c.l.b16 %v2231
        %v2700 = vunpack.c.l.b16 %v2232
        %v2701 = vunpack.c.l.b16 %v2233
        %v2702 = vunpack.c.l.b16 %v2234
        %v2703 = vunpack.c.l.b16 %v2235
        %v2704 = vunpack.c.l.b16 %v2236
        %v2705 = vunpack.c.l.b16 %v2237
        %v2706 = vunpack.c.l.b16 %v2238
        %v2707 = vunpack.c.l.b16 %v2239
        %v2708 = vunpack.c.l.b16 %v2240
        %v2709 = vunpack.c.l.b16 %v2241
        %v2710 = vunpack.c.l.b16 %v2242
        %v2711 = vunpack.c.l.b16 %v2243
        %v2712 = vunpack.c.l.b16 %v2244
        %v2713 = vunpack.c.l.b16 %v2245
        %v2714 = vunpack.c.l.b16 %v2246
        %v2715 = vunpack.c.l.b16 %v2247
        %v2716 = vunpack.c.l.b16 %v2248
        %v2717 = vunpack.c.l.b16 %v2249
        %v2718 = vpack.c.b16 %v2687, %v2686
        %v2719 = vpack.c.b16 %v2689, %v2688
        %v2720 = vpack.c.b16 %v2691, %v2690
        %v2721 = vpack.c.b16 %v2693, %v2692
        %v2722 = vpack.c.b16 %v2695, %v2694
        %v2723 = vpack.c.b16 %v2697, %v2696
        %v2724 = vpack.c.b16 %v2699, %v2698
        %v2725 = vpack.c.b16 %v2701, %v2700
        %v2726 = vpack.c.b16 %v2703, %v2702
        %v2727 = vpack.c.b16 %v2705, %v2704
        %v2728 = vpack.c.b16 %v2707, %v2706
        %v2729 = vpack.c.b16 %v2709, %v2708
        %v2730 = vpack.c.b16 %v2711, %v2710
        %v2731 = vpack.c.b16 %v2713, %v2712
        %v2732 = vpack.c.b16 %v2715, %v2714
        %v2733 = vpack.c.b16 %v2717, %v2716
        %2750 = vmatprep.subr.bf16.mxu0 0
        %2751 = vmatpush1.bf16.msra.mxu0 %v2718
        %2752 = vmatprep.subr.bf16.mxu0 0
        %2753 = vmatpush1.bf16.msra.mxu0 %v2719
        %2754 = vmatprep.subr.bf16.mxu0 0
        %2755 = vmatpush1.bf16.msra.mxu0 %v2720
        %2756 = vmatprep.subr.bf16.mxu0 0
        %2757 = vmatpush1.bf16.msra.mxu0 %v2721
        %2758 = vmatprep.subr.bf16.mxu0 0
        %2759 = vmatpush1.bf16.msra.mxu0 %v2722
        %2760 = vmatprep.subr.bf16.mxu0 0
        %2761 = vmatpush1.bf16.msra.mxu0 %v2723
        %2762 = vmatprep.subr.bf16.mxu0 0
        %2763 = vmatpush1.bf16.msra.mxu0 %v2724
        %2764 = vmatprep.subr.bf16.mxu0 0
        %2765 = vmatpush1.bf16.msra.mxu0 %v2725
        %2766 = vmatprep.subr.bf16.mxu0 0
        %2767 = vmatpush1.bf16.msra.mxu0 %v2726
        %2768 = vmatprep.subr.bf16.mxu0 0
        %2769 = vmatpush1.bf16.msra.mxu0 %v2727
        %2770 = vmatprep.subr.bf16.mxu0 0
        %2771 = vmatpush1.bf16.msra.mxu0 %v2728
        %2772 = vmatprep.subr.bf16.mxu0 0
        %2773 = vmatpush1.bf16.msra.mxu0 %v2729
        %2774 = vmatprep.subr.bf16.mxu0 0
        %2775 = vmatpush1.bf16.msra.mxu0 %v2730
        %2776 = vmatprep.subr.bf16.mxu0 0
        %2777 = vmatpush1.bf16.msra.mxu0 %v2731
        %2778 = vmatprep.subr.bf16.mxu0 0
        %2779 = vmatpush1.bf16.msra.mxu0 %v2732
        %2780 = vmatprep.subr.bf16.mxu0 0
        %2781 = vmatpush1.bf16.msra.mxu0 %v2733
        %2782 = vmatprep.mubr.bf16.mxu0 %v2591
        %2783 = vmatmul.mubr.bf16.gmra.mrb[0].mxu0 %v2574
        %v2784 = vpop.f32.mrb[0].mxu0
        %v2785 = vadd.f32 %v2525, %v2784
        %v2786 = vpop.f32.mrb[0].mxu0
        %v2787 = vpop.f32.mrb[0].mxu0
        %v2788 = vadd.f32 %v2528, %v2787
        %v2789 = vpop.f32.mrb[0].mxu0
        %2790 = vmatprep.mubr.bf16.mxu0 %v2604
        %2791 = vmatmul.mubr.bf16.gmra.mrb[0].mxu0 %v2595
        %v2792 = vpop.f32.mrb[0].mxu0
        %v2793 = vadd.f32 %v2533, %v2792
        %v2794 = vpop.f32.mrb[0].mxu0
        %v2795 = vpop.f32.mrb[0].mxu0
        %v2796 = vadd.f32 %v2536, %v2795
        %v2797 = vpop.f32.mrb[0].mxu0
        %2798 = vmatprep.mubr.bf16.mxu0 %v2617
        %2799 = vmatmul.mubr.bf16.gmra.mrb[0].mxu0 %v2608
        %v2800 = vpop.f32.mrb[0].mxu0
        %v2801 = vadd.f32 %v2541, %v2800
        %v2802 = vpop.f32.mrb[0].mxu0
        %v2803 = vpop.f32.mrb[0].mxu0
        %v2804 = vadd.f32 %v2544, %v2803
        %v2805 = vpop.f32.mrb[0].mxu0
        %2806 = vmatprep.mubr.bf16.mxu0 %v2630
        %2807 = vmatmul.mubr.bf16.gmra.mrb[0].mxu0 %v2621
        %v2808 = vpop.f32.mrb[0].mxu0
        %v2809 = vadd.f32 %v2549, %v2808
        %v2810 = vpop.f32.mrb[0].mxu0
        %v2811 = vpop.f32.mrb[0].mxu0
        %v2812 = vadd.f32 %v2552, %v2811
        %v2813 = vpop.f32.mrb[0].mxu0
        %2814 = vmatprep.mubr.bf16.mxu0 %v2643
        %2815 = vmatmul.mubr.bf16.gmra.mrb[0].mxu0 %v2634
        %v2816 = vpop.f32.mrb[0].mxu0
        %v2817 = vadd.f32 %v2557, %v2816
        %v2818 = vpop.f32.mrb[0].mxu0
        %v2819 = vpop.f32.mrb[0].mxu0
        %v2820 = vadd.f32 %v2560, %v2819
        %v2821 = vpop.f32.mrb[0].mxu0
        %2822 = vdwg.mxu0
        %v2823 = vld [vmem:[#allocation3 + $0x8] sm:$0xff]
        %v2824 = vld [vmem:[#allocation3 + $0x10] sm:$0xff]
        %v2825 = vld [vmem:[#allocation3 + $0x18] sm:$0xff]
        %v2826 = vld [vmem:[#allocation3 + $0x20] sm:$0xff]
        %v2827 = vld [vmem:[#allocation3 + $0x28] sm:$0xff]
        %v2828 = vld [vmem:[#allocation3 + $0x30] sm:$0x1]
        %v2830 = vshrl.u32 %v2823, 16
        %v2832 = vshll.u32 %v2823, 16
        %v2834 = vrot.slane %v2832, 1
        %v2835 = vor.u32 %v2830, %v2834
        %v2837 = vshll.u32 %v2824, 16
        %v2839 = vrot.slane %v2837, 1
        %v2840 = vsel %vm629, %v2835, %v2839
        %v2841 = vshrl.u32 %v2824, 16
        %v2843 = vor.u32 %v2841, %v2839
        %v2845 = vshll.u32 %v2825, 16
        %v2847 = vrot.slane %v2845, 1
        %v2848 = vsel %vm629, %v2843, %v2847
        %v2849 = vshrl.u32 %v2825, 16
        %v2851 = vor.u32 %v2849, %v2847
        %v2853 = vshll.u32 %v2826, 16
        %v2855 = vrot.slane %v2853, 1
        %v2856 = vsel %vm629, %v2851, %v2855
        %v2857 = vshrl.u32 %v2826, 16
        %v2859 = vor.u32 %v2857, %v2855
        %v2861 = vshll.u32 %v2827, 16
        %v2863 = vrot.slane %v2861, 1
        %v2864 = vsel %vm629, %v2859, %v2863
        %v2865 = vshrl.u32 %v2827, 16
        %v2867 = vor.u32 %v2865, %v2863
        %v2869 = vshll.u32 %v2828, 16
        %v2871 = vrot.slane %v2869, 1
        %v2872 = vsel %vm629, %v2867, %v2871
        %s2878 = scalar_lea.vmem [#allocation8], 256
        %v2879 = vld [vmem:[%s2878] sm:$0xf]
        %v2880 = vld [vmem:[%s2878 + $0x4] sm:$0xf]
        %v2881 = vld [vmem:[%s2878 + $0x8] sm:$0xf]
        %v2882 = vld [vmem:[%s2878 + $0xc] sm:$0xf]
        %v2883 = vld [vmem:[%s2878 + $0x10] sm:$0xf]
        %v2884 = vld [vmem:[%s2878 + $0x14] sm:$0xf]
        %v2885 = vld [vmem:[%s2878 + $0x18] sm:$0xf]
        %v2886 = vld [vmem:[%s2878 + $0x1c] sm:$0xf]
        %v2887 = vld [vmem:[%s2878 + $0x20] sm:$0xf]
        %v2888 = vld [vmem:[%s2878 + $0x24] sm:$0xf]
        %v2889 = vld [vmem:[%s2878 + $0x28] sm:$0xf]
        %v2890 = vld [vmem:[%s2878 + $0x2c] sm:$0xf]
        %v2891 = vld [vmem:[%s2878 + $0x30] sm:$0xf]
        %v2892 = vld [vmem:[%s2878 + $0x34] sm:$0xf]
        %v2893 = vld [vmem:[%s2878 + $0x38] sm:$0xf]
        %v2894 = vld [vmem:[%s2878 + $0x3c] sm:$0xf]
        %v2895 = vld [vmem:[%s2878 + $0x40] sm:$0xf]
        %v2896 = vld [vmem:[%s2878 + $0x44] sm:$0xf]
        %v2897 = vld [vmem:[%s2878 + $0x48] sm:$0xf]
        %v2898 = vld [vmem:[%s2878 + $0x4c] sm:$0xf]
        %v2899 = vld [vmem:[%s2878 + $0x50] sm:$0xf]
        %v2900 = vld [vmem:[%s2878 + $0x54] sm:$0xf]
        %v2901 = vld [vmem:[%s2878 + $0x58] sm:$0xf]
        %v2902 = vld [vmem:[%s2878 + $0x5c] sm:$0xf]
        %v2903 = vld [vmem:[%s2878 + $0x60] sm:$0xf]
        %v2904 = vld [vmem:[%s2878 + $0x64] sm:$0xf]
        %v2905 = vld [vmem:[%s2878 + $0x68] sm:$0xf]
        %v2906 = vld [vmem:[%s2878 + $0x6c] sm:$0xf]
        %v2907 = vld [vmem:[%s2878 + $0x70] sm:$0xf]
        %v2908 = vld [vmem:[%s2878 + $0x74] sm:$0xf]
        %v2909 = vld [vmem:[%s2878 + $0x78] sm:$0xf]
        %v2910 = vld [vmem:[%s2878 + $0x7c] sm:$0xf]
        %v2943 = vunpack.c.l.b16 %v2879
        %v2944 = vunpack.c.l.b16 %v2880
        %v2945 = vunpack.c.l.b16 %v2881
        %v2946 = vunpack.c.l.b16 %v2882
        %v2947 = vunpack.c.l.b16 %v2883
        %v2948 = vunpack.c.l.b16 %v2884
        %v2949 = vunpack.c.l.b16 %v2885
        %v2950 = vunpack.c.l.b16 %v2886
        %v2951 = vunpack.c.l.b16 %v2887
        %v2952 = vunpack.c.l.b16 %v2888
        %v2953 = vunpack.c.l.b16 %v2889
        %v2954 = vunpack.c.l.b16 %v2890
        %v2955 = vunpack.c.l.b16 %v2891
        %v2956 = vunpack.c.l.b16 %v2892
        %v2957 = vunpack.c.l.b16 %v2893
        %v2958 = vunpack.c.l.b16 %v2894
        %v2959 = vunpack.c.l.b16 %v2895
        %v2960 = vunpack.c.l.b16 %v2896
        %v2961 = vunpack.c.l.b16 %v2897
        %v2962 = vunpack.c.l.b16 %v2898
        %v2963 = vunpack.c.l.b16 %v2899
        %v2964 = vunpack.c.l.b16 %v2900
        %v2965 = vunpack.c.l.b16 %v2901
        %v2966 = vunpack.c.l.b16 %v2902
        %v2967 = vunpack.c.l.b16 %v2903
        %v2968 = vunpack.c.l.b16 %v2904
        %v2969 = vunpack.c.l.b16 %v2905
        %v2970 = vunpack.c.l.b16 %v2906
        %v2971 = vunpack.c.l.b16 %v2907
        %v2972 = vunpack.c.l.b16 %v2908
        %v2973 = vunpack.c.l.b16 %v2909
        %v2974 = vunpack.c.l.b16 %v2910
        %v2975 = vpack.c.b16 %v2944, %v2943
        %v2976 = vpack.c.b16 %v2946, %v2945
        %v2977 = vpack.c.b16 %v2948, %v2947
        %v2978 = vpack.c.b16 %v2950, %v2949
        %v2979 = vpack.c.b16 %v2952, %v2951
        %v2980 = vpack.c.b16 %v2954, %v2953
        %v2981 = vpack.c.b16 %v2956, %v2955
        %v2982 = vpack.c.b16 %v2958, %v2957
        %v2983 = vpack.c.b16 %v2960, %v2959
        %v2984 = vpack.c.b16 %v2962, %v2961
        %v2985 = vpack.c.b16 %v2964, %v2963
        %v2986 = vpack.c.b16 %v2966, %v2965
        %v2987 = vpack.c.b16 %v2968, %v2967
        %v2988 = vpack.c.b16 %v2970, %v2969
        %v2989 = vpack.c.b16 %v2972, %v2971
        %v2990 = vpack.c.b16 %v2974, %v2973
        %3007 = vmatprep.subr.bf16.mxu0 0
        %3008 = vmatpush1.bf16.msra.mxu0 %v2975
        %3009 = vmatprep.subr.bf16.mxu0 0
        %3010 = vmatpush1.bf16.msra.mxu0 %v2976
        %3011 = vmatprep.subr.bf16.mxu0 0
        %3012 = vmatpush1.bf16.msra.mxu0 %v2977
        %3013 = vmatprep.subr.bf16.mxu0 0
        %3014 = vmatpush1.bf16.msra.mxu0 %v2978
        %3015 = vmatprep.subr.bf16.mxu0 0
        %3016 = vmatpush1.bf16.msra.mxu0 %v2979
        %3017 = vmatprep.subr.bf16.mxu0 0
        %3018 = vmatpush1.bf16.msra.mxu0 %v2980
        %3019 = vmatprep.subr.bf16.mxu0 0
        %3020 = vmatpush1.bf16.msra.mxu0 %v2981
        %3021 = vmatprep.subr.bf16.mxu0 0
        %3022 = vmatpush1.bf16.msra.mxu0 %v2982
        %3023 = vmatprep.subr.bf16.mxu0 0
        %3024 = vmatpush1.bf16.msra.mxu0 %v2983
        %3025 = vmatprep.subr.bf16.mxu0 0
        %3026 = vmatpush1.bf16.msra.mxu0 %v2984
        %3027 = vmatprep.subr.bf16.mxu0 0
        %3028 = vmatpush1.bf16.msra.mxu0 %v2985
        %3029 = vmatprep.subr.bf16.mxu0 0
        %3030 = vmatpush1.bf16.msra.mxu0 %v2986
        %3031 = vmatprep.subr.bf16.mxu0 0
        %3032 = vmatpush1.bf16.msra.mxu0 %v2987
        %3033 = vmatprep.subr.bf16.mxu0 0
        %3034 = vmatpush1.bf16.msra.mxu0 %v2988
        %3035 = vmatprep.subr.bf16.mxu0 0
        %3036 = vmatpush1.bf16.msra.mxu0 %v2989
        %3037 = vmatprep.subr.bf16.mxu0 0
        %3038 = vmatpush1.bf16.msra.mxu0 %v2990
        %3039 = vmatprep.mubr.bf16.mxu0 %v2840
        %3040 = vmatmul.mubr.bf16.gmra.mrb[0].mxu0 %v2165
        %v3041 = vpop.f32.mrb[0].mxu0
        %v3042 = vadd.f32 0.0, %v3041
        %v3043 = vpop.f32.mrb[0].mxu0
        %v3044 = vpop.f32.mrb[0].mxu0
        %v3045 = vadd.f32 0.0, %v3044
        %v3046 = vpop.f32.mrb[0].mxu0
        %3047 = vmatprep.mubr.bf16.mxu0 %v2848
        %3048 = vmatmul.mubr.bf16.gmra.mrb[0].mxu0 %v2166
        %v3049 = vpop.f32.mrb[0].mxu0
        %v3050 = vadd.f32 0.0, %v3049
        %v3051 = vpop.f32.mrb[0].mxu0
        %v3052 = vpop.f32.mrb[0].mxu0
        %v3053 = vadd.f32 0.0, %v3052
        %v3054 = vpop.f32.mrb[0].mxu0
        %3055 = vmatprep.mubr.bf16.mxu0 %v2856
        %3056 = vmatmul.mubr.bf16.gmra.mrb[0].mxu0 %v2167
        %v3057 = vpop.f32.mrb[0].mxu0
        %v3058 = vadd.f32 0.0, %v3057
        %v3059 = vpop.f32.mrb[0].mxu0
        %v3060 = vpop.f32.mrb[0].mxu0
        %v3061 = vadd.f32 0.0, %v3060
        %v3062 = vpop.f32.mrb[0].mxu0
        %3063 = vmatprep.mubr.bf16.mxu0 %v2864
        %3064 = vmatmul.mubr.bf16.gmra.mrb[0].mxu0 %v2168
        %v3065 = vpop.f32.mrb[0].mxu0
        %v3066 = vadd.f32 0.0, %v3065
        %v3067 = vpop.f32.mrb[0].mxu0
        %v3068 = vpop.f32.mrb[0].mxu0
        %v3069 = vadd.f32 0.0, %v3068
        %v3070 = vpop.f32.mrb[0].mxu0
        %3071 = vmatprep.mubr.bf16.mxu0 %v2872
        %3072 = vmatmul.mubr.bf16.gmra.mrb[0].mxu0 %v2252
        %v3073 = vpop.f32.mrb[0].mxu0
        %v3074 = vadd.f32 0.0, %v3073
        %v3075 = vpop.f32.mrb[0].mxu0
        %v3076 = vpop.f32.mrb[0].mxu0
        %v3077 = vadd.f32 0.0, %v3076
        %v3078 = vpop.f32.mrb[0].mxu0
        %3079 = vdwg.mxu0
        %v3080 = vadd.f32 %v2785, %v3042
        %v3081 = vadd.f32 %v2788, %v3045
        %v3082 = vadd.f32 %v2793, %v3050
        %v3083 = vadd.f32 %v2796, %v3053
        %v3084 = vadd.f32 %v2801, %v3058
        %v3085 = vadd.f32 %v2804, %v3061
        %v3086 = vadd.f32 %v2809, %v3066
        %v3087 = vadd.f32 %v2812, %v3069
        %v3088 = vadd.f32 %v2817, %v3074
        %v3089 = vadd.f32 %v2820, %v3077
        %v3090 = vld [vmem:[#allocation3 + $0x8] sm:$0xf0]
        %v3091 = vld [vmem:[#allocation3 + $0x30] sm:$0x1f]
        %v3092 = vld [vmem:[#allocation3 + $0x8] sm:$0xe0]
        %v3094 = vshrl.u32 %v3092, 16
        %v3096 = vshll.u32 %v3092, 16
        %v3098 = vrot.slane %v3096, 1
        %v3099 = vor.u32 %v3094, %v3098
        %v3100 = vsel %vm629, %v3099, %v2839
        %v3102 = vshll.u32 %v3091, 16
        %v3104 = vrot.slane %v3102, 1
        %v3105 = vsel %vm629, %v2867, %v3104
        %v3106 = vshrl.u32 %v3091, 16
        %v3108 = vor.u32 %v3106, %v3104
        %s3109 = scalar_lea.vmem [#allocation8], 384
        %v3110 = vld [vmem:[%s3109] sm:$0xf]
        %v3111 = vld [vmem:[%s3109 + $0x4] sm:$0xf]
        %v3112 = vld [vmem:[%s3109 + $0x8] sm:$0xf]
        %v3113 = vld [vmem:[%s3109 + $0xc] sm:$0xf]
        %v3114 = vld [vmem:[%s3109 + $0x10] sm:$0xf]
        %v3115 = vld [vmem:[%s3109 + $0x14] sm:$0xf]
        %v3116 = vld [vmem:[%s3109 + $0x18] sm:$0xf]
        %v3117 = vld [vmem:[%s3109 + $0x1c] sm:$0xf]
        %v3118 = vld [vmem:[%s3109 + $0x20] sm:$0xf]
        %v3119 = vld [vmem:[%s3109 + $0x24] sm:$0xf]
        %v3120 = vld [vmem:[%s3109 + $0x28] sm:$0xf]
        %v3121 = vld [vmem:[%s3109 + $0x2c] sm:$0xf]
        %v3122 = vld [vmem:[%s3109 + $0x30] sm:$0xf]
        %v3123 = vld [vmem:[%s3109 + $0x34] sm:$0xf]
        %v3124 = vld [vmem:[%s3109 + $0x38] sm:$0xf]
        %v3125 = vld [vmem:[%s3109 + $0x3c] sm:$0xf]
        %v3126 = vld [vmem:[%s3109 + $0x40] sm:$0xf]
        %v3127 = vld [vmem:[%s3109 + $0x44] sm:$0xf]
        %v3128 = vld [vmem:[%s3109 + $0x48] sm:$0xf]
        %v3129 = vld [vmem:[%s3109 + $0x4c] sm:$0xf]
        %v3130 = vld [vmem:[%s3109 + $0x50] sm:$0xf]
        %v3131 = vld [vmem:[%s3109 + $0x54] sm:$0xf]
        %v3132 = vld [vmem:[%s3109 + $0x58] sm:$0xf]
        %v3133 = vld [vmem:[%s3109 + $0x5c] sm:$0xf]
        %v3134 = vld [vmem:[%s3109 + $0x60] sm:$0xf]
        %v3135 = vld [vmem:[%s3109 + $0x64] sm:$0xf]
        %v3136 = vld [vmem:[%s3109 + $0x68] sm:$0xf]
        %v3137 = vld [vmem:[%s3109 + $0x6c] sm:$0xf]
        %v3138 = vld [vmem:[%s3109 + $0x70] sm:$0xf]
        %v3139 = vld [vmem:[%s3109 + $0x74] sm:$0xf]
        %v3140 = vld [vmem:[%s3109 + $0x78] sm:$0xf]
        %v3141 = vld [vmem:[%s3109 + $0x7c] sm:$0xf]
        %v3143 = vshrl.u32 %v3090, 16
        %v3145 = vrot.slane %v3143, 4
        %v3146 = vshll.u32 %v3090, 16
        %v3148 = vrot.slane %v3146, 5
        %v3149 = vor.u32 %v3145, %v3148
        %v3150 = vrot.slane %v2841, 4
        %v3151 = vrot.slane %v2837, 5
        %v3152 = vor.u32 %v3150, %v3151
        %v3153 = vsel %vm1604, %v3149, %v3152
        %v3155 = vshrl.u32 %v3100, 16
        %v3157 = vrot.slane %v3155, 4
        %v3158 = vshll.u32 %v3100, 16
        %v3160 = vrot.slane %v3158, 5
        %v3161 = vor.u32 %v3157, %v3160
        %v3163 = vshrl.u32 %v2848, 16
        %v3165 = vrot.slane %v3163, 4
        %v3166 = vshll.u32 %v2848, 16
        %v3168 = vrot.slane %v3166, 5
        %v3169 = vor.u32 %v3165, %v3168
        %v3170 = vsel %vm1604, %v3161, %v3169
        %v3171 = vrot.slane %v2849, 4
        %v3172 = vrot.slane %v2845, 5
        %v3173 = vor.u32 %v3171, %v3172
        %v3174 = vsel %vm1604, %v3152, %v3173
        %v3176 = vshrl.u32 %v2856, 16
        %v3178 = vrot.slane %v3176, 4
        %v3179 = vshll.u32 %v2856, 16
        %v3181 = vrot.slane %v3179, 5
        %v3182 = vor.u32 %v3178, %v3181
        %v3183 = vsel %vm1604, %v3169, %v3182
        %v3184 = vrot.slane %v2857, 4
        %v3185 = vrot.slane %v2853, 5
        %v3186 = vor.u32 %v3184, %v3185
        %v3187 = vsel %vm1604, %v3173, %v3186
        %v3189 = vshrl.u32 %v2864, 16
        %v3191 = vrot.slane %v3189, 4
        %v3192 = vshll.u32 %v2864, 16
        %v3194 = vrot.slane %v3192, 5
        %v3195 = vor.u32 %v3191, %v3194
        %v3196 = vsel %vm1604, %v3182, %v3195
        %v3197 = vrot.slane %v2865, 4
        %v3198 = vrot.slane %v2861, 5
        %v3199 = vor.u32 %v3197, %v3198
        %v3200 = vsel %vm1604, %v3186, %v3199
        %v3202 = vshrl.u32 %v3105, 16
        %v3204 = vrot.slane %v3202, 4
        %v3205 = vshll.u32 %v3105, 16
        %v3207 = vrot.slane %v3205, 5
        %v3208 = vor.u32 %v3204, %v3207
        %v3209 = vsel %vm1604, %v3195, %v3208
        %v3210 = vrot.slane %v3106, 4
        %v3211 = vrot.slane %v3102, 5
        %v3212 = vor.u32 %v3210, %v3211
        %v3213 = vsel %vm1604, %v3199, %v3212
        %v3215 = vshrl.u32 %v3108, 16
        %v3217 = vrot.slane %v3215, 4
        %v3218 = vshll.u32 %v3108, 16
        %v3220 = vrot.slane %v3218, 5
        %v3221 = vor.u32 %v3217, %v3220
        %v3222 = vsel %vm1604, %v3208, %v3221
        %v3265 = vunpack.c.l.b16 %v3110
        %v3266 = vunpack.c.l.b16 %v3111
        %v3267 = vunpack.c.l.b16 %v3112
        %v3268 = vunpack.c.l.b16 %v3113
        %v3269 = vunpack.c.l.b16 %v3114
        %v3270 = vunpack.c.l.b16 %v3115
        %v3271 = vunpack.c.l.b16 %v3116
        %v3272 = vunpack.c.l.b16 %v3117
        %v3273 = vunpack.c.l.b16 %v3118
        %v3274 = vunpack.c.l.b16 %v3119
        %v3275 = vunpack.c.l.b16 %v3120
        %v3276 = vunpack.c.l.b16 %v3121
        %v3277 = vunpack.c.l.b16 %v3122
        %v3278 = vunpack.c.l.b16 %v3123
        %v3279 = vunpack.c.l.b16 %v3124
        %v3280 = vunpack.c.l.b16 %v3125
        %v3281 = vunpack.c.l.b16 %v3126
        %v3282 = vunpack.c.l.b16 %v3127
        %v3283 = vunpack.c.l.b16 %v3128
        %v3284 = vunpack.c.l.b16 %v3129
        %v3285 = vunpack.c.l.b16 %v3130
        %v3286 = vunpack.c.l.b16 %v3131
        %v3287 = vunpack.c.l.b16 %v3132
        %v3288 = vunpack.c.l.b16 %v3133
        %v3289 = vunpack.c.l.b16 %v3134
        %v3290 = vunpack.c.l.b16 %v3135
        %v3291 = vunpack.c.l.b16 %v3136
        %v3292 = vunpack.c.l.b16 %v3137
        %v3293 = vunpack.c.l.b16 %v3138
        %v3294 = vunpack.c.l.b16 %v3139
        %v3295 = vunpack.c.l.b16 %v3140
        %v3296 = vunpack.c.l.b16 %v3141
        %v3297 = vpack.c.b16 %v3266, %v3265
        %v3298 = vpack.c.b16 %v3268, %v3267
        %v3299 = vpack.c.b16 %v3270, %v3269
        %v3300 = vpack.c.b16 %v3272, %v3271
        %v3301 = vpack.c.b16 %v3274, %v3273
        %v3302 = vpack.c.b16 %v3276, %v3275
        %v3303 = vpack.c.b16 %v3278, %v3277
        %v3304 = vpack.c.b16 %v3280, %v3279
        %v3305 = vpack.c.b16 %v3282, %v3281
        %v3306 = vpack.c.b16 %v3284, %v3283
        %v3307 = vpack.c.b16 %v3286, %v3285
        %v3308 = vpack.c.b16 %v3288, %v3287
        %v3309 = vpack.c.b16 %v3290, %v3289
        %v3310 = vpack.c.b16 %v3292, %v3291
        %v3311 = vpack.c.b16 %v3294, %v3293
        %v3312 = vpack.c.b16 %v3296, %v3295
        %3329 = vmatprep.subr.bf16.mxu0 0
        %3330 = vmatpush1.bf16.msra.mxu0 %v3297
        %3331 = vmatprep.subr.bf16.mxu0 0
        %3332 = vmatpush1.bf16.msra.mxu0 %v3298
        %3333 = vmatprep.subr.bf16.mxu0 0
        %3334 = vmatpush1.bf16.msra.mxu0 %v3299
        %3335 = vmatprep.subr.bf16.mxu0 0
        %3336 = vmatpush1.bf16.msra.mxu0 %v3300
        %3337 = vmatprep.subr.bf16.mxu0 0
        %3338 = vmatpush1.bf16.msra.mxu0 %v3301
        %3339 = vmatprep.subr.bf16.mxu0 0
        %3340 = vmatpush1.bf16.msra.mxu0 %v3302
        %3341 = vmatprep.subr.bf16.mxu0 0
        %3342 = vmatpush1.bf16.msra.mxu0 %v3303
        %3343 = vmatprep.subr.bf16.mxu0 0
        %3344 = vmatpush1.bf16.msra.mxu0 %v3304
        %3345 = vmatprep.subr.bf16.mxu0 0
        %3346 = vmatpush1.bf16.msra.mxu0 %v3305
        %3347 = vmatprep.subr.bf16.mxu0 0
        %3348 = vmatpush1.bf16.msra.mxu0 %v3306
        %3349 = vmatprep.subr.bf16.mxu0 0
        %3350 = vmatpush1.bf16.msra.mxu0 %v3307
        %3351 = vmatprep.subr.bf16.mxu0 0
        %3352 = vmatpush1.bf16.msra.mxu0 %v3308
        %3353 = vmatprep.subr.bf16.mxu0 0
        %3354 = vmatpush1.bf16.msra.mxu0 %v3309
        %3355 = vmatprep.subr.bf16.mxu0 0
        %3356 = vmatpush1.bf16.msra.mxu0 %v3310
        %3357 = vmatprep.subr.bf16.mxu0 0
        %3358 = vmatpush1.bf16.msra.mxu0 %v3311
        %3359 = vmatprep.subr.bf16.mxu0 0
        %3360 = vmatpush1.bf16.msra.mxu0 %v3312
        %3361 = vmatprep.mubr.bf16.mxu0 %v3170
        %3362 = vmatmul.mubr.bf16.gmra.mrb[0].mxu0 %v3153
        %v3363 = vpop.f32.mrb[0].mxu0
        %v3364 = vadd.f32 0.0, %v3363
        %v3365 = vpop.f32.mrb[0].mxu0
        %v3366 = vpop.f32.mrb[0].mxu0
        %v3367 = vadd.f32 0.0, %v3366
        %v3368 = vpop.f32.mrb[0].mxu0
        %3369 = vmatprep.mubr.bf16.mxu0 %v3183
        %3370 = vmatmul.mubr.bf16.gmra.mrb[0].mxu0 %v3174
        %v3371 = vpop.f32.mrb[0].mxu0
        %v3372 = vadd.f32 0.0, %v3371
        %v3373 = vpop.f32.mrb[0].mxu0
        %v3374 = vpop.f32.mrb[0].mxu0
        %v3375 = vadd.f32 0.0, %v3374
        %v3376 = vpop.f32.mrb[0].mxu0
        %3377 = vmatprep.mubr.bf16.mxu0 %v3196
        %3378 = vmatmul.mubr.bf16.gmra.mrb[0].mxu0 %v3187
        %v3379 = vpop.f32.mrb[0].mxu0
        %v3380 = vadd.f32 0.0, %v3379
        %v3381 = vpop.f32.mrb[0].mxu0
        %v3382 = vpop.f32.mrb[0].mxu0
        %v3383 = vadd.f32 0.0, %v3382
        %v3384 = vpop.f32.mrb[0].mxu0
        %3385 = vmatprep.mubr.bf16.mxu0 %v3209
        %3386 = vmatmul.mubr.bf16.gmra.mrb[0].mxu0 %v3200
        %v3387 = vpop.f32.mrb[0].mxu0
        %v3388 = vadd.f32 0.0, %v3387
        %v3389 = vpop.f32.mrb[0].mxu0
        %v3390 = vpop.f32.mrb[0].mxu0
        %v3391 = vadd.f32 0.0, %v3390
        %v3392 = vpop.f32.mrb[0].mxu0
        %3393 = vmatprep.mubr.bf16.mxu0 %v3222
        %3394 = vmatmul.mubr.bf16.gmra.mrb[0].mxu0 %v3213
        %v3395 = vpop.f32.mrb[0].mxu0
        %v3396 = vadd.f32 0.0, %v3395
        %v3397 = vpop.f32.mrb[0].mxu0
        %v3398 = vpop.f32.mrb[0].mxu0
        %v3399 = vadd.f32 0.0, %v3398
        %v3400 = vpop.f32.mrb[0].mxu0
        %3401 = vdwg.mxu0
        %v3402 = vadd.f32 %v3080, %v3364
        %v3403 = vadd.f32 %v3081, %v3367
        %v3404 = vadd.f32 %v3082, %v3372
        %v3405 = vadd.f32 %v3083, %v3375
        %v3406 = vadd.f32 %v3084, %v3380
        %v3407 = vadd.f32 %v3085, %v3383
        %v3408 = vadd.f32 %v3086, %v3388
        %v3409 = vadd.f32 %v3087, %v3391
        %v3410 = vadd.f32 %v3088, %v3396
        %v3411 = vadd.f32 %v3089, %v3399
        %v3412 = vld [vmem:[#allocation3 + $0x30] sm:$0x3f]
        %v3413 = vld [vmem:[%s6] sm:$0xf]
        %v3414 = vld [vmem:[%s6 + $0x4] sm:$0xf]
        %v3415 = vld [vmem:[%s6 + $0x8] sm:$0xf]
        %v3416 = vld [vmem:[%s6 + $0xc] sm:$0xf]
        %v3417 = vld [vmem:[%s6 + $0x10] sm:$0xf]
        %v3418 = vld [vmem:[%s6 + $0x14] sm:$0xf]
        %v3419 = vld [vmem:[%s6 + $0x18] sm:$0xf]
        %v3420 = vld [vmem:[%s6 + $0x1c] sm:$0xf]
        %v3421 = vld [vmem:[%s6 + $0x20] sm:$0xf]
        %v3422 = vld [vmem:[%s6 + $0x24] sm:$0xf]
        %v3423 = vld [vmem:[%s6 + $0x28] sm:$0xf]
        %v3424 = vld [vmem:[%s6 + $0x2c] sm:$0xf]
        %v3425 = vld [vmem:[%s6 + $0x30] sm:$0xf]
        %v3426 = vld [vmem:[%s6 + $0x34] sm:$0xf]
        %v3427 = vld [vmem:[%s6 + $0x38] sm:$0xf]
        %v3428 = vld [vmem:[%s6 + $0x3c] sm:$0xf]
        %v3429 = vrot.slane %v3094, 5
        %v3430 = vrot.slane %v3096, 6
        %v3431 = vor.u32 %v3429, %v3430
        %v3432 = vrot.slane %v2841, 5
        %v3433 = vrot.slane %v2837, 6
        %v3434 = vor.u32 %v3432, %v3433
        %v3435 = vsel %vm1892, %v3431, %v3434
        %v3436 = vrot.slane %v2849, 5
        %v3437 = vrot.slane %v2845, 6
        %v3438 = vor.u32 %v3436, %v3437
        %v3439 = vsel %vm1892, %v3434, %v3438
        %v3440 = vrot.slane %v2857, 5
        %v3441 = vrot.slane %v2853, 6
        %v3442 = vor.u32 %v3440, %v3441
        %v3443 = vsel %vm1892, %v3438, %v3442
        %v3444 = vrot.slane %v2865, 5
        %v3445 = vrot.slane %v2861, 6
        %v3446 = vor.u32 %v3444, %v3445
        %v3447 = vsel %vm1892, %v3442, %v3446
        %v3449 = vshrl.u32 %v3412, 16
        %v3451 = vrot.slane %v3449, 5
        %v3452 = vshll.u32 %v3412, 16
        %v3454 = vrot.slane %v3452, 6
        %v3455 = vor.u32 %v3451, %v3454
        %v3456 = vsel %vm1892, %v3446, %v3455
        %v3478 = vunpack.c.l.b16 %v3413
        %v3479 = vunpack.c.l.b16 %v3414
        %v3480 = vunpack.c.l.b16 %v3415
        %v3481 = vunpack.c.l.b16 %v3416
        %v3482 = vunpack.c.l.b16 %v3417
        %v3483 = vunpack.c.l.b16 %v3418
        %v3484 = vunpack.c.l.b16 %v3419
        %v3485 = vunpack.c.l.b16 %v3420
        %v3486 = vunpack.c.l.b16 %v3421
        %v3487 = vunpack.c.l.b16 %v3422
        %v3488 = vunpack.c.l.b16 %v3423
        %v3489 = vunpack.c.l.b16 %v3424
        %v3490 = vunpack.c.l.b16 %v3425
        %v3491 = vunpack.c.l.b16 %v3426
        %v3492 = vunpack.c.l.b16 %v3427
        %v3493 = vunpack.c.l.b16 %v3428
        %v3494 = vpack.c.b16 %v3479, %v3478
        %v3495 = vpack.c.b16 %v3481, %v3480
        %v3496 = vpack.c.b16 %v3483, %v3482
        %v3497 = vpack.c.b16 %v3485, %v3484
        %v3498 = vpack.c.b16 %v3487, %v3486
        %v3499 = vpack.c.b16 %v3489, %v3488
        %v3500 = vpack.c.b16 %v3491, %v3490
        %v3501 = vpack.c.b16 %v3493, %v3492
        %3510 = vmatprep.subr.bf16.mxu0 0
        %3511 = vmatpush1.bf16.msra.mxu0 %v3494
        %3512 = vmatprep.subr.bf16.mxu0 0
        %3513 = vmatpush1.bf16.msra.mxu0 %v3495
        %3514 = vmatprep.subr.bf16.mxu0 0
        %3515 = vmatpush1.bf16.msra.mxu0 %v3496
        %3516 = vmatprep.subr.bf16.mxu0 0
        %3517 = vmatpush1.bf16.msra.mxu0 %v3497
        %3518 = vmatprep.subr.bf16.mxu0 0
        %3519 = vmatpush1.bf16.msra.mxu0 %v3498
        %3520 = vmatprep.subr.bf16.mxu0 0
        %3521 = vmatpush1.bf16.msra.mxu0 %v3499
        %3522 = vmatprep.subr.bf16.mxu0 0
        %3523 = vmatpush1.bf16.msra.mxu0 %v3500
        %3524 = vmatprep.subr.bf16.mxu0 0
        %3525 = vmatpush1.bf16.msra.mxu0 %v3501
        %3526 = vmatprep.subr.bf16.mxu0 0
        %3527 = vmatpush1.bf16.msra.mxu0 0
        %3528 = vmatprep.subr.bf16.mxu0 0
        %3529 = vmatpush1.bf16.msra.mxu0 0
        %3530 = vmatprep.subr.bf16.mxu0 0
        %3531 = vmatpush1.bf16.msra.mxu0 0
        %3532 = vmatprep.subr.bf16.mxu0 0
        %3533 = vmatpush1.bf16.msra.mxu0 0
        %3534 = vmatprep.subr.bf16.mxu0 0
        %3535 = vmatpush1.bf16.msra.mxu0 0
        %3536 = vmatprep.subr.bf16.mxu0 0
        %3537 = vmatpush1.bf16.msra.mxu0 0
        %3538 = vmatprep.subr.bf16.mxu0 0
        %3539 = vmatpush1.bf16.msra.mxu0 0
        %3540 = vmatprep.subr.bf16.mxu0 0
        %3541 = vmatpush1.bf16.msra.mxu0 0
        %3542 = vmatprep.mubr.bf16.mxu0 0
        %3543 = vmatmul.mubr.bf16.gmra.mrb[0].mxu0 %v3435
        %v3544 = vpop.f32.mrb[0].mxu0
        %v3545 = vadd.f32 0.0, %v3544
        %v3546 = vpop.f32.mrb[0].mxu0
        %v3547 = vpop.f32.mrb[0].mxu0
        %v3548 = vadd.f32 0.0, %v3547
        %v3549 = vpop.f32.mrb[0].mxu0
        %3550 = vmatprep.mubr.bf16.mxu0 0
        %3551 = vmatmul.mubr.bf16.gmra.mrb[0].mxu0 %v3439
        %v3552 = vpop.f32.mrb[0].mxu0
        %v3553 = vadd.f32 0.0, %v3552
        %v3554 = vpop.f32.mrb[0].mxu0
        %v3555 = vpop.f32.mrb[0].mxu0
        %v3556 = vadd.f32 0.0, %v3555
        %v3557 = vpop.f32.mrb[0].mxu0
        %3558 = vmatprep.mubr.bf16.mxu0 0
        %3559 = vmatmul.mubr.bf16.gmra.mrb[0].mxu0 %v3443
        %v3560 = vpop.f32.mrb[0].mxu0
        %v3561 = vadd.f32 0.0, %v3560
        %v3562 = vpop.f32.mrb[0].mxu0
        %v3563 = vpop.f32.mrb[0].mxu0
        %v3564 = vadd.f32 0.0, %v3563
        %v3565 = vpop.f32.mrb[0].mxu0
        %3566 = vmatprep.mubr.bf16.mxu0 0
        %3567 = vmatmul.mubr.bf16.gmra.mrb[0].mxu0 %v3447
        %v3568 = vpop.f32.mrb[0].mxu0
        %v3569 = vadd.f32 0.0, %v3568
        %v3570 = vpop.f32.mrb[0].mxu0
        %v3571 = vpop.f32.mrb[0].mxu0
        %v3572 = vadd.f32 0.0, %v3571
        %v3573 = vpop.f32.mrb[0].mxu0
        %3574 = vmatprep.mubr.bf16.mxu0 0
        %3575 = vmatmul.mubr.bf16.gmra.mrb[0].mxu0 %v3456
        %v3576 = vpop.f32.mrb[0].mxu0
        %v3577 = vadd.f32 0.0, %v3576
        %v3578 = vpop.f32.mrb[0].mxu0
        %v3579 = vpop.f32.mrb[0].mxu0
        %v3580 = vadd.f32 0.0, %v3579
        %v3581 = vpop.f32.mrb[0].mxu0
        %3582 = vdwg.mxu0
        %v3583 = vadd.f32 %v3402, %v3545
        %v3584 = vadd.f32 %v3403, %v3548
        %v3585 = vadd.f32 %v3404, %v3553
        %v3586 = vadd.f32 %v3405, %v3556
        %v3587 = vadd.f32 %v3406, %v3561
        %v3588 = vadd.f32 %v3407, %v3564
        %v3589 = vadd.f32 %v3408, %v3569
        %v3590 = vadd.f32 %v3409, %v3572
        %v3591 = vadd.f32 %v3410, %v3577
        %v3592 = vadd.f32 %v3411, %v3580
        %v3593 = vld [vmem:[%s7] sm:$0x1]
        %v3595 = vlaneseq
        %v3596 = vshrl.u32 %v3595, 7
        %v3597 = vsub.s32 0, %v3596
        %v3598 = vrot.slane %v3593, %v3597
        %v3600 = vadd.f32 %v3583, %v3598
        %v3601 = vadd.f32 %v3584, %v3598
        %v3602 = vadd.f32 %v3585, %v3598
        %v3603 = vadd.f32 %v3586, %v3598
        %v3604 = vadd.f32 %v3587, %v3598
        %v3605 = vadd.f32 %v3588, %v3598
        %v3606 = vadd.f32 %v3589, %v3598
        %v3607 = vadd.f32 %v3590, %v3598
        %v3608 = vadd.f32 %v3591, %v3598
        %v3609 = vadd.f32 %v3592, %v3598
        %v3610 = vmul.f32 %v3600, %v2097
        %v3611 = vmul.f32 %v3601, %v2102
        %v3612 = vmul.f32 %v3602, %v2107
        %v3613 = vmul.f32 %v3603, %v2112
        %v3614 = vmul.f32 %v3604, %v2117
        %v3615 = vmul.f32 %v3605, %v2122
        %v3616 = vmul.f32 %v3606, %v2127
        %v3617 = vmul.f32 %v3607, %v2132
        %v3618 = vmul.f32 %v3608, %v2137
        %v3619 = vmul.f32 %v3609, %v2142
        %v3620 = vadd.f32 %v3610, %v3611
        %v3621 = vadd.f32 %v3620, %v3612
        %v3622 = vadd.f32 %v3621, %v3613
        %v3623 = vadd.f32 %v3622, %v3614
        %v3624 = vadd.f32 %v3623, %v3615
        %v3625 = vadd.f32 %v3624, %v3616
        %v3626 = vadd.f32 %v3625, %v3617
        %v3627 = vadd.f32 %v3626, %v3618
        %v3628 = vadd.f32 %v3627, %v3619
        %v3629 = vrot.slane %v3628, 4
        %v3630 = vadd.f32 %v3628, %v3629
        %v3631 = vrot.slane %v3630, 2
        %v3632 = vadd.f32 %v3630, %v3631
        %v3633 = vrot.slane %v3632, 1
        %v3634 = vadd.f32 %v3632, %v3633
        %v3635 = vmul.f32 %v3634, 0.015625
        %v3636 = vld [vmem:[%s8] sm:$0xff]
        %v3637 = vld [vmem:[%s8 + $0x8] sm:$0xff]
        %v3638 = vld [vmem:[%s8 + $0x10] sm:$0xff]
        %v3639 = vld [vmem:[%s8 + $0x18] sm:$0xff]
        %v3640 = vld [vmem:[%s8 + $0x20] sm:$0xff]
        %v3641 = vld [vmem:[%s8 + $0x28] sm:$0xff]
        %v3642 = vld [vmem:[%s8 + $0x30] sm:$0xff]
        %v3643 = vld [vmem:[%s8 + $0x38] sm:$0xff]
        %v3644 = vld [vmem:[%s8 + $0x40] sm:$0xff]
        %v3645 = vld [vmem:[%s8 + $0x48] sm:$0xff]
        %v3646 = vld [vmem:[%s8 + $0x50] sm:$0xff]
        %v3647 = vld [vmem:[%s8 + $0x58] sm:$0xff]
        %v3648 = vld [vmem:[%s8 + $0x60] sm:$0xff]
        %v3649 = vld [vmem:[%s8 + $0x68] sm:$0xff]
        %v3650 = vld [vmem:[%s8 + $0x70] sm:$0xff]
        %v3651 = vld [vmem:[%s8 + $0x78] sm:$0xff]
        %v3652 = vld [vmem:[%s9] sm:$0x1]
        %3653 = vmatprep.subr.mxu0 0.0
        %3654 = vmatpush1.msra.mxu0 %v3636
        %3655 = vmatprep.subr.mxu0 0.0
        %3656 = vmatpush1.msra.mxu0 %v3637
        %3657 = vmatprep.subr.mxu0 0.0
        %3658 = vmatpush1.msra.mxu0 %v3638
        %3659 = vmatprep.subr.mxu0 0.0
        %3660 = vmatpush1.msra.mxu0 %v3639
        %3661 = vmatprep.subr.mxu0 0.0
        %3662 = vmatpush1.msra.mxu0 %v3640
        %3663 = vmatprep.subr.mxu0 0.0
        %3664 = vmatpush1.msra.mxu0 %v3641
        %3665 = vmatprep.subr.mxu0 0.0
        %3666 = vmatpush1.msra.mxu0 %v3642
        %3667 = vmatprep.subr.mxu0 0.0
        %3668 = vmatpush1.msra.mxu0 %v3643
        %3669 = vmatprep.subr.mxu0 0.0
        %3670 = vmatpush1.msra.mxu0 %v3644
        %3671 = vmatprep.subr.mxu0 0.0
        %3672 = vmatpush1.msra.mxu0 %v3645
        %3673 = vmatprep.subr.mxu0 0.0
        %3674 = vmatpush1.msra.mxu0 %v3646
        %3675 = vmatprep.subr.mxu0 0.0
        %3676 = vmatpush1.msra.mxu0 %v3647
        %3677 = vmatprep.subr.mxu0 0.0
        %3678 = vmatpush1.msra.mxu0 %v3648
        %3679 = vmatprep.subr.mxu0 0.0
        %3680 = vmatpush1.msra.mxu0 %v3649
        %3681 = vmatprep.subr.mxu0 0.0
        %3682 = vmatpush1.msra.mxu0 %v3650
        %3683 = vmatprep.subr.mxu0 0.0
        %3684 = vmatpush1.msra.mxu0 %v3651
        %3685 = vmatprep.subr.mxu0 0.0
        %3686 = vmatpush1.msra.mxu0 0.0
        %3687 = vmatprep.subr.mxu0 0.0
        %3688 = vmatpush1.msra.mxu0 0.0
        %3689 = vmatprep.subr.mxu0 0.0
        %3690 = vmatpush1.msra.mxu0 0.0
        %3691 = vmatprep.subr.mxu0 0.0
        %3692 = vmatpush1.msra.mxu0 0.0
        %3693 = vmatprep.subr.mxu0 0.0
        %3694 = vmatpush1.msra.mxu0 0.0
        %3695 = vmatprep.subr.mxu0 0.0
        %3696 = vmatpush1.msra.mxu0 0.0
        %3697 = vmatprep.subr.mxu0 0.0
        %3698 = vmatpush1.msra.mxu0 0.0
        %3699 = vmatprep.subr.mxu0 0.0
        %3700 = vmatpush1.msra.mxu0 0.0
        %3701 = vmatprep.subr.mxu0 0.0
        %3702 = vmatpush1.msra.mxu0 0.0
        %3703 = vmatprep.subr.mxu0 0.0
        %3704 = vmatpush1.msra.mxu0 0.0
        %3705 = vmatprep.subr.mxu0 0.0
        %3706 = vmatpush1.msra.mxu0 0.0
        %3707 = vmatprep.subr.mxu0 0.0
        %3708 = vmatpush1.msra.mxu0 0.0
        %3709 = vmatprep.subr.mxu0 0.0
        %3710 = vmatpush1.msra.mxu0 0.0
        %3711 = vmatprep.subr.mxu0 0.0
        %3712 = vmatpush1.msra.mxu0 0.0
        %3713 = vmatprep.subr.mxu0 0.0
        %3714 = vmatpush1.msra.mxu0 0.0
        %3715 = vmatprep.subr.mxu0 0.0
        %3716 = vmatpush1.msra.mxu0 0.0
        %3717 = vmatprep.mubr.f32.mxu0 0.0
        %3718 = vmatmul.mubr.f32.gmra.mrb[0].mxu0 %v3635
        %v3719 = vpop.f32.mrb[0].mxu0
        %v3720 = vadd.f32 %v3652, %v3719
        %v3721 = vpop.f32.mrb[0].mxu0
        %3722 = vdwg.mxu0
        %v3723 = vmax.f32 %v3720, 0.0
        %v3724 = vld [vmem:[%s10] sm:$0xff]
        %v3725 = vld [vmem:[%s10 + $0x8] sm:$0xff]
        %v3726 = vld [vmem:[%s11] sm:$0x1]
        %vm3727 = vcmask 130048
        %v3729 = vsel %vm3727, %v3723, 0
        %3731 = vmatprep.subr.mxu0 0.0
        %3732 = vmatpush1.msra.mxu0 %v3724
        %3733 = vmatprep.subr.mxu0 0.0
        %3734 = vmatpush1.msra.mxu0 %v3725
        %3735 = vmatprep.subr.mxu0 0.0
        %3736 = vmatpush1.msra.mxu0 0.0
        %3737 = vmatprep.subr.mxu0 0.0
        %3738 = vmatpush1.msra.mxu0 0.0
        %3739 = vmatprep.subr.mxu0 0.0
        %3740 = vmatpush1.msra.mxu0 0.0
        %3741 = vmatprep.subr.mxu0 0.0
        %3742 = vmatpush1.msra.mxu0 0.0
        %3743 = vmatprep.subr.mxu0 0.0
        %3744 = vmatpush1.msra.mxu0 0.0
        %3745 = vmatprep.subr.mxu0 0.0
        %3746 = vmatpush1.msra.mxu0 0.0
        %3747 = vmatprep.subr.mxu0 0.0
        %3748 = vmatpush1.msra.mxu0 0.0
        %3749 = vmatprep.subr.mxu0 0.0
        %3750 = vmatpush1.msra.mxu0 0.0
        %3751 = vmatprep.subr.mxu0 0.0
        %3752 = vmatpush1.msra.mxu0 0.0
        %3753 = vmatprep.subr.mxu0 0.0
        %3754 = vmatpush1.msra.mxu0 0.0
        %3755 = vmatprep.subr.mxu0 0.0
        %3756 = vmatpush1.msra.mxu0 0.0
        %3757 = vmatprep.subr.mxu0 0.0
        %3758 = vmatpush1.msra.mxu0 0.0
        %3759 = vmatprep.subr.mxu0 0.0
        %3760 = vmatpush1.msra.mxu0 0.0
        %3761 = vmatprep.subr.mxu0 0.0
        %3762 = vmatpush1.msra.mxu0 0.0
        %3763 = vmatprep.subr.mxu0 0.0
        %3764 = vmatpush1.msra.mxu0 0.0
        %3765 = vmatprep.subr.mxu0 0.0
        %3766 = vmatpush1.msra.mxu0 0.0
        %3767 = vmatprep.subr.mxu0 0.0
        %3768 = vmatpush1.msra.mxu0 0.0
        %3769 = vmatprep.subr.mxu0 0.0
        %3770 = vmatpush1.msra.mxu0 0.0
        %3771 = vmatprep.subr.mxu0 0.0
        %3772 = vmatpush1.msra.mxu0 0.0
        %3773 = vmatprep.subr.mxu0 0.0
        %3774 = vmatpush1.msra.mxu0 0.0
        %3775 = vmatprep.subr.mxu0 0.0
        %3776 = vmatpush1.msra.mxu0 0.0
        %3777 = vmatprep.subr.mxu0 0.0
        %3778 = vmatpush1.msra.mxu0 0.0
        %3779 = vmatprep.subr.mxu0 0.0
        %3780 = vmatpush1.msra.mxu0 0.0
        %3781 = vmatprep.subr.mxu0 0.0
        %3782 = vmatpush1.msra.mxu0 0.0
        %3783 = vmatprep.subr.mxu0 0.0
        %3784 = vmatpush1.msra.mxu0 0.0
        %3785 = vmatprep.subr.mxu0 0.0
        %3786 = vmatpush1.msra.mxu0 0.0
        %3787 = vmatprep.subr.mxu0 0.0
        %3788 = vmatpush1.msra.mxu0 0.0
        %3789 = vmatprep.subr.mxu0 0.0
        %3790 = vmatpush1.msra.mxu0 0.0
        %3791 = vmatprep.subr.mxu0 0.0
        %3792 = vmatpush1.msra.mxu0 0.0
        %3793 = vmatprep.subr.mxu0 0.0
        %3794 = vmatpush1.msra.mxu0 0.0
        %3795 = vmatprep.mubr.f32.mxu0 0.0
        %3796 = vmatmul.mubr.f32.gmra.mrb[0].mxu0 %v3729
        %v3797 = vpop.f32.mrb[0].mxu0
        %v3798 = vadd.f32 %v3726, %v3797
        %v3799 = vpop.f32.mrb[0].mxu0
        %3800 = vdwg.mxu0
        %v3801 = vxor.u32 %v3798, 2147483648
        %v3802 = vmul.f32 %v3801, 1.442695
        %v3803 = vpow.pop %v3802
        %v3804 = vadd.f32 %v3803, 1.0
        %v3805 = vrcp.pop %v3804
        %v3806 = vmul.f32 1.0, %v3805
        %v3807 = vlaneseq
        %v3808 = vshrl.u32 %v3807, 7
        %v3809 = vsub.s32 0, %v3808
        %v3810 = vrot.slane %v3806, %v3809
        %v3811 = vmul.f32 %v3610, %v3810
        %v3812 = vmul.f32 %v3611, %v3810
        %v3813 = vmul.f32 %v3612, %v3810
        %v3814 = vmul.f32 %v3613, %v3810
        %v3815 = vmul.f32 %v3614, %v3810
        %v3816 = vmul.f32 %v3615, %v3810
        %v3817 = vmul.f32 %v3616, %v3810
        %v3818 = vmul.f32 %v3617, %v3810
        %v3819 = vmul.f32 %v3618, %v3810
        %v3820 = vmul.f32 %v3619, %v3810
        %v3821 = vld [vmem:[%s12] sm:$0xff]
        %v3822 = vld [vmem:[%s12 + $0x8] sm:$0xff]
        %v3823 = vld [vmem:[%s12 + $0x10] sm:$0xff]
        %v3824 = vld [vmem:[%s12 + $0x18] sm:$0xff]
        %v3825 = vld [vmem:[%s12 + $0x20] sm:$0xff]
        %v3826 = vld [vmem:[%s12 + $0x28] sm:$0xff]
        %v3827 = vld [vmem:[%s12 + $0x30] sm:$0xff]
        %v3828 = vld [vmem:[%s12 + $0x38] sm:$0xff]
        %v3829 = vld [vmem:[%s12 + $0x40] sm:$0xff]
        %v3830 = vld [vmem:[%s12 + $0x48] sm:$0xff]
        %v3831 = vld [vmem:[%s12 + $0x50] sm:$0xff]
        %v3832 = vld [vmem:[%s12 + $0x58] sm:$0xff]
        %v3833 = vld [vmem:[%s12 + $0x60] sm:$0xff]
        %v3834 = vld [vmem:[%s12 + $0x68] sm:$0xff]
        %v3835 = vld [vmem:[%s12 + $0x70] sm:$0xff]
        %v3836 = vld [vmem:[%s12 + $0x78] sm:$0xff]
        %v3837 = vld [vmem:[%s13] sm:$0x1]
        %v3839 = vlaneseq
        %v3840 = vshrl.u32 %v3839, 7
        %v3841 = vsub.s32 0, %v3840
        %v3842 = vrot.slane %v3837, %v3841
        %3844 = vmatprep.subr.mxu0 0.0
        %3845 = vmatpush1.msra.mxu0 %v3821
        %3846 = vmatprep.subr.mxu0 0.0
        %3847 = vmatpush1.msra.mxu0 %v3822
        %3848 = vmatprep.subr.mxu0 0.0
        %3849 = vmatpush1.msra.mxu0 %v3823
        %3850 = vmatprep.subr.mxu0 0.0
        %3851 = vmatpush1.msra.mxu0 %v3824
        %3852 = vmatprep.subr.mxu0 0.0
        %3853 = vmatpush1.msra.mxu0 %v3825
        %3854 = vmatprep.subr.mxu0 0.0
        %3855 = vmatpush1.msra.mxu0 %v3826
        %3856 = vmatprep.subr.mxu0 0.0
        %3857 = vmatpush1.msra.mxu0 %v3827
        %3858 = vmatprep.subr.mxu0 0.0
        %3859 = vmatpush1.msra.mxu0 %v3828
        %3860 = vmatprep.subr.mxu0 0.0
        %3861 = vmatpush1.msra.mxu0 %v3829
        %3862 = vmatprep.subr.mxu0 0.0
        %3863 = vmatpush1.msra.mxu0 %v3830
        %3864 = vmatprep.subr.mxu0 0.0
        %3865 = vmatpush1.msra.mxu0 %v3831
        %3866 = vmatprep.subr.mxu0 0.0
        %3867 = vmatpush1.msra.mxu0 %v3832
        %3868 = vmatprep.subr.mxu0 0.0
        %3869 = vmatpush1.msra.mxu0 %v3833
        %3870 = vmatprep.subr.mxu0 0.0
        %3871 = vmatpush1.msra.mxu0 %v3834
        %3872 = vmatprep.subr.mxu0 0.0
        %3873 = vmatpush1.msra.mxu0 %v3835
        %3874 = vmatprep.subr.mxu0 0.0
        %3875 = vmatpush1.msra.mxu0 %v3836
        %3876 = vmatprep.subr.mxu0 0.0
        %3877 = vmatpush1.msra.mxu0 0.0
        %3878 = vmatprep.subr.mxu0 0.0
        %3879 = vmatpush1.msra.mxu0 0.0
        %3880 = vmatprep.subr.mxu0 0.0
        %3881 = vmatpush1.msra.mxu0 0.0
        %3882 = vmatprep.subr.mxu0 0.0
        %3883 = vmatpush1.msra.mxu0 0.0
        %3884 = vmatprep.subr.mxu0 0.0
        %3885 = vmatpush1.msra.mxu0 0.0
        %3886 = vmatprep.subr.mxu0 0.0
        %3887 = vmatpush1.msra.mxu0 0.0
        %3888 = vmatprep.subr.mxu0 0.0
        %3889 = vmatpush1.msra.mxu0 0.0
        %3890 = vmatprep.subr.mxu0 0.0
        %3891 = vmatpush1.msra.mxu0 0.0
        %3892 = vmatprep.subr.mxu0 0.0
        %3893 = vmatpush1.msra.mxu0 0.0
        %3894 = vmatprep.subr.mxu0 0.0
        %3895 = vmatpush1.msra.mxu0 0.0
        %3896 = vmatprep.subr.mxu0 0.0
        %3897 = vmatpush1.msra.mxu0 0.0
        %3898 = vmatprep.subr.mxu0 0.0
        %3899 = vmatpush1.msra.mxu0 0.0
        %3900 = vmatprep.subr.mxu0 0.0
        %3901 = vmatpush1.msra.mxu0 0.0
        %3902 = vmatprep.subr.mxu0 0.0
        %3903 = vmatpush1.msra.mxu0 0.0
        %3904 = vmatprep.subr.mxu0 0.0
        %3905 = vmatpush1.msra.mxu0 0.0
        %3906 = vmatprep.subr.mxu0 0.0
        %3907 = vmatpush1.msra.mxu0 0.0
        %3908 = vmatprep.mubr.f32.mxu0 0.0
        %3909 = vmatmul.mubr.f32.gmra.mrb[0].mxu0 %v3811
        %v3910 = vpop.f32.mrb[0].mxu0
        %v3911 = vadd.f32 %v3842, %v3910
        %v3912 = vpop.f32.mrb[0].mxu0
        %3913 = vmatprep.mubr.f32.mxu0 0.0
        %3914 = vmatmul.mubr.f32.gmra.mrb[0].mxu0 %v3812
        %v3915 = vpop.f32.mrb[0].mxu0
        %v3916 = vadd.f32 %v3842, %v3915
        %v3917 = vpop.f32.mrb[0].mxu0
        %3918 = vmatprep.mubr.f32.mxu0 0.0
        %3919 = vmatmul.mubr.f32.gmra.mrb[0].mxu0 %v3813
        %v3920 = vpop.f32.mrb[0].mxu0
        %v3921 = vadd.f32 %v3842, %v3920
        %v3922 = vpop.f32.mrb[0].mxu0
        %3923 = vmatprep.mubr.f32.mxu0 0.0
        %3924 = vmatmul.mubr.f32.gmra.mrb[0].mxu0 %v3814
        %v3925 = vpop.f32.mrb[0].mxu0
        %v3926 = vadd.f32 %v3842, %v3925
        %v3927 = vpop.f32.mrb[0].mxu0
        %3928 = vmatprep.mubr.f32.mxu0 0.0
        %3929 = vmatmul.mubr.f32.gmra.mrb[0].mxu0 %v3815
        %v3930 = vpop.f32.mrb[0].mxu0
        %v3931 = vadd.f32 %v3842, %v3930
        %v3932 = vpop.f32.mrb[0].mxu0
        %3933 = vmatprep.mubr.f32.mxu0 0.0
        %3934 = vmatmul.mubr.f32.gmra.mrb[0].mxu0 %v3816
        %v3935 = vpop.f32.mrb[0].mxu0
        %v3936 = vadd.f32 %v3842, %v3935
        %v3937 = vpop.f32.mrb[0].mxu0
        %3938 = vmatprep.mubr.f32.mxu0 0.0
        %3939 = vmatmul.mubr.f32.gmra.mrb[0].mxu0 %v3817
        %v3940 = vpop.f32.mrb[0].mxu0
        %v3941 = vadd.f32 %v3842, %v3940
        %v3942 = vpop.f32.mrb[0].mxu0
        %3943 = vmatprep.mubr.f32.mxu0 0.0
        %3944 = vmatmul.mubr.f32.gmra.mrb[0].mxu0 %v3818
        %v3945 = vpop.f32.mrb[0].mxu0
        %v3946 = vadd.f32 %v3842, %v3945
        %v3947 = vpop.f32.mrb[0].mxu0
        %3948 = vmatprep.mubr.f32.mxu0 0.0
        %3949 = vmatmul.mubr.f32.gmra.mrb[0].mxu0 %v3819
        %v3950 = vpop.f32.mrb[0].mxu0
        %v3951 = vadd.f32 %v3842, %v3950
        %v3952 = vpop.f32.mrb[0].mxu0
        %3953 = vmatprep.mubr.f32.mxu0 0.0
        %3954 = vmatmul.mubr.f32.gmra.mrb[0].mxu0 %v3820
        %v3955 = vpop.f32.mrb[0].mxu0
        %v3956 = vadd.f32 %v3842, %v3955
        %v3957 = vpop.f32.mrb[0].mxu0
        %3958 = vdwg.mxu0
        %v3959 = vmax.f32 %v3911, 0.0
        %v3960 = vmax.f32 %v3916, 0.0
        %v3961 = vmax.f32 %v3921, 0.0
        %v3962 = vmax.f32 %v3926, 0.0
        %v3963 = vmax.f32 %v3931, 0.0
        %v3964 = vmax.f32 %v3936, 0.0
        %v3965 = vmax.f32 %v3941, 0.0
        %v3966 = vmax.f32 %v3946, 0.0
        %v3967 = vmax.f32 %v3951, 0.0
        %v3968 = vmax.f32 %v3956, 0.0
        %v3969 = vld [vmem:[%s14] sm:$0x1]
        %v3971 = vlaneseq
        %v3972 = vshrl.u32 %v3971, 7
        %v3973 = vsub.s32 0, %v3972
        %v3974 = vrot.slane %v3969, %v3973
        %v3976 = vmul.f32 %v3959, %v3974
        %v3977 = vmul.f32 %v3960, %v3974
        %v3978 = vmul.f32 %v3961, %v3974
        %v3979 = vmul.f32 %v3962, %v3974
        %v3980 = vmul.f32 %v3963, %v3974
        %v3981 = vmul.f32 %v3964, %v3974
        %v3982 = vmul.f32 %v3965, %v3974
        %v3983 = vmul.f32 %v3966, %v3974
        %v3984 = vmul.f32 %v3967, %v3974
        %v3985 = vmul.f32 %v3968, %v3974
        %v3986 = vsel %vm3727, %v3976, 0.0
        %3987 = vadd.xlane.f32.xlu0 %v3986
        %v3988 = vpop.xlane.xlu0 %3987
        %v3989 = vsel %vm3727, %v3977, 0.0
        %3990 = vadd.xlane.f32.xlu0 %v3989
        %v3991 = vpop.xlane.xlu0 %3990
        %v3992 = vsel %vm3727, %v3978, 0.0
        %3993 = vadd.xlane.f32.xlu0 %v3992
        %v3994 = vpop.xlane.xlu0 %3993
        %v3995 = vsel %vm3727, %v3979, 0.0
        %3996 = vadd.xlane.f32.xlu0 %v3995
        %v3997 = vpop.xlane.xlu0 %3996
        %v3998 = vsel %vm3727, %v3980, 0.0
        %3999 = vadd.xlane.f32.xlu0 %v3998
        %v4000 = vpop.xlane.xlu0 %3999
        %v4001 = vsel %vm3727, %v3981, 0.0
        %4002 = vadd.xlane.f32.xlu0 %v4001
        %v4003 = vpop.xlane.xlu0 %4002
        %v4004 = vsel %vm3727, %v3982, 0.0
        %4005 = vadd.xlane.f32.xlu0 %v4004
        %v4006 = vpop.xlane.xlu0 %4005
        %v4007 = vsel %vm3727, %v3983, 0.0
        %4008 = vadd.xlane.f32.xlu0 %v4007
        %v4009 = vpop.xlane.xlu0 %4008
        %v4010 = vsel %vm3727, %v3984, 0.0
        %4011 = vadd.xlane.f32.xlu0 %v4010
        %v4012 = vpop.xlane.xlu0 %4011
        %v4013 = vsel %vm3727, %v3985, 0.0
        %4014 = vadd.xlane.f32.xlu0 %v4013
        %v4015 = vpop.xlane.xlu0 %4014
        %v4016 = vld [vmem:[#allocation4] sm:$0x1]
        %v4018 = vlaneseq
        %v4019 = vshrl.u32 %v4018, 7
        %v4020 = vsub.s32 0, %v4019
        %v4021 = vrot.slane %v4016, %v4020
        %v4023 = vadd.f32 %v3988, %v4021
        %v4024 = vadd.f32 %v3991, %v4021
        %v4025 = vadd.f32 %v3994, %v4021
        %v4026 = vadd.f32 %v3997, %v4021
        %v4027 = vadd.f32 %v4000, %v4021
        %v4028 = vadd.f32 %v4003, %v4021
        %v4029 = vadd.f32 %v4006, %v4021
        %v4030 = vadd.f32 %v4009, %v4021
        %v4031 = vadd.f32 %v4012, %v4021
        %v4032 = vadd.f32 %v4015, %v4021
        %v4033 = vxor.u32 %v4023, 2147483648
        %v4034 = vxor.u32 %v4024, 2147483648
        %v4035 = vxor.u32 %v4025, 2147483648
        %v4036 = vxor.u32 %v4026, 2147483648
        %v4037 = vxor.u32 %v4027, 2147483648
        %v4038 = vxor.u32 %v4028, 2147483648
        %v4039 = vxor.u32 %v4029, 2147483648
        %v4040 = vxor.u32 %v4030, 2147483648
        %v4041 = vxor.u32 %v4031, 2147483648
        %v4042 = vxor.u32 %v4032, 2147483648
        %v4043 = vmul.f32 %v4033, 1.442695
        %v4044 = vpow.pop %v4043
        %v4045 = vmul.f32 %v4034, 1.442695
        %v4046 = vpow.pop %v4045
        %v4047 = vmul.f32 %v4035, 1.442695
        %v4048 = vpow.pop %v4047
        %v4049 = vmul.f32 %v4036, 1.442695
        %v4050 = vpow.pop %v4049
        %v4051 = vmul.f32 %v4037, 1.442695
        %v4052 = vpow.pop %v4051
        %v4053 = vmul.f32 %v4038, 1.442695
        %v4054 = vpow.pop %v4053
        %v4055 = vmul.f32 %v4039, 1.442695
        %v4056 = vpow.pop %v4055
        %v4057 = vmul.f32 %v4040, 1.442695
        %v4058 = vpow.pop %v4057
        %v4059 = vmul.f32 %v4041, 1.442695
        %v4060 = vpow.pop %v4059
        %v4061 = vmul.f32 %v4042, 1.442695
        %v4062 = vpow.pop %v4061
        %v4063 = vadd.f32 %v4044, 1.0
        %v4064 = vadd.f32 %v4046, 1.0
        %v4065 = vadd.f32 %v4048, 1.0
        %v4066 = vadd.f32 %v4050, 1.0
        %v4067 = vadd.f32 %v4052, 1.0
        %v4068 = vadd.f32 %v4054, 1.0
        %v4069 = vadd.f32 %v4056, 1.0
        %v4070 = vadd.f32 %v4058, 1.0
        %v4071 = vadd.f32 %v4060, 1.0
        %v4072 = vadd.f32 %v4062, 1.0
        %v4073 = vrcp.pop %v4063
        %v4074 = vmul.f32 1.0, %v4073
        %v4075 = vrcp.pop %v4064
        %v4076 = vmul.f32 1.0, %v4075
        %v4077 = vrcp.pop %v4065
        %v4078 = vmul.f32 1.0, %v4077
        %v4079 = vrcp.pop %v4066
        %v4080 = vmul.f32 1.0, %v4079
        %v4081 = vrcp.pop %v4067
        %v4082 = vmul.f32 1.0, %v4081
        %v4083 = vrcp.pop %v4068
        %v4084 = vmul.f32 1.0, %v4083
        %v4085 = vrcp.pop %v4069
        %v4086 = vmul.f32 1.0, %v4085
        %v4087 = vrcp.pop %v4070
        %v4088 = vmul.f32 1.0, %v4087
        %v4089 = vrcp.pop %v4071
        %v4090 = vmul.f32 1.0, %v4089
        %v4091 = vrcp.pop %v4072
        %v4092 = vmul.f32 1.0, %v4091
        %4094 = vset.pattern.permute.xlu0 0
        %4095 = vperm.xlu0 %4094, %v4074
        %v4096 = vpop.permute.xlu0 %4095
        %4099 = vset.pattern.permute.xlu0 0
        %4100 = vperm.xlu0 %4099, %v4076
        %v4101 = vpop.permute.xlu0 %4100
        %4104 = vset.pattern.permute.xlu0 0
        %4105 = vperm.xlu0 %4104, %v4078
        %v4106 = vpop.permute.xlu0 %4105
        %4109 = vset.pattern.permute.xlu0 0
        %4110 = vperm.xlu0 %4109, %v4080
        %v4111 = vpop.permute.xlu0 %4110
        %4114 = vset.pattern.permute.xlu0 0
        %4115 = vperm.xlu0 %4114, %v4082
        %v4116 = vpop.permute.xlu0 %4115
        %4119 = vset.pattern.permute.xlu0 0
        %4120 = vperm.xlu0 %4119, %v4084
        %v4121 = vpop.permute.xlu0 %4120
        %4124 = vset.pattern.permute.xlu0 0
        %4125 = vperm.xlu0 %4124, %v4086
        %v4126 = vpop.permute.xlu0 %4125
        %4129 = vset.pattern.permute.xlu0 0
        %4130 = vperm.xlu0 %4129, %v4088
        %v4131 = vpop.permute.xlu0 %4130
        %4134 = vset.pattern.permute.xlu0 0
        %4135 = vperm.xlu0 %4134, %v4090
        %v4136 = vpop.permute.xlu0 %4135
        %4139 = vset.pattern.permute.xlu0 0
        %4140 = vperm.xlu0 %4139, %v4092
        %v4141 = vpop.permute.xlu0 %4140
        %v4143 = vmul.f32 %v3811, %v4096
        %v4144 = vmul.f32 %v3812, %v4101
        %v4145 = vmul.f32 %v3813, %v4106
        %v4146 = vmul.f32 %v3814, %v4111
        %v4147 = vmul.f32 %v3815, %v4116
        %v4148 = vmul.f32 %v3816, %v4121
        %v4149 = vmul.f32 %v3817, %v4126
        %v4150 = vmul.f32 %v3818, %v4131
        %v4151 = vmul.f32 %v3819, %v4136
        %v4152 = vmul.f32 %v3820, %v4141
        %v4153 = vadd.f32 %v4143, %v602
        %v4154 = vadd.f32 %v4144, %v603
        %v4155 = vadd.f32 %v4145, %v604
        %v4156 = vadd.f32 %v4146, %v605
        %v4157 = vadd.f32 %v4147, %v606
        %v4158 = vadd.f32 %v4148, %v607
        %v4159 = vadd.f32 %v4149, %v608
        %v4160 = vadd.f32 %v4150, %v609
        %v4161 = vadd.f32 %v4151, %v610
        %v4162 = vadd.f32 %v4152, %v611
        %4163 = vst [vmem:[%s546] sm:$0xff] %v4153
        %4164 = vst [vmem:[%s546 + $0x8] sm:$0xff] %v4154
        %4165 = vst [vmem:[%s546 + $0x10] sm:$0xff] %v4155
        %4166 = vst [vmem:[%s546 + $0x18] sm:$0xff] %v4156
        %4167 = vst [vmem:[%s546 + $0x20] sm:$0xff] %v4157
        %4168 = vst [vmem:[%s546 + $0x28] sm:$0xff] %v4158
        %4169 = vst [vmem:[%s546 + $0x30] sm:$0xff] %v4159
        %4170 = vst [vmem:[%s546 + $0x38] sm:$0xff] %v4160
        %4171 = vst [vmem:[%s546 + $0x40] sm:$0xff] %v4161
        %4172 = vst [vmem:[%s546 + $0x48] sm:$0xff] %v4162
        %s4173 = sand.u32 %s383, 1
        %s4174 = scalar_lea.sflag [#allocation7], %s4173
        %s4175 = sand.u32 %s383, 1
        %s4176 = smul.addr %s4175, 80
        %s4177 = scalar_lea.vmem [#allocation10], %s4176
        // Predicated region
        $region93: #{tpu_custom_call.1} parent=83 // pred_check
          %p4178 = pneg %p393
        $region94: #{tpu_custom_call.1} parent=83 // pred_check_branch
          %4180 = sbr.rel (%p4178) target = $region96
        $region95: #{tpu_custom_call.1} parent=83 // pred_region
          %s4182 = ssub.s32 1280, 1280
          %4183 = vsyncadd %s4174, %s4182
          %s4184 = smul.addr %s34, 10
          %s4185 = smul.addr %s4184, 128
          %s4186 = scalar_lea.hbm %s16, %s4185
          %s4187 = sshll.u32 %s4177, 4
          %s4188 = int_to_ptr.vmem [resolvable:$true] %s4187
          %4193 = dma.vmem_to_hbm [thread:$0]  %s4188, 1280, %s4186, %s4174, 128, 128, 8
        $region96: #{tpu_custom_call.1} parent=83 // pred_fallthru
          _
      $region84: #{tpu_custom_call.1} parent=5 // pred_fallthru
        _
      %p4194 = scmp.le.s32.totalorder 2, %s29
      // Predicated region
      $region97: #{tpu_custom_call.1} parent=5 // pred_check
        %p4195 = pneg %p4194
      $region98: #{tpu_custom_call.1} parent=5 // pred_check_branch
        %4197 = sbr.rel (%p4195) target = $region100
      $region99: #{tpu_custom_call.1} parent=5 // pred_region
        %s4198 = ssub.s32 %s29, 2
        // Predicated region
        $region101: #{tpu_custom_call.1} parent=99 // pred_check
          %p4199 = pneg %p399
        $region102: #{tpu_custom_call.1} parent=99 // pred_check_branch
          %4201 = sbr.rel (%p4199) target = $region104
        $region103: #{tpu_custom_call.1} parent=99 // pred_region
          %s4202 = sand.u32 %s384, 1
          %s4203 = scalar_lea.sflag [#allocation7], %s4202
          %s4204 = sand.u32 %s384, 1
          %s4205 = smul.addr %s4204, 80
          %s4206 = scalar_lea.vmem [#allocation10], %s4205
          %4207 = dma.done %s4203, 1280
        $region104: #{tpu_custom_call.1} parent=99 // pred_fallthru
          _
      $region100: #{tpu_custom_call.1} parent=5 // pred_fallthru
        _
    $region6: #{tpu_custom_call.1} parent=1 // loop_footer
      %s33 = sadd.s32 1, %s29
    $region7: #{tpu_custom_call.1} parent=1 // loop_footer_branch
      %28 = sbr.rel target = $region3
    $region8: #{tpu_custom_call.1} parent=1 // loop_exit
      _
    %4208 = vsyncpa [#allocation6], 1
    %s4209 = scalar_lea.sflag [#allocation6], 1
    %4210 = vsyncpa %s4209, 1
    %4211 = vsyncpa [#allocation9], 1
    %4212 = vsyncpa [#allocation7], 1
    %s4213 = scalar_lea.sflag [#allocation7], 1
    %4214 = vsyncpa %s4213, 1

</llo_original>
